<compile_context>
chip_gen: v7x
topology: tpu7x:2x2x1
jax: 0.10.0
libtpu: 0.0.40
codegen_flags: <defaults>
</compile_context>

<pallas_src>
import jax
import jax.numpy as jnp
from jax import lax
from jax.experimental import pallas as pl
from jax.experimental.pallas import tpu as pltpu


def _round_up(x, m):
    return ((x + m - 1) // m) * m


def _softplus(x):
    # torch.nn.functional.softplus(x, beta=1, threshold=20)
    return jnp.where(x > 20.0, x, jnp.log1p(jnp.exp(jnp.minimum(x, 20.0))))


def _make_kernel(seq, b_pad, h_pad, num_layers):
    HP = h_pad
    # Full unroll for short sequences, partial unroll otherwise (keeps the LLO
    # scheduler able to interleave consecutive timesteps without exploding
    # compile time for long sequences).
    unroll = True if seq <= 32 else 8

    def kernel(*refs):
        # refs: x2d, (w_ih, w_hh, b) * L, w_g, b_g, eps2d,
        #       samp_out, mu_out, sp_out, hseq_scratch, gates_x_scratch
        idx = 0
        x_ref = refs[idx]; idx += 1
        layer_refs = []
        for _ in range(num_layers):
            layer_refs.append((refs[idx], refs[idx + 1], refs[idx + 2]))
            idx += 3
        wg_ref = refs[idx]; idx += 1
        bg_ref = refs[idx]; idx += 1
        eps_ref = refs[idx]; idx += 1
        samp_ref = refs[idx]; idx += 1
        mu_ref = refs[idx]; idx += 1
        sp_ref = refs[idx]; idx += 1
        hseq_ref = refs[idx]; idx += 1      # (S*B_pad, H_pad)   f32 scratch
        gx_ref = refs[idx]; idx += 1        # (S*B_pad, 4*H_pad) f32 scratch

        for l, (wih_ref, whh_ref, b_ref) in enumerate(layer_refs):
            # ---- input projection for the WHOLE sequence: one MXU matmul ----
            if l == 0:
                inp2d = x_ref[...]                               # bf16 (S*B, I_pad)
            else:
                inp2d = hseq_ref[...].astype(jnp.bfloat16)       # bf16 (S*B, H_pad)
            gx_ref[...] = (
                jnp.dot(inp2d, wih_ref[...], preferred_element_type=jnp.float32)
                + b_ref[...]                                     # bias added once, not per step
            )
            whh = whh_ref[...]                                   # bf16, hoisted out of the loop

            # ---- sequential recurrence: only h_prev @ W_hh on the chain ----
            def step(t, carry):
                h_prev, c_prev = carry                           # f32 (B_pad, H_pad)
                row = pl.multiple_of(t * b_pad, b_pad)           # sublane-aligned slice
                gates = gx_ref[pl.ds(row, b_pad), :] + jnp.dot(
                    h_prev.astype(jnp.bfloat16), whh,
                    preferred_element_type=jnp.float32)          # (B_pad, 4*H_pad)
                i_g = jax.nn.sigmoid(gates[:, 0 * HP:1 * HP])
                f_g = jax.nn.sigmoid(gates[:, 1 * HP:2 * HP])
                g_g = jnp.tanh(gates[:, 2 * HP:3 * HP])
                o_g = jax.nn.sigmoid(gates[:, 3 * HP:4 * HP])
                c_new = f_g * c_prev + i_g * g_g
                h_new = o_g * jnp.tanh(c_new)
                hseq_ref[pl.ds(row, b_pad), :] = h_new
                return (h_new, c_new)

            zeros = jnp.zeros((b_pad, HP), jnp.float32)          # init_states=None path
            lax.fori_loop(0, seq, step, (zeros, zeros), unroll=unroll)

        # ---- Gaussian head: one matmul + vectorized softplus / sample ----
        stats = jnp.dot(hseq_ref[...].astype(jnp.bfloat16), wg_ref[...],
                        preferred_element_type=jnp.float32) + bg_ref[...]   # (S*B, 2*H_pad)
        sp = _softplus(stats[:, 0:HP])                           # covariance diagonal
        mu = stats[:, HP:2 * HP]
        # MultivariateNormal(mu, diag(sp)).rsample() == mu + sqrt(sp) * eps
        samp_ref[...] = mu + jnp.sqrt(sp) * eps_ref[...]
        mu_ref[...] = mu
        sp_ref[...] = sp

    return kernel


def _pad_chunked_weight(w, chunk, chunk_pad, rows_pad, dtype):
    """Pad a (rows, n*chunk) gate-structured weight/bias to (rows_pad, n*chunk_pad),
    keeping each gate chunk at a lane-aligned (multiple-of-128) offset."""
    rows, cols = w.shape
    n = cols // chunk
    out = jnp.zeros((rows_pad, n * chunk_pad), dtype)
    for g in range(n):
        out = out.at[:rows, g * chunk_pad:g * chunk_pad + chunk].set(
            w[:, g * chunk:(g + 1) * chunk].astype(dtype))
    return out


def init_params(key, input_sz, hidden, num_layers):
    """Deterministic synthetic parameters (shapes match the PyTorch module)."""
    keys = jax.random.split(key, 4 * num_layers + 1)
    scale = 1.0 / float(hidden) ** 0.5
    w_ih, w_hh, b = [], [], []
    for l in range(num_layers):
        in_l = input_sz if l == 0 else hidden
        # stored transposed (in, 4H), gate order i|f|g|o, so the kernel does inp @ w
        w_ih.append(jax.random.uniform(keys[4 * l + 0], (in_l, 4 * hidden),
                                       jnp.float32, -scale, scale))
        w_hh.append(jax.random.uniform(keys[4 * l + 1], (hidden, 4 * hidden),
                                       jnp.float32, -scale, scale))
        b_ih = jax.random.uniform(keys[4 * l + 2], (1, 4 * hidden), jnp.float32, -scale, scale)
        b_hh = jax.random.uniform(keys[4 * l + 3], (1, 4 * hidden), jnp.float32, -scale, scale)
        b.append(b_ih + b_hh)
    # GaussianSampler.Linear(H, 2H): xavier_uniform weight, zero bias
    limit = (6.0 / (hidden + 2 * hidden)) ** 0.5
    w_g = jax.random.uniform(keys[-1], (hidden, 2 * hidden), jnp.float32, -limit, limit)
    b_g = jnp.zeros((1, 2 * hidden), jnp.float32)
    return {"w_ih": w_ih, "w_hh": w_hh, "b": b, "w_g": w_g, "b_g": b_g}


def gaussian_lstm_forward(x, eps, params, *, hidden, num_layers, dense_std=True):
    """x: (B, S, I) float32, eps: (B, S, H) standard normal noise.

    Returns (sample, (mu, std)) with sample/mu: (B, S, H);
    std: (B, S, H, H) diag matrix if dense_std else its (B, S, H) diagonal.
    """
    B, S, I = x.shape
    H = hidden
    B_pad = _round_up(B, 8)        # sublane alignment
    I_pad = _round_up(I, 128)      # lane alignment
    H_pad = _round_up(H, 128)

    # time-major, padded, flattened to 2D rows: row index = t * B_pad + b
    def to_rows(a, feat, feat_pad, dtype):
        a_t = jnp.transpose(a, (1, 0, 2)).astype(jnp.float32)          # (S, B, F)
        a_t = jnp.pad(a_t, ((0, 0), (0, B_pad - B), (0, feat_pad - feat)))
        return a_t.reshape(S * B_pad, feat_pad).astype(dtype)

    x2d = to_rows(x, I, I_pad, jnp.bfloat16)       # MXU operand -> bf16
    eps2d = to_rows(eps, H, H_pad, jnp.float32)

    kernel_inputs = [x2d]
    for l in range(num_layers):
        rows_pad = I_pad if l == 0 else H_pad
        kernel_inputs += [
            _pad_chunked_weight(params["w_ih"][l], H, H_pad, rows_pad, jnp.bfloat16),
            _pad_chunked_weight(params["w_hh"][l], H, H_pad, H_pad, jnp.bfloat16),
            _pad_chunked_weight(params["b"][l], H, H_pad, 1, jnp.float32),
        ]
    kernel_inputs += [
        _pad_chunked_weight(params["w_g"], H, H_pad, H_pad, jnp.bfloat16),
        _pad_chunked_weight(params["b_g"], H, H_pad, 1, jnp.float32),
        eps2d,
    ]

    def full_spec(a):
        return pl.BlockSpec(a.shape, lambda i: (0, 0))       # all kernel operands are 2D

    out_struct = jax.ShapeDtypeStruct((S * B_pad, H_pad), jnp.float32)
    out_spec = pl.BlockSpec((S * B_pad, H_pad), lambda i: (0, 0))

    # Size the scoped-VMEM limit to the actual buffers (+ headroom) instead of
    # relying on the 16/32 MiB default.
    def nbytes(a):
        return int(a.size) * a.dtype.itemsize

    io_bytes = sum(nbytes(a) for a in kernel_inputs) + 3 * S * B_pad * H_pad * 4
    scratch_bytes = S * B_pad * H_pad * 4 + S * B_pad * 4 * H_pad * 4
    vmem_limit = int(min(2 * io_bytes + scratch_bytes + (4 << 20), 100 << 20))

    kernel = _make_kernel(S, B_pad, H_pad, num_layers)

    samp2d, mu2d, sp2d = pl.pallas_call(
        kernel,
        out_shape=(out_struct, out_struct, out_struct),
        grid_spec=pltpu.PrefetchScalarGridSpec(
            num_scalar_prefetch=0,
            grid=(1,),
            in_specs=[full_spec(a) for a in kernel_inputs],
            out_specs=[out_spec, out_spec, out_spec],
            scratch_shapes=[
                pltpu.VMEM((S * B_pad, H_pad), jnp.float32),       # current layer output seq
                pltpu.VMEM((S * B_pad, 4 * H_pad), jnp.float32),   # precomputed input gates
            ],
        ),
        compiler_params=pltpu.CompilerParams(
            dimension_semantics=("arbitrary",),
            vmem_limit_bytes=vmem_limit,
        ),
    )(*kernel_inputs)

    def unpack(a2d):
        a = a2d.reshape(S, B_pad, H_pad)[:, :B, :H]
        return jnp.transpose(a, (1, 0, 2))                     # (B, S, H)

    sample = unpack(samp2d)
    mu = unpack(mu2d)
    sp = unpack(sp2d)
    if dense_std:
        # diag_embed(softplus(...)) -> (B, S, H, H).  Glue for interface parity;
        # for large H use dense_std=False and consume the diagonal lazily.
        std = jnp.eye(H, dtype=sp.dtype) * sp[..., :, None]
    else:
        std = sp
    return sample, (mu, std)


if __name__ == "__main__":
    B, S, I, H, L = 2, 8, 16, 32, 2

    key = jax.random.PRNGKey(0)
    kx, ke, kp = jax.random.split(key, 3)
    x = jax.random.normal(kx, (B, S, I), dtype=jnp.float32)
    eps = jax.random.normal(ke, (B, S, H), dtype=jnp.float32)
    params = init_params(kp, I, H, L)

    sample, (mu, std) = gaussian_lstm_forward(x, eps, params, hidden=H, num_layers=L)
    jax.block_until_ready((sample, mu, std))

    assert sample.shape == (B, S, H)
    assert mu.shape == (B, S, H)
    assert std.shape == (B, S, H, H)
    assert bool(jnp.all(jnp.isfinite(sample)))
    assert bool(jnp.all(jnp.isfinite(mu)))
    assert bool(jnp.all(jnp.isfinite(std)))
    print("KERNEL_OK")
</pallas_src>

<mosaic_0001>
module attributes {stable_mosaic.version = 11 : i64} {
  func.func @kernel(%arg0: i32, %arg1: memref<64x128xbf16, #tpu.memory_space<vmem>>, %arg2: memref<128x512xbf16, #tpu.memory_space<vmem>>, %arg3: memref<128x512xbf16, #tpu.memory_space<vmem>>, %arg4: memref<1x512xf32, #tpu.memory_space<vmem>>, %arg5: memref<128x512xbf16, #tpu.memory_space<vmem>>, %arg6: memref<128x512xbf16, #tpu.memory_space<vmem>>, %arg7: memref<1x512xf32, #tpu.memory_space<vmem>>, %arg8: memref<128x256xbf16, #tpu.memory_space<vmem>>, %arg9: memref<1x256xf32, #tpu.memory_space<vmem>>, %arg10: memref<64x128xf32, #tpu.memory_space<vmem>>, %arg11: memref<64x128xf32, #tpu.memory_space<vmem>>, %arg12: memref<64x128xf32, #tpu.memory_space<vmem>>, %arg13: memref<64x128xf32, #tpu.memory_space<vmem>>, %arg14: memref<64x128xf32, #tpu.memory_space<vmem>>, %arg15: memref<64x512xf32, #tpu.memory_space<vmem>>) attributes {dimension_semantics = [#tpu.dimension_semantics<arbitrary>], iteration_bounds = array<i64: 1>, scalar_prefetch = 0 : i64, scratch_operands = 2 : i64, tpu.core_type = #tpu.core_type<tc>, window_params = [{pipeline_mode = #tpu.pipeline_mode<synchronous>, transform_indices = @transform_0, window_bounds = array<i64: 64, 128>}, {pipeline_mode = #tpu.pipeline_mode<synchronous>, transform_indices = @transform_1, window_bounds = array<i64: 128, 512>}, {pipeline_mode = #tpu.pipeline_mode<synchronous>, transform_indices = @transform_2, window_bounds = array<i64: 128, 512>}, {pipeline_mode = #tpu.pipeline_mode<synchronous>, transform_indices = @transform_3, window_bounds = array<i64: 1, 512>}, {pipeline_mode = #tpu.pipeline_mode<synchronous>, transform_indices = @transform_4, window_bounds = array<i64: 128, 512>}, {pipeline_mode = #tpu.pipeline_mode<synchronous>, transform_indices = @transform_5, window_bounds = array<i64: 128, 512>}, {pipeline_mode = #tpu.pipeline_mode<synchronous>, transform_indices = @transform_6, window_bounds = array<i64: 1, 512>}, {pipeline_mode = #tpu.pipeline_mode<synchronous>, transform_indices = @transform_7, window_bounds = array<i64: 128, 256>}, {pipeline_mode = #tpu.pipeline_mode<synchronous>, transform_indices = @transform_8, window_bounds = array<i64: 1, 256>}, {pipeline_mode = #tpu.pipeline_mode<synchronous>, transform_indices = @transform_9, window_bounds = array<i64: 64, 128>}, {pipeline_mode = #tpu.pipeline_mode<synchronous>, transform_indices = @transform_10, window_bounds = array<i64: 64, 128>}, {pipeline_mode = #tpu.pipeline_mode<synchronous>, transform_indices = @transform_11, window_bounds = array<i64: 64, 128>}, {pipeline_mode = #tpu.pipeline_mode<synchronous>, transform_indices = @transform_12, window_bounds = array<i64: 64, 128>}]} {
    %c0 = arith.constant 0 : index
    %c0_0 = arith.constant 0 : index
    %0 = vector.load %arg1[%c0, %c0_0] : memref<64x128xbf16, #tpu.memory_space<vmem>>, vector<64x128xbf16>
    %c0_1 = arith.constant 0 : index
    %c0_2 = arith.constant 0 : index
    %1 = vector.load %arg2[%c0_1, %c0_2] : memref<128x512xbf16, #tpu.memory_space<vmem>>, vector<128x512xbf16>
    %cst = arith.constant dense<0.000000e+00> : vector<64x512xf32>
    %2 = tpu.matmul %0, %1, %cst {dimension_numbers = #tpu.dot_dimension_numbers<[1], [0], [0], [1], [0, 0, 1, 1], [], []>} : vector<64x128xbf16>, vector<128x512xbf16>, vector<64x512xf32> -> vector<64x512xf32>
    %c0_3 = arith.constant 0 : index
    %c0_4 = arith.constant 0 : index
    %3 = vector.load %arg4[%c0_3, %c0_4] : memref<1x512xf32, #tpu.memory_space<vmem>>, vector<1x512xf32>
    %4 = vector.broadcast %3 : vector<1x512xf32> to vector<64x512xf32>
    %5 = arith.addf %2, %4 : vector<64x512xf32>
    %c0_5 = arith.constant 0 : index
    %c0_6 = arith.constant 0 : index
    %6 = vector.load %arg15[%c0_5, %c0_6] : memref<64x512xf32, #tpu.memory_space<vmem>>, vector<64x512xf32>
    tpu.vector_store %arg15[%c0_5, %c0_6], %5 {strides = array<i32>} : memref<64x512xf32, #tpu.memory_space<vmem>>, vector<64x512xf32>,
    %c0_7 = arith.constant 0 : index
    %c0_8 = arith.constant 0 : index
    %7 = vector.load %arg3[%c0_7, %c0_8] : memref<128x512xbf16, #tpu.memory_space<vmem>>, vector<128x512xbf16>
    %cst_9 = arith.constant 0.000000e+00 : f32
    %8 = vector.broadcast %cst_9 : f32 to vector<8x128xf32>
    %c0_i32 = arith.constant 0 : i32
    %c8_i32 = arith.constant 8 : i32
    %9 = arith.muli %c0_i32, %c8_i32 : i32
    %10 = tpu.assume_multiple %9, 8 : i32
    %11 = arith.index_cast %10 : i32 to index
    %c0_10 = arith.constant 0 : index
    %12 = vector.load %arg15[%11, %c0_10] : memref<64x512xf32, #tpu.memory_space<vmem>>, vector<8x512xf32>
    %13 = arith.truncf %8 : vector<8x128xf32> to vector<8x128xbf16>
    %cst_11 = arith.constant dense<0.000000e+00> : vector<8x512xf32>
    %14 = tpu.matmul %13, %7, %cst_11 {dimension_numbers = #tpu.dot_dimension_numbers<[1], [0], [0], [1], [0, 0, 1, 1], [], []>} : vector<8x128xbf16>, vector<128x512xbf16>, vector<8x512xf32> -> vector<8x512xf32>
    %15 = arith.addf %12, %14 : vector<8x512xf32>
    %16 = vector.extract_strided_slice %15 {offsets = [0, 0], sizes = [8, 128], strides = [1, 1]} : vector<8x512xf32> to vector<8x128xf32>
    %17 = arith.negf %16 : vector<8x128xf32>
    %18 = math.exp %17 : vector<8x128xf32>
    %cst_12 = arith.constant 1.000000e+00 : f32
    %19 = vector.broadcast %cst_12 : f32 to vector<8x128xf32>
    %20 = arith.addf %19, %18 : vector<8x128xf32>
    %21 = arith.divf %19, %20 : vector<8x128xf32>
    %22 = vector.extract_strided_slice %15 {offsets = [0, 128], sizes = [8, 128], strides = [1, 1]} : vector<8x512xf32> to vector<8x128xf32>
    %23 = arith.negf %22 : vector<8x128xf32>
    %24 = math.exp %23 : vector<8x128xf32>
    %cst_13 = arith.constant 1.000000e+00 : f32
    %25 = vector.broadcast %cst_13 : f32 to vector<8x128xf32>
    %26 = arith.addf %25, %24 : vector<8x128xf32>
    %27 = arith.divf %25, %26 : vector<8x128xf32>
    %28 = vector.extract_strided_slice %15 {offsets = [0, 256], sizes = [8, 128], strides = [1, 1]} : vector<8x512xf32> to vector<8x128xf32>
    %29 = math.tanh %28 : vector<8x128xf32>
    %30 = vector.extract_strided_slice %15 {offsets = [0, 384], sizes = [8, 128], strides = [1, 1]} : vector<8x512xf32> to vector<8x128xf32>
    %31 = arith.negf %30 : vector<8x128xf32>
    %32 = math.exp %31 : vector<8x128xf32>
    %cst_14 = arith.constant 1.000000e+00 : f32
    %33 = vector.broadcast %cst_14 : f32 to vector<8x128xf32>
    %34 = arith.addf %33, %32 : vector<8x128xf32>
    %35 = arith.divf %33, %34 : vector<8x128xf32>
    %36 = arith.mulf %27, %8 : vector<8x128xf32>
    %37 = arith.mulf %21, %29 : vector<8x128xf32>
    %38 = arith.addf %36, %37 : vector<8x128xf32>
    %39 = math.tanh %38 : vector<8x128xf32>
    %40 = arith.mulf %35, %39 : vector<8x128xf32>
    %41 = arith.index_cast %10 : i32 to index
    %c0_15 = arith.constant 0 : index
    %42 = vector.load %arg14[%41, %c0_15] : memref<64x128xf32, #tpu.memory_space<vmem>>, vector<8x128xf32>
    tpu.vector_store %arg14[%41, %c0_15], %40 {strides = array<i32>} : memref<64x128xf32, #tpu.memory_space<vmem>>, vector<8x128xf32>,
    %c1_i32 = arith.constant 1 : i32
    %c8_i32_16 = arith.constant 8 : i32
    %43 = arith.muli %c1_i32, %c8_i32_16 : i32
    %44 = tpu.assume_multiple %43, 8 : i32
    %45 = arith.index_cast %44 : i32 to index
    %c0_17 = arith.constant 0 : index
    %46 = vector.load %arg15[%45, %c0_17] : memref<64x512xf32, #tpu.memory_space<vmem>>, vector<8x512xf32>
    %47 = arith.truncf %40 : vector<8x128xf32> to vector<8x128xbf16>
    %cst_18 = arith.constant dense<0.000000e+00> : vector<8x512xf32>
    %48 = tpu.matmul %47, %7, %cst_18 {dimension_numbers = #tpu.dot_dimension_numbers<[1], [0], [0], [1], [0, 0, 1, 1], [], []>} : vector<8x128xbf16>, vector<128x512xbf16>, vector<8x512xf32> -> vector<8x512xf32>
    %49 = arith.addf %46, %48 : vector<8x512xf32>
    %50 = vector.extract_strided_slice %49 {offsets = [0, 0], sizes = [8, 128], strides = [1, 1]} : vector<8x512xf32> to vector<8x128xf32>
    %51 = arith.negf %50 : vector<8x128xf32>
    %52 = math.exp %51 : vector<8x128xf32>
    %cst_19 = arith.constant 1.000000e+00 : f32
    %53 = vector.broadcast %cst_19 : f32 to vector<8x128xf32>
    %54 = arith.addf %53, %52 : vector<8x128xf32>
    %55 = arith.divf %53, %54 : vector<8x128xf32>
    %56 = vector.extract_strided_slice %49 {offsets = [0, 128], sizes = [8, 128], strides = [1, 1]} : vector<8x512xf32> to vector<8x128xf32>
    %57 = arith.negf %56 : vector<8x128xf32>
    %58 = math.exp %57 : vector<8x128xf32>
    %cst_20 = arith.constant 1.000000e+00 : f32
    %59 = vector.broadcast %cst_20 : f32 to vector<8x128xf32>
    %60 = arith.addf %59, %58 : vector<8x128xf32>
    %61 = arith.divf %59, %60 : vector<8x128xf32>
    %62 = vector.extract_strided_slice %49 {offsets = [0, 256], sizes = [8, 128], strides = [1, 1]} : vector<8x512xf32> to vector<8x128xf32>
    %63 = math.tanh %62 : vector<8x128xf32>
    %64 = vector.extract_strided_slice %49 {offsets = [0, 384], sizes = [8, 128], strides = [1, 1]} : vector<8x512xf32> to vector<8x128xf32>
    %65 = arith.negf %64 : vector<8x128xf32>
    %66 = math.exp %65 : vector<8x128xf32>
    %cst_21 = arith.constant 1.000000e+00 : f32
    %67 = vector.broadcast %cst_21 : f32 to vector<8x128xf32>
    %68 = arith.addf %67, %66 : vector<8x128xf32>
    %69 = arith.divf %67, %68 : vector<8x128xf32>
    %70 = arith.mulf %61, %38 : vector<8x128xf32>
    %71 = arith.mulf %55, %63 : vector<8x128xf32>
    %72 = arith.addf %70, %71 : vector<8x128xf32>
    %73 = math.tanh %72 : vector<8x128xf32>
    %74 = arith.mulf %69, %73 : vector<8x128xf32>
    %75 = arith.index_cast %44 : i32 to index
    %c0_22 = arith.constant 0 : index
    %76 = vector.load %arg14[%75, %c0_22] : memref<64x128xf32, #tpu.memory_space<vmem>>, vector<8x128xf32>
    tpu.vector_store %arg14[%75, %c0_22], %74 {strides = array<i32>} : memref<64x128xf32, #tpu.memory_space<vmem>>, vector<8x128xf32>,
    %c2_i32 = arith.constant 2 : i32
    %c8_i32_23 = arith.constant 8 : i32
    %77 = arith.muli %c2_i32, %c8_i32_23 : i32
    %78 = tpu.assume_multiple %77, 8 : i32
    %79 = arith.index_cast %78 : i32 to index
    %c0_24 = arith.constant 0 : index
    %80 = vector.load %arg15[%79, %c0_24] : memref<64x512xf32, #tpu.memory_space<vmem>>, vector<8x512xf32>
    %81 = arith.truncf %74 : vector<8x128xf32> to vector<8x128xbf16>
    %cst_25 = arith.constant dense<0.000000e+00> : vector<8x512xf32>
    %82 = tpu.matmul %81, %7, %cst_25 {dimension_numbers = #tpu.dot_dimension_numbers<[1], [0], [0], [1], [0, 0, 1, 1], [], []>} : vector<8x128xbf16>, vector<128x512xbf16>, vector<8x512xf32> -> vector<8x512xf32>
    %83 = arith.addf %80, %82 : vector<8x512xf32>
    %84 = vector.extract_strided_slice %83 {offsets = [0, 0], sizes = [8, 128], strides = [1, 1]} : vector<8x512xf32> to vector<8x128xf32>
    %85 = arith.negf %84 : vector<8x128xf32>
    %86 = math.exp %85 : vector<8x128xf32>
    %cst_26 = arith.constant 1.000000e+00 : f32
    %87 = vector.broadcast %cst_26 : f32 to vector<8x128xf32>
    %88 = arith.addf %87, %86 : vector<8x128xf32>
    %89 = arith.divf %87, %88 : vector<8x128xf32>
    %90 = vector.extract_strided_slice %83 {offsets = [0, 128], sizes = [8, 128], strides = [1, 1]} : vector<8x512xf32> to vector<8x128xf32>
    %91 = arith.negf %90 : vector<8x128xf32>
    %92 = math.exp %91 : vector<8x128xf32>
    %cst_27 = arith.constant 1.000000e+00 : f32
    %93 = vector.broadcast %cst_27 : f32 to vector<8x128xf32>
    %94 = arith.addf %93, %92 : vector<8x128xf32>
    %95 = arith.divf %93, %94 : vector<8x128xf32>
    %96 = vector.extract_strided_slice %83 {offsets = [0, 256], sizes = [8, 128], strides = [1, 1]} : vector<8x512xf32> to vector<8x128xf32>
    %97 = math.tanh %96 : vector<8x128xf32>
    %98 = vector.extract_strided_slice %83 {offsets = [0, 384], sizes = [8, 128], strides = [1, 1]} : vector<8x512xf32> to vector<8x128xf32>
    %99 = arith.negf %98 : vector<8x128xf32>
    %100 = math.exp %99 : vector<8x128xf32>
    %cst_28 = arith.constant 1.000000e+00 : f32
    %101 = vector.broadcast %cst_28 : f32 to vector<8x128xf32>
    %102 = arith.addf %101, %100 : vector<8x128xf32>
    %103 = arith.divf %101, %102 : vector<8x128xf32>
    %104 = arith.mulf %95, %72 : vector<8x128xf32>
    %105 = arith.mulf %89, %97 : vector<8x128xf32>
    %106 = arith.addf %104, %105 : vector<8x128xf32>
    %107 = math.tanh %106 : vector<8x128xf32>
    %108 = arith.mulf %103, %107 : vector<8x128xf32>
    %109 = arith.index_cast %78 : i32 to index
    %c0_29 = arith.constant 0 : index
    %110 = vector.load %arg14[%109, %c0_29] : memref<64x128xf32, #tpu.memory_space<vmem>>, vector<8x128xf32>
    tpu.vector_store %arg14[%109, %c0_29], %108 {strides = array<i32>} : memref<64x128xf32, #tpu.memory_space<vmem>>, vector<8x128xf32>,
    %c3_i32 = arith.constant 3 : i32
    %c8_i32_30 = arith.constant 8 : i32
    %111 = arith.muli %c3_i32, %c8_i32_30 : i32
    %112 = tpu.assume_multiple %111, 8 : i32
    %113 = arith.index_cast %112 : i32 to index
    %c0_31 = arith.constant 0 : index
    %114 = vector.load %arg15[%113, %c0_31] : memref<64x512xf32, #tpu.memory_space<vmem>>, vector<8x512xf32>
    %115 = arith.truncf %108 : vector<8x128xf32> to vector<8x128xbf16>
    %cst_32 = arith.constant dense<0.000000e+00> : vector<8x512xf32>
    %116 = tpu.matmul %115, %7, %cst_32 {dimension_numbers = #tpu.dot_dimension_numbers<[1], [0], [0], [1], [0, 0, 1, 1], [], []>} : vector<8x128xbf16>, vector<128x512xbf16>, vector<8x512xf32> -> vector<8x512xf32>
    %117 = arith.addf %114, %116 : vector<8x512xf32>
    %118 = vector.extract_strided_slice %117 {offsets = [0, 0], sizes = [8, 128], strides = [1, 1]} : vector<8x512xf32> to vector<8x128xf32>
    %119 = arith.negf %118 : vector<8x128xf32>
    %120 = math.exp %119 : vector<8x128xf32>
    %cst_33 = arith.constant 1.000000e+00 : f32
    %121 = vector.broadcast %cst_33 : f32 to vector<8x128xf32>
    %122 = arith.addf %121, %120 : vector<8x128xf32>
    %123 = arith.divf %121, %122 : vector<8x128xf32>
    %124 = vector.extract_strided_slice %117 {offsets = [0, 128], sizes = [8, 128], strides = [1, 1]} : vector<8x512xf32> to vector<8x128xf32>
    %125 = arith.negf %124 : vector<8x128xf32>
    %126 = math.exp %125 : vector<8x128xf32>
    %cst_34 = arith.constant 1.000000e+00 : f32
    %127 = vector.broadcast %cst_34 : f32 to vector<8x128xf32>
    %128 = arith.addf %127, %126 : vector<8x128xf32>
    %129 = arith.divf %127, %128 : vector<8x128xf32>
    %130 = vector.extract_strided_slice %117 {offsets = [0, 256], sizes = [8, 128], strides = [1, 1]} : vector<8x512xf32> to vector<8x128xf32>
    %131 = math.tanh %130 : vector<8x128xf32>
    %132 = vector.extract_strided_slice %117 {offsets = [0, 384], sizes = [8, 128], strides = [1, 1]} : vector<8x512xf32> to vector<8x128xf32>
    %133 = arith.negf %132 : vector<8x128xf32>
    %134 = math.exp %133 : vector<8x128xf32>
    %cst_35 = arith.constant 1.000000e+00 : f32
    %135 = vector.broadcast %cst_35 : f32 to vector<8x128xf32>
    %136 = arith.addf %135, %134 : vector<8x128xf32>
    %137 = arith.divf %135, %136 : vector<8x128xf32>
    %138 = arith.mulf %129, %106 : vector<8x128xf32>
    %139 = arith.mulf %123, %131 : vector<8x128xf32>
    %140 = arith.addf %138, %139 : vector<8x128xf32>
    %141 = math.tanh %140 : vector<8x128xf32>
    %142 = arith.mulf %137, %141 : vector<8x128xf32>
    %143 = arith.index_cast %112 : i32 to index
    %c0_36 = arith.constant 0 : index
    %144 = vector.load %arg14[%143, %c0_36] : memref<64x128xf32, #tpu.memory_space<vmem>>, vector<8x128xf32>
    tpu.vector_store %arg14[%143, %c0_36], %142 {strides = array<i32>} : memref<64x128xf32, #tpu.memory_space<vmem>>, vector<8x128xf32>,
    %c4_i32 = arith.constant 4 : i32
    %c8_i32_37 = arith.constant 8 : i32
    %145 = arith.muli %c4_i32, %c8_i32_37 : i32
    %146 = tpu.assume_multiple %145, 8 : i32
    %147 = arith.index_cast %146 : i32 to index
    %c0_38 = arith.constant 0 : index
    %148 = vector.load %arg15[%147, %c0_38] : memref<64x512xf32, #tpu.memory_space<vmem>>, vector<8x512xf32>
    %149 = arith.truncf %142 : vector<8x128xf32> to vector<8x128xbf16>
    %cst_39 = arith.constant dense<0.000000e+00> : vector<8x512xf32>
    %150 = tpu.matmul %149, %7, %cst_39 {dimension_numbers = #tpu.dot_dimension_numbers<[1], [0], [0], [1], [0, 0, 1, 1], [], []>} : vector<8x128xbf16>, vector<128x512xbf16>, vector<8x512xf32> -> vector<8x512xf32>
    %151 = arith.addf %148, %150 : vector<8x512xf32>
    %152 = vector.extract_strided_slice %151 {offsets = [0, 0], sizes = [8, 128], strides = [1, 1]} : vector<8x512xf32> to vector<8x128xf32>
    %153 = arith.negf %152 : vector<8x128xf32>
    %154 = math.exp %153 : vector<8x128xf32>
    %cst_40 = arith.constant 1.000000e+00 : f32
    %155 = vector.broadcast %cst_40 : f32 to vector<8x128xf32>
    %156 = arith.addf %155, %154 : vector<8x128xf32>
    %157 = arith.divf %155, %156 : vector<8x128xf32>
    %158 = vector.extract_strided_slice %151 {offsets = [0, 128], sizes = [8, 128], strides = [1, 1]} : vector<8x512xf32> to vector<8x128xf32>
    %159 = arith.negf %158 : vector<8x128xf32>
    %160 = math.exp %159 : vector<8x128xf32>
    %cst_41 = arith.constant 1.000000e+00 : f32
    %161 = vector.broadcast %cst_41 : f32 to vector<8x128xf32>
    %162 = arith.addf %161, %160 : vector<8x128xf32>
    %163 = arith.divf %161, %162 : vector<8x128xf32>
    %164 = vector.extract_strided_slice %151 {offsets = [0, 256], sizes = [8, 128], strides = [1, 1]} : vector<8x512xf32> to vector<8x128xf32>
    %165 = math.tanh %164 : vector<8x128xf32>
    %166 = vector.extract_strided_slice %151 {offsets = [0, 384], sizes = [8, 128], strides = [1, 1]} : vector<8x512xf32> to vector<8x128xf32>
    %167 = arith.negf %166 : vector<8x128xf32>
    %168 = math.exp %167 : vector<8x128xf32>
    %cst_42 = arith.constant 1.000000e+00 : f32
    %169 = vector.broadcast %cst_42 : f32 to vector<8x128xf32>
    %170 = arith.addf %169, %168 : vector<8x128xf32>
    %171 = arith.divf %169, %170 : vector<8x128xf32>
    %172 = arith.mulf %163, %140 : vector<8x128xf32>
    %173 = arith.mulf %157, %165 : vector<8x128xf32>
    %174 = arith.addf %172, %173 : vector<8x128xf32>
    %175 = math.tanh %174 : vector<8x128xf32>
    %176 = arith.mulf %171, %175 : vector<8x128xf32>
    %177 = arith.index_cast %146 : i32 to index
    %c0_43 = arith.constant 0 : index
    %178 = vector.load %arg14[%177, %c0_43] : memref<64x128xf32, #tpu.memory_space<vmem>>, vector<8x128xf32>
    tpu.vector_store %arg14[%177, %c0_43], %176 {strides = array<i32>} : memref<64x128xf32, #tpu.memory_space<vmem>>, vector<8x128xf32>,
    %c5_i32 = arith.constant 5 : i32
    %c8_i32_44 = arith.constant 8 : i32
    %179 = arith.muli %c5_i32, %c8_i32_44 : i32
    %180 = tpu.assume_multiple %179, 8 : i32
    %181 = arith.index_cast %180 : i32 to index
    %c0_45 = arith.constant 0 : index
    %182 = vector.load %arg15[%181, %c0_45] : memref<64x512xf32, #tpu.memory_space<vmem>>, vector<8x512xf32>
    %183 = arith.truncf %176 : vector<8x128xf32> to vector<8x128xbf16>
    %cst_46 = arith.constant dense<0.000000e+00> : vector<8x512xf32>
    %184 = tpu.matmul %183, %7, %cst_46 {dimension_numbers = #tpu.dot_dimension_numbers<[1], [0], [0], [1], [0, 0, 1, 1], [], []>} : vector<8x128xbf16>, vector<128x512xbf16>, vector<8x512xf32> -> vector<8x512xf32>
    %185 = arith.addf %182, %184 : vector<8x512xf32>
    %186 = vector.extract_strided_slice %185 {offsets = [0, 0], sizes = [8, 128], strides = [1, 1]} : vector<8x512xf32> to vector<8x128xf32>
    %187 = arith.negf %186 : vector<8x128xf32>
    %188 = math.exp %187 : vector<8x128xf32>
    %cst_47 = arith.constant 1.000000e+00 : f32
    %189 = vector.broadcast %cst_47 : f32 to vector<8x128xf32>
    %190 = arith.addf %189, %188 : vector<8x128xf32>
    %191 = arith.divf %189, %190 : vector<8x128xf32>
    %192 = vector.extract_strided_slice %185 {offsets = [0, 128], sizes = [8, 128], strides = [1, 1]} : vector<8x512xf32> to vector<8x128xf32>
    %193 = arith.negf %192 : vector<8x128xf32>
    %194 = math.exp %193 : vector<8x128xf32>
    %cst_48 = arith.constant 1.000000e+00 : f32
    %195 = vector.broadcast %cst_48 : f32 to vector<8x128xf32>
    %196 = arith.addf %195, %194 : vector<8x128xf32>
    %197 = arith.divf %195, %196 : vector<8x128xf32>
    %198 = vector.extract_strided_slice %185 {offsets = [0, 256], sizes = [8, 128], strides = [1, 1]} : vector<8x512xf32> to vector<8x128xf32>
    %199 = math.tanh %198 : vector<8x128xf32>
    %200 = vector.extract_strided_slice %185 {offsets = [0, 384], sizes = [8, 128], strides = [1, 1]} : vector<8x512xf32> to vector<8x128xf32>
    %201 = arith.negf %200 : vector<8x128xf32>
    %202 = math.exp %201 : vector<8x128xf32>
    %cst_49 = arith.constant 1.000000e+00 : f32
    %203 = vector.broadcast %cst_49 : f32 to vector<8x128xf32>
    %204 = arith.addf %203, %202 : vector<8x128xf32>
    %205 = arith.divf %203, %204 : vector<8x128xf32>
    %206 = arith.mulf %197, %174 : vector<8x128xf32>
    %207 = arith.mulf %191, %199 : vector<8x128xf32>
    %208 = arith.addf %206, %207 : vector<8x128xf32>
    %209 = math.tanh %208 : vector<8x128xf32>
    %210 = arith.mulf %205, %209 : vector<8x128xf32>
    %211 = arith.index_cast %180 : i32 to index
    %c0_50 = arith.constant 0 : index
    %212 = vector.load %arg14[%211, %c0_50] : memref<64x128xf32, #tpu.memory_space<vmem>>, vector<8x128xf32>
    tpu.vector_store %arg14[%211, %c0_50], %210 {strides = array<i32>} : memref<64x128xf32, #tpu.memory_space<vmem>>, vector<8x128xf32>,
    %c6_i32 = arith.constant 6 : i32
    %c8_i32_51 = arith.constant 8 : i32
    %213 = arith.muli %c6_i32, %c8_i32_51 : i32
    %214 = tpu.assume_multiple %213, 8 : i32
    %215 = arith.index_cast %214 : i32 to index
    %c0_52 = arith.constant 0 : index
    %216 = vector.load %arg15[%215, %c0_52] : memref<64x512xf32, #tpu.memory_space<vmem>>, vector<8x512xf32>
    %217 = arith.truncf %210 : vector<8x128xf32> to vector<8x128xbf16>
    %cst_53 = arith.constant dense<0.000000e+00> : vector<8x512xf32>
    %218 = tpu.matmul %217, %7, %cst_53 {dimension_numbers = #tpu.dot_dimension_numbers<[1], [0], [0], [1], [0, 0, 1, 1], [], []>} : vector<8x128xbf16>, vector<128x512xbf16>, vector<8x512xf32> -> vector<8x512xf32>
    %219 = arith.addf %216, %218 : vector<8x512xf32>
    %220 = vector.extract_strided_slice %219 {offsets = [0, 0], sizes = [8, 128], strides = [1, 1]} : vector<8x512xf32> to vector<8x128xf32>
    %221 = arith.negf %220 : vector<8x128xf32>
    %222 = math.exp %221 : vector<8x128xf32>
    %cst_54 = arith.constant 1.000000e+00 : f32
    %223 = vector.broadcast %cst_54 : f32 to vector<8x128xf32>
    %224 = arith.addf %223, %222 : vector<8x128xf32>
    %225 = arith.divf %223, %224 : vector<8x128xf32>
    %226 = vector.extract_strided_slice %219 {offsets = [0, 128], sizes = [8, 128], strides = [1, 1]} : vector<8x512xf32> to vector<8x128xf32>
    %227 = arith.negf %226 : vector<8x128xf32>
    %228 = math.exp %227 : vector<8x128xf32>
    %cst_55 = arith.constant 1.000000e+00 : f32
    %229 = vector.broadcast %cst_55 : f32 to vector<8x128xf32>
    %230 = arith.addf %229, %228 : vector<8x128xf32>
    %231 = arith.divf %229, %230 : vector<8x128xf32>
    %232 = vector.extract_strided_slice %219 {offsets = [0, 256], sizes = [8, 128], strides = [1, 1]} : vector<8x512xf32> to vector<8x128xf32>
    %233 = math.tanh %232 : vector<8x128xf32>
    %234 = vector.extract_strided_slice %219 {offsets = [0, 384], sizes = [8, 128], strides = [1, 1]} : vector<8x512xf32> to vector<8x128xf32>
    %235 = arith.negf %234 : vector<8x128xf32>
    %236 = math.exp %235 : vector<8x128xf32>
    %cst_56 = arith.constant 1.000000e+00 : f32
    %237 = vector.broadcast %cst_56 : f32 to vector<8x128xf32>
    %238 = arith.addf %237, %236 : vector<8x128xf32>
    %239 = arith.divf %237, %238 : vector<8x128xf32>
    %240 = arith.mulf %231, %208 : vector<8x128xf32>
    %241 = arith.mulf %225, %233 : vector<8x128xf32>
    %242 = arith.addf %240, %241 : vector<8x128xf32>
    %243 = math.tanh %242 : vector<8x128xf32>
    %244 = arith.mulf %239, %243 : vector<8x128xf32>
    %245 = arith.index_cast %214 : i32 to index
    %c0_57 = arith.constant 0 : index
    %246 = vector.load %arg14[%245, %c0_57] : memref<64x128xf32, #tpu.memory_space<vmem>>, vector<8x128xf32>
    tpu.vector_store %arg14[%245, %c0_57], %244 {strides = array<i32>} : memref<64x128xf32, #tpu.memory_space<vmem>>, vector<8x128xf32>,
    %c7_i32 = arith.constant 7 : i32
    %c8_i32_58 = arith.constant 8 : i32
    %247 = arith.muli %c7_i32, %c8_i32_58 : i32
    %248 = tpu.assume_multiple %247, 8 : i32
    %249 = arith.index_cast %248 : i32 to index
    %c0_59 = arith.constant 0 : index
    %250 = vector.load %arg15[%249, %c0_59] : memref<64x512xf32, #tpu.memory_space<vmem>>, vector<8x512xf32>
    %251 = arith.truncf %244 : vector<8x128xf32> to vector<8x128xbf16>
    %cst_60 = arith.constant dense<0.000000e+00> : vector<8x512xf32>
    %252 = tpu.matmul %251, %7, %cst_60 {dimension_numbers = #tpu.dot_dimension_numbers<[1], [0], [0], [1], [0, 0, 1, 1], [], []>} : vector<8x128xbf16>, vector<128x512xbf16>, vector<8x512xf32> -> vector<8x512xf32>
    %253 = arith.addf %250, %252 : vector<8x512xf32>
    %254 = vector.extract_strided_slice %253 {offsets = [0, 0], sizes = [8, 128], strides = [1, 1]} : vector<8x512xf32> to vector<8x128xf32>
    %255 = arith.negf %254 : vector<8x128xf32>
    %256 = math.exp %255 : vector<8x128xf32>
    %cst_61 = arith.constant 1.000000e+00 : f32
    %257 = vector.broadcast %cst_61 : f32 to vector<8x128xf32>
    %258 = arith.addf %257, %256 : vector<8x128xf32>
    %259 = arith.divf %257, %258 : vector<8x128xf32>
    %260 = vector.extract_strided_slice %253 {offsets = [0, 128], sizes = [8, 128], strides = [1, 1]} : vector<8x512xf32> to vector<8x128xf32>
    %261 = arith.negf %260 : vector<8x128xf32>
    %262 = math.exp %261 : vector<8x128xf32>
    %cst_62 = arith.constant 1.000000e+00 : f32
    %263 = vector.broadcast %cst_62 : f32 to vector<8x128xf32>
    %264 = arith.addf %263, %262 : vector<8x128xf32>
    %265 = arith.divf %263, %264 : vector<8x128xf32>
    %266 = vector.extract_strided_slice %253 {offsets = [0, 256], sizes = [8, 128], strides = [1, 1]} : vector<8x512xf32> to vector<8x128xf32>
    %267 = math.tanh %266 : vector<8x128xf32>
    %268 = vector.extract_strided_slice %253 {offsets = [0, 384], sizes = [8, 128], strides = [1, 1]} : vector<8x512xf32> to vector<8x128xf32>
    %269 = arith.negf %268 : vector<8x128xf32>
    %270 = math.exp %269 : vector<8x128xf32>
    %cst_63 = arith.constant 1.000000e+00 : f32
    %271 = vector.broadcast %cst_63 : f32 to vector<8x128xf32>
    %272 = arith.addf %271, %270 : vector<8x128xf32>
    %273 = arith.divf %271, %272 : vector<8x128xf32>
    %274 = arith.mulf %265, %242 : vector<8x128xf32>
    %275 = arith.mulf %259, %267 : vector<8x128xf32>
    %276 = arith.addf %274, %275 : vector<8x128xf32>
    %277 = math.tanh %276 : vector<8x128xf32>
    %278 = arith.mulf %273, %277 : vector<8x128xf32>
    %279 = arith.index_cast %248 : i32 to index
    %c0_64 = arith.constant 0 : index
    %280 = vector.load %arg14[%279, %c0_64] : memref<64x128xf32, #tpu.memory_space<vmem>>, vector<8x128xf32>
    tpu.vector_store %arg14[%279, %c0_64], %278 {strides = array<i32>} : memref<64x128xf32, #tpu.memory_space<vmem>>, vector<8x128xf32>,
    %c8_i32_65 = arith.constant 8 : i32
    %c0_66 = arith.constant 0 : index
    %c0_67 = arith.constant 0 : index
    %281 = vector.load %arg14[%c0_66, %c0_67] : memref<64x128xf32, #tpu.memory_space<vmem>>, vector<64x128xf32>
    %282 = arith.truncf %281 : vector<64x128xf32> to vector<64x128xbf16>
    %c0_68 = arith.constant 0 : index
    %c0_69 = arith.constant 0 : index
    %283 = vector.load %arg5[%c0_68, %c0_69] : memref<128x512xbf16, #tpu.memory_space<vmem>>, vector<128x512xbf16>
    %cst_70 = arith.constant dense<0.000000e+00> : vector<64x512xf32>
    %284 = tpu.matmul %282, %283, %cst_70 {dimension_numbers = #tpu.dot_dimension_numbers<[1], [0], [0], [1], [0, 0, 1, 1], [], []>} : vector<64x128xbf16>, vector<128x512xbf16>, vector<64x512xf32> -> vector<64x512xf32>
    %c0_71 = arith.constant 0 : index
    %c0_72 = arith.constant 0 : index
    %285 = vector.load %arg7[%c0_71, %c0_72] : memref<1x512xf32, #tpu.memory_space<vmem>>, vector<1x512xf32>
    %286 = vector.broadcast %285 : vector<1x512xf32> to vector<64x512xf32>
    %287 = arith.addf %284, %286 : vector<64x512xf32>
    %c0_73 = arith.constant 0 : index
    %c0_74 = arith.constant 0 : index
    %288 = vector.load %arg15[%c0_73, %c0_74] : memref<64x512xf32, #tpu.memory_space<vmem>>, vector<64x512xf32>
    tpu.vector_store %arg15[%c0_73, %c0_74], %287 {strides = array<i32>} : memref<64x512xf32, #tpu.memory_space<vmem>>, vector<64x512xf32>,
    %c0_75 = arith.constant 0 : index
    %c0_76 = arith.constant 0 : index
    %289 = vector.load %arg6[%c0_75, %c0_76] : memref<128x512xbf16, #tpu.memory_space<vmem>>, vector<128x512xbf16>
    %cst_77 = arith.constant 0.000000e+00 : f32
    %290 = vector.broadcast %cst_77 : f32 to vector<8x128xf32>
    %c0_i32_78 = arith.constant 0 : i32
    %c8_i32_79 = arith.constant 8 : i32
    %291 = arith.muli %c0_i32_78, %c8_i32_79 : i32
    %292 = tpu.assume_multiple %291, 8 : i32
    %293 = arith.index_cast %292 : i32 to index
    %c0_80 = arith.constant 0 : index
    %294 = vector.load %arg15[%293, %c0_80] : memref<64x512xf32, #tpu.memory_space<vmem>>, vector<8x512xf32>
    %295 = arith.truncf %290 : vector<8x128xf32> to vector<8x128xbf16>
    %cst_81 = arith.constant dense<0.000000e+00> : vector<8x512xf32>
    %296 = tpu.matmul %295, %289, %cst_81 {dimension_numbers = #tpu.dot_dimension_numbers<[1], [0], [0], [1], [0, 0, 1, 1], [], []>} : vector<8x128xbf16>, vector<128x512xbf16>, vector<8x512xf32> -> vector<8x512xf32>
    %297 = arith.addf %294, %296 : vector<8x512xf32>
    %298 = vector.extract_strided_slice %297 {offsets = [0, 0], sizes = [8, 128], strides = [1, 1]} : vector<8x512xf32> to vector<8x128xf32>
    %299 = arith.negf %298 : vector<8x128xf32>
    %300 = math.exp %299 : vector<8x128xf32>
    %cst_82 = arith.constant 1.000000e+00 : f32
    %301 = vector.broadcast %cst_82 : f32 to vector<8x128xf32>
    %302 = arith.addf %301, %300 : vector<8x128xf32>
    %303 = arith.divf %301, %302 : vector<8x128xf32>
    %304 = vector.extract_strided_slice %297 {offsets = [0, 128], sizes = [8, 128], strides = [1, 1]} : vector<8x512xf32> to vector<8x128xf32>
    %305 = arith.negf %304 : vector<8x128xf32>
    %306 = math.exp %305 : vector<8x128xf32>
    %cst_83 = arith.constant 1.000000e+00 : f32
    %307 = vector.broadcast %cst_83 : f32 to vector<8x128xf32>
    %308 = arith.addf %307, %306 : vector<8x128xf32>
    %309 = arith.divf %307, %308 : vector<8x128xf32>
    %310 = vector.extract_strided_slice %297 {offsets = [0, 256], sizes = [8, 128], strides = [1, 1]} : vector<8x512xf32> to vector<8x128xf32>
    %311 = math.tanh %310 : vector<8x128xf32>
    %312 = vector.extract_strided_slice %297 {offsets = [0, 384], sizes = [8, 128], strides = [1, 1]} : vector<8x512xf32> to vector<8x128xf32>
    %313 = arith.negf %312 : vector<8x128xf32>
    %314 = math.exp %313 : vector<8x128xf32>
    %cst_84 = arith.constant 1.000000e+00 : f32
    %315 = vector.broadcast %cst_84 : f32 to vector<8x128xf32>
    %316 = arith.addf %315, %314 : vector<8x128xf32>
    %317 = arith.divf %315, %316 : vector<8x128xf32>
    %318 = arith.mulf %309, %290 : vector<8x128xf32>
    %319 = arith.mulf %303, %311 : vector<8x128xf32>
    %320 = arith.addf %318, %319 : vector<8x128xf32>
    %321 = math.tanh %320 : vector<8x128xf32>
    %322 = arith.mulf %317, %321 : vector<8x128xf32>
    %323 = arith.index_cast %292 : i32 to index
    %c0_85 = arith.constant 0 : index
    %324 = vector.load %arg14[%323, %c0_85] : memref<64x128xf32, #tpu.memory_space<vmem>>, vector<8x128xf32>
    tpu.vector_store %arg14[%323, %c0_85], %322 {strides = array<i32>} : memref<64x128xf32, #tpu.memory_space<vmem>>, vector<8x128xf32>,
    %c1_i32_86 = arith.constant 1 : i32
    %c8_i32_87 = arith.constant 8 : i32
    %325 = arith.muli %c1_i32_86, %c8_i32_87 : i32
    %326 = tpu.assume_multiple %325, 8 : i32
    %327 = arith.index_cast %326 : i32 to index
    %c0_88 = arith.constant 0 : index
    %328 = vector.load %arg15[%327, %c0_88] : memref<64x512xf32, #tpu.memory_space<vmem>>, vector<8x512xf32>
    %329 = arith.truncf %322 : vector<8x128xf32> to vector<8x128xbf16>
    %cst_89 = arith.constant dense<0.000000e+00> : vector<8x512xf32>
    %330 = tpu.matmul %329, %289, %cst_89 {dimension_numbers = #tpu.dot_dimension_numbers<[1], [0], [0], [1], [0, 0, 1, 1], [], []>} : vector<8x128xbf16>, vector<128x512xbf16>, vector<8x512xf32> -> vector<8x512xf32>
    %331 = arith.addf %328, %330 : vector<8x512xf32>
    %332 = vector.extract_strided_slice %331 {offsets = [0, 0], sizes = [8, 128], strides = [1, 1]} : vector<8x512xf32> to vector<8x128xf32>
    %333 = arith.negf %332 : vector<8x128xf32>
    %334 = math.exp %333 : vector<8x128xf32>
    %cst_90 = arith.constant 1.000000e+00 : f32
    %335 = vector.broadcast %cst_90 : f32 to vector<8x128xf32>
    %336 = arith.addf %335, %334 : vector<8x128xf32>
    %337 = arith.divf %335, %336 : vector<8x128xf32>
    %338 = vector.extract_strided_slice %331 {offsets = [0, 128], sizes = [8, 128], strides = [1, 1]} : vector<8x512xf32> to vector<8x128xf32>
    %339 = arith.negf %338 : vector<8x128xf32>
    %340 = math.exp %339 : vector<8x128xf32>
    %cst_91 = arith.constant 1.000000e+00 : f32
    %341 = vector.broadcast %cst_91 : f32 to vector<8x128xf32>
    %342 = arith.addf %341, %340 : vector<8x128xf32>
    %343 = arith.divf %341, %342 : vector<8x128xf32>
    %344 = vector.extract_strided_slice %331 {offsets = [0, 256], sizes = [8, 128], strides = [1, 1]} : vector<8x512xf32> to vector<8x128xf32>
    %345 = math.tanh %344 : vector<8x128xf32>
    %346 = vector.extract_strided_slice %331 {offsets = [0, 384], sizes = [8, 128], strides = [1, 1]} : vector<8x512xf32> to vector<8x128xf32>
    %347 = arith.negf %346 : vector<8x128xf32>
    %348 = math.exp %347 : vector<8x128xf32>
    %cst_92 = arith.constant 1.000000e+00 : f32
    %349 = vector.broadcast %cst_92 : f32 to vector<8x128xf32>
    %350 = arith.addf %349, %348 : vector<8x128xf32>
    %351 = arith.divf %349, %350 : vector<8x128xf32>
    %352 = arith.mulf %343, %320 : vector<8x128xf32>
    %353 = arith.mulf %337, %345 : vector<8x128xf32>
    %354 = arith.addf %352, %353 : vector<8x128xf32>
    %355 = math.tanh %354 : vector<8x128xf32>
    %356 = arith.mulf %351, %355 : vector<8x128xf32>
    %357 = arith.index_cast %326 : i32 to index
    %c0_93 = arith.constant 0 : index
    %358 = vector.load %arg14[%357, %c0_93] : memref<64x128xf32, #tpu.memory_space<vmem>>, vector<8x128xf32>
    tpu.vector_store %arg14[%357, %c0_93], %356 {strides = array<i32>} : memref<64x128xf32, #tpu.memory_space<vmem>>, vector<8x128xf32>,
    %c2_i32_94 = arith.constant 2 : i32
    %c8_i32_95 = arith.constant 8 : i32
    %359 = arith.muli %c2_i32_94, %c8_i32_95 : i32
    %360 = tpu.assume_multiple %359, 8 : i32
    %361 = arith.index_cast %360 : i32 to index
    %c0_96 = arith.constant 0 : index
    %362 = vector.load %arg15[%361, %c0_96] : memref<64x512xf32, #tpu.memory_space<vmem>>, vector<8x512xf32>
    %363 = arith.truncf %356 : vector<8x128xf32> to vector<8x128xbf16>
    %cst_97 = arith.constant dense<0.000000e+00> : vector<8x512xf32>
    %364 = tpu.matmul %363, %289, %cst_97 {dimension_numbers = #tpu.dot_dimension_numbers<[1], [0], [0], [1], [0, 0, 1, 1], [], []>} : vector<8x128xbf16>, vector<128x512xbf16>, vector<8x512xf32> -> vector<8x512xf32>
    %365 = arith.addf %362, %364 : vector<8x512xf32>
    %366 = vector.extract_strided_slice %365 {offsets = [0, 0], sizes = [8, 128], strides = [1, 1]} : vector<8x512xf32> to vector<8x128xf32>
    %367 = arith.negf %366 : vector<8x128xf32>
    %368 = math.exp %367 : vector<8x128xf32>
    %cst_98 = arith.constant 1.000000e+00 : f32
    %369 = vector.broadcast %cst_98 : f32 to vector<8x128xf32>
    %370 = arith.addf %369, %368 : vector<8x128xf32>
    %371 = arith.divf %369, %370 : vector<8x128xf32>
    %372 = vector.extract_strided_slice %365 {offsets = [0, 128], sizes = [8, 128], strides = [1, 1]} : vector<8x512xf32> to vector<8x128xf32>
    %373 = arith.negf %372 : vector<8x128xf32>
    %374 = math.exp %373 : vector<8x128xf32>
    %cst_99 = arith.constant 1.000000e+00 : f32
    %375 = vector.broadcast %cst_99 : f32 to vector<8x128xf32>
    %376 = arith.addf %375, %374 : vector<8x128xf32>
    %377 = arith.divf %375, %376 : vector<8x128xf32>
    %378 = vector.extract_strided_slice %365 {offsets = [0, 256], sizes = [8, 128], strides = [1, 1]} : vector<8x512xf32> to vector<8x128xf32>
    %379 = math.tanh %378 : vector<8x128xf32>
    %380 = vector.extract_strided_slice %365 {offsets = [0, 384], sizes = [8, 128], strides = [1, 1]} : vector<8x512xf32> to vector<8x128xf32>
    %381 = arith.negf %380 : vector<8x128xf32>
    %382 = math.exp %381 : vector<8x128xf32>
    %cst_100 = arith.constant 1.000000e+00 : f32
    %383 = vector.broadcast %cst_100 : f32 to vector<8x128xf32>
    %384 = arith.addf %383, %382 : vector<8x128xf32>
    %385 = arith.divf %383, %384 : vector<8x128xf32>
    %386 = arith.mulf %377, %354 : vector<8x128xf32>
    %387 = arith.mulf %371, %379 : vector<8x128xf32>
    %388 = arith.addf %386, %387 : vector<8x128xf32>
    %389 = math.tanh %388 : vector<8x128xf32>
    %390 = arith.mulf %385, %389 : vector<8x128xf32>
    %391 = arith.index_cast %360 : i32 to index
    %c0_101 = arith.constant 0 : index
    %392 = vector.load %arg14[%391, %c0_101] : memref<64x128xf32, #tpu.memory_space<vmem>>, vector<8x128xf32>
    tpu.vector_store %arg14[%391, %c0_101], %390 {strides = array<i32>} : memref<64x128xf32, #tpu.memory_space<vmem>>, vector<8x128xf32>,
    %c3_i32_102 = arith.constant 3 : i32
    %c8_i32_103 = arith.constant 8 : i32
    %393 = arith.muli %c3_i32_102, %c8_i32_103 : i32
    %394 = tpu.assume_multiple %393, 8 : i32
    %395 = arith.index_cast %394 : i32 to index
    %c0_104 = arith.constant 0 : index
    %396 = vector.load %arg15[%395, %c0_104] : memref<64x512xf32, #tpu.memory_space<vmem>>, vector<8x512xf32>
    %397 = arith.truncf %390 : vector<8x128xf32> to vector<8x128xbf16>
    %cst_105 = arith.constant dense<0.000000e+00> : vector<8x512xf32>
    %398 = tpu.matmul %397, %289, %cst_105 {dimension_numbers = #tpu.dot_dimension_numbers<[1], [0], [0], [1], [0, 0, 1, 1], [], []>} : vector<8x128xbf16>, vector<128x512xbf16>, vector<8x512xf32> -> vector<8x512xf32>
    %399 = arith.addf %396, %398 : vector<8x512xf32>
    %400 = vector.extract_strided_slice %399 {offsets = [0, 0], sizes = [8, 128], strides = [1, 1]} : vector<8x512xf32> to vector<8x128xf32>
    %401 = arith.negf %400 : vector<8x128xf32>
    %402 = math.exp %401 : vector<8x128xf32>
    %cst_106 = arith.constant 1.000000e+00 : f32
    %403 = vector.broadcast %cst_106 : f32 to vector<8x128xf32>
    %404 = arith.addf %403, %402 : vector<8x128xf32>
    %405 = arith.divf %403, %404 : vector<8x128xf32>
    %406 = vector.extract_strided_slice %399 {offsets = [0, 128], sizes = [8, 128], strides = [1, 1]} : vector<8x512xf32> to vector<8x128xf32>
    %407 = arith.negf %406 : vector<8x128xf32>
    %408 = math.exp %407 : vector<8x128xf32>
    %cst_107 = arith.constant 1.000000e+00 : f32
    %409 = vector.broadcast %cst_107 : f32 to vector<8x128xf32>
    %410 = arith.addf %409, %408 : vector<8x128xf32>
    %411 = arith.divf %409, %410 : vector<8x128xf32>
    %412 = vector.extract_strided_slice %399 {offsets = [0, 256], sizes = [8, 128], strides = [1, 1]} : vector<8x512xf32> to vector<8x128xf32>
    %413 = math.tanh %412 : vector<8x128xf32>
    %414 = vector.extract_strided_slice %399 {offsets = [0, 384], sizes = [8, 128], strides = [1, 1]} : vector<8x512xf32> to vector<8x128xf32>
    %415 = arith.negf %414 : vector<8x128xf32>
    %416 = math.exp %415 : vector<8x128xf32>
    %cst_108 = arith.constant 1.000000e+00 : f32
    %417 = vector.broadcast %cst_108 : f32 to vector<8x128xf32>
    %418 = arith.addf %417, %416 : vector<8x128xf32>
    %419 = arith.divf %417, %418 : vector<8x128xf32>
    %420 = arith.mulf %411, %388 : vector<8x128xf32>
    %421 = arith.mulf %405, %413 : vector<8x128xf32>
    %422 = arith.addf %420, %421 : vector<8x128xf32>
    %423 = math.tanh %422 : vector<8x128xf32>
    %424 = arith.mulf %419, %423 : vector<8x128xf32>
    %425 = arith.index_cast %394 : i32 to index
    %c0_109 = arith.constant 0 : index
    %426 = vector.load %arg14[%425, %c0_109] : memref<64x128xf32, #tpu.memory_space<vmem>>, vector<8x128xf32>
    tpu.vector_store %arg14[%425, %c0_109], %424 {strides = array<i32>} : memref<64x128xf32, #tpu.memory_space<vmem>>, vector<8x128xf32>,
    %c4_i32_110 = arith.constant 4 : i32
    %c8_i32_111 = arith.constant 8 : i32
    %427 = arith.muli %c4_i32_110, %c8_i32_111 : i32
    %428 = tpu.assume_multiple %427, 8 : i32
    %429 = arith.index_cast %428 : i32 to index
    %c0_112 = arith.constant 0 : index
    %430 = vector.load %arg15[%429, %c0_112] : memref<64x512xf32, #tpu.memory_space<vmem>>, vector<8x512xf32>
    %431 = arith.truncf %424 : vector<8x128xf32> to vector<8x128xbf16>
    %cst_113 = arith.constant dense<0.000000e+00> : vector<8x512xf32>
    %432 = tpu.matmul %431, %289, %cst_113 {dimension_numbers = #tpu.dot_dimension_numbers<[1], [0], [0], [1], [0, 0, 1, 1], [], []>} : vector<8x128xbf16>, vector<128x512xbf16>, vector<8x512xf32> -> vector<8x512xf32>
    %433 = arith.addf %430, %432 : vector<8x512xf32>
    %434 = vector.extract_strided_slice %433 {offsets = [0, 0], sizes = [8, 128], strides = [1, 1]} : vector<8x512xf32> to vector<8x128xf32>
    %435 = arith.negf %434 : vector<8x128xf32>
    %436 = math.exp %435 : vector<8x128xf32>
    %cst_114 = arith.constant 1.000000e+00 : f32
    %437 = vector.broadcast %cst_114 : f32 to vector<8x128xf32>
    %438 = arith.addf %437, %436 : vector<8x128xf32>
    %439 = arith.divf %437, %438 : vector<8x128xf32>
    %440 = vector.extract_strided_slice %433 {offsets = [0, 128], sizes = [8, 128], strides = [1, 1]} : vector<8x512xf32> to vector<8x128xf32>
    %441 = arith.negf %440 : vector<8x128xf32>
    %442 = math.exp %441 : vector<8x128xf32>
    %cst_115 = arith.constant 1.000000e+00 : f32
    %443 = vector.broadcast %cst_115 : f32 to vector<8x128xf32>
    %444 = arith.addf %443, %442 : vector<8x128xf32>
    %445 = arith.divf %443, %444 : vector<8x128xf32>
    %446 = vector.extract_strided_slice %433 {offsets = [0, 256], sizes = [8, 128], strides = [1, 1]} : vector<8x512xf32> to vector<8x128xf32>
    %447 = math.tanh %446 : vector<8x128xf32>
    %448 = vector.extract_strided_slice %433 {offsets = [0, 384], sizes = [8, 128], strides = [1, 1]} : vector<8x512xf32> to vector<8x128xf32>
    %449 = arith.negf %448 : vector<8x128xf32>
    %450 = math.exp %449 : vector<8x128xf32>
    %cst_116 = arith.constant 1.000000e+00 : f32
    %451 = vector.broadcast %cst_116 : f32 to vector<8x128xf32>
    %452 = arith.addf %451, %450 : vector<8x128xf32>
    %453 = arith.divf %451, %452 : vector<8x128xf32>
    %454 = arith.mulf %445, %422 : vector<8x128xf32>
    %455 = arith.mulf %439, %447 : vector<8x128xf32>
    %456 = arith.addf %454, %455 : vector<8x128xf32>
    %457 = math.tanh %456 : vector<8x128xf32>
    %458 = arith.mulf %453, %457 : vector<8x128xf32>
    %459 = arith.index_cast %428 : i32 to index
    %c0_117 = arith.constant 0 : index
    %460 = vector.load %arg14[%459, %c0_117] : memref<64x128xf32, #tpu.memory_space<vmem>>, vector<8x128xf32>
    tpu.vector_store %arg14[%459, %c0_117], %458 {strides = array<i32>} : memref<64x128xf32, #tpu.memory_space<vmem>>, vector<8x128xf32>,
    %c5_i32_118 = arith.constant 5 : i32
    %c8_i32_119 = arith.constant 8 : i32
    %461 = arith.muli %c5_i32_118, %c8_i32_119 : i32
    %462 = tpu.assume_multiple %461, 8 : i32
    %463 = arith.index_cast %462 : i32 to index
    %c0_120 = arith.constant 0 : index
    %464 = vector.load %arg15[%463, %c0_120] : memref<64x512xf32, #tpu.memory_space<vmem>>, vector<8x512xf32>
    %465 = arith.truncf %458 : vector<8x128xf32> to vector<8x128xbf16>
    %cst_121 = arith.constant dense<0.000000e+00> : vector<8x512xf32>
    %466 = tpu.matmul %465, %289, %cst_121 {dimension_numbers = #tpu.dot_dimension_numbers<[1], [0], [0], [1], [0, 0, 1, 1], [], []>} : vector<8x128xbf16>, vector<128x512xbf16>, vector<8x512xf32> -> vector<8x512xf32>
    %467 = arith.addf %464, %466 : vector<8x512xf32>
    %468 = vector.extract_strided_slice %467 {offsets = [0, 0], sizes = [8, 128], strides = [1, 1]} : vector<8x512xf32> to vector<8x128xf32>
    %469 = arith.negf %468 : vector<8x128xf32>
    %470 = math.exp %469 : vector<8x128xf32>
    %cst_122 = arith.constant 1.000000e+00 : f32
    %471 = vector.broadcast %cst_122 : f32 to vector<8x128xf32>
    %472 = arith.addf %471, %470 : vector<8x128xf32>
    %473 = arith.divf %471, %472 : vector<8x128xf32>
    %474 = vector.extract_strided_slice %467 {offsets = [0, 128], sizes = [8, 128], strides = [1, 1]} : vector<8x512xf32> to vector<8x128xf32>
    %475 = arith.negf %474 : vector<8x128xf32>
    %476 = math.exp %475 : vector<8x128xf32>
    %cst_123 = arith.constant 1.000000e+00 : f32
    %477 = vector.broadcast %cst_123 : f32 to vector<8x128xf32>
    %478 = arith.addf %477, %476 : vector<8x128xf32>
    %479 = arith.divf %477, %478 : vector<8x128xf32>
    %480 = vector.extract_strided_slice %467 {offsets = [0, 256], sizes = [8, 128], strides = [1, 1]} : vector<8x512xf32> to vector<8x128xf32>
    %481 = math.tanh %480 : vector<8x128xf32>
    %482 = vector.extract_strided_slice %467 {offsets = [0, 384], sizes = [8, 128], strides = [1, 1]} : vector<8x512xf32> to vector<8x128xf32>
    %483 = arith.negf %482 : vector<8x128xf32>
    %484 = math.exp %483 : vector<8x128xf32>
    %cst_124 = arith.constant 1.000000e+00 : f32
    %485 = vector.broadcast %cst_124 : f32 to vector<8x128xf32>
    %486 = arith.addf %485, %484 : vector<8x128xf32>
    %487 = arith.divf %485, %486 : vector<8x128xf32>
    %488 = arith.mulf %479, %456 : vector<8x128xf32>
    %489 = arith.mulf %473, %481 : vector<8x128xf32>
    %490 = arith.addf %488, %489 : vector<8x128xf32>
    %491 = math.tanh %490 : vector<8x128xf32>
    %492 = arith.mulf %487, %491 : vector<8x128xf32>
    %493 = arith.index_cast %462 : i32 to index
    %c0_125 = arith.constant 0 : index
    %494 = vector.load %arg14[%493, %c0_125] : memref<64x128xf32, #tpu.memory_space<vmem>>, vector<8x128xf32>
    tpu.vector_store %arg14[%493, %c0_125], %492 {strides = array<i32>} : memref<64x128xf32, #tpu.memory_space<vmem>>, vector<8x128xf32>,
    %c6_i32_126 = arith.constant 6 : i32
    %c8_i32_127 = arith.constant 8 : i32
    %495 = arith.muli %c6_i32_126, %c8_i32_127 : i32
    %496 = tpu.assume_multiple %495, 8 : i32
    %497 = arith.index_cast %496 : i32 to index
    %c0_128 = arith.constant 0 : index
    %498 = vector.load %arg15[%497, %c0_128] : memref<64x512xf32, #tpu.memory_space<vmem>>, vector<8x512xf32>
    %499 = arith.truncf %492 : vector<8x128xf32> to vector<8x128xbf16>
    %cst_129 = arith.constant dense<0.000000e+00> : vector<8x512xf32>
    %500 = tpu.matmul %499, %289, %cst_129 {dimension_numbers = #tpu.dot_dimension_numbers<[1], [0], [0], [1], [0, 0, 1, 1], [], []>} : vector<8x128xbf16>, vector<128x512xbf16>, vector<8x512xf32> -> vector<8x512xf32>
    %501 = arith.addf %498, %500 : vector<8x512xf32>
    %502 = vector.extract_strided_slice %501 {offsets = [0, 0], sizes = [8, 128], strides = [1, 1]} : vector<8x512xf32> to vector<8x128xf32>
    %503 = arith.negf %502 : vector<8x128xf32>
    %504 = math.exp %503 : vector<8x128xf32>
    %cst_130 = arith.constant 1.000000e+00 : f32
    %505 = vector.broadcast %cst_130 : f32 to vector<8x128xf32>
    %506 = arith.addf %505, %504 : vector<8x128xf32>
    %507 = arith.divf %505, %506 : vector<8x128xf32>
    %508 = vector.extract_strided_slice %501 {offsets = [0, 128], sizes = [8, 128], strides = [1, 1]} : vector<8x512xf32> to vector<8x128xf32>
    %509 = arith.negf %508 : vector<8x128xf32>
    %510 = math.exp %509 : vector<8x128xf32>
    %cst_131 = arith.constant 1.000000e+00 : f32
    %511 = vector.broadcast %cst_131 : f32 to vector<8x128xf32>
    %512 = arith.addf %511, %510 : vector<8x128xf32>
    %513 = arith.divf %511, %512 : vector<8x128xf32>
    %514 = vector.extract_strided_slice %501 {offsets = [0, 256], sizes = [8, 128], strides = [1, 1]} : vector<8x512xf32> to vector<8x128xf32>
    %515 = math.tanh %514 : vector<8x128xf32>
    %516 = vector.extract_strided_slice %501 {offsets = [0, 384], sizes = [8, 128], strides = [1, 1]} : vector<8x512xf32> to vector<8x128xf32>
    %517 = arith.negf %516 : vector<8x128xf32>
    %518 = math.exp %517 : vector<8x128xf32>
    %cst_132 = arith.constant 1.000000e+00 : f32
    %519 = vector.broadcast %cst_132 : f32 to vector<8x128xf32>
    %520 = arith.addf %519, %518 : vector<8x128xf32>
    %521 = arith.divf %519, %520 : vector<8x128xf32>
    %522 = arith.mulf %513, %490 : vector<8x128xf32>
    %523 = arith.mulf %507, %515 : vector<8x128xf32>
    %524 = arith.addf %522, %523 : vector<8x128xf32>
    %525 = math.tanh %524 : vector<8x128xf32>
    %526 = arith.mulf %521, %525 : vector<8x128xf32>
    %527 = arith.index_cast %496 : i32 to index
    %c0_133 = arith.constant 0 : index
    %528 = vector.load %arg14[%527, %c0_133] : memref<64x128xf32, #tpu.memory_space<vmem>>, vector<8x128xf32>
    tpu.vector_store %arg14[%527, %c0_133], %526 {strides = array<i32>} : memref<64x128xf32, #tpu.memory_space<vmem>>, vector<8x128xf32>,
    %c7_i32_134 = arith.constant 7 : i32
    %c8_i32_135 = arith.constant 8 : i32
    %529 = arith.muli %c7_i32_134, %c8_i32_135 : i32
    %530 = tpu.assume_multiple %529, 8 : i32
    %531 = arith.index_cast %530 : i32 to index
    %c0_136 = arith.constant 0 : index
    %532 = vector.load %arg15[%531, %c0_136] : memref<64x512xf32, #tpu.memory_space<vmem>>, vector<8x512xf32>
    %533 = arith.truncf %526 : vector<8x128xf32> to vector<8x128xbf16>
    %cst_137 = arith.constant dense<0.000000e+00> : vector<8x512xf32>
    %534 = tpu.matmul %533, %289, %cst_137 {dimension_numbers = #tpu.dot_dimension_numbers<[1], [0], [0], [1], [0, 0, 1, 1], [], []>} : vector<8x128xbf16>, vector<128x512xbf16>, vector<8x512xf32> -> vector<8x512xf32>
    %535 = arith.addf %532, %534 : vector<8x512xf32>
    %536 = vector.extract_strided_slice %535 {offsets = [0, 0], sizes = [8, 128], strides = [1, 1]} : vector<8x512xf32> to vector<8x128xf32>
    %537 = arith.negf %536 : vector<8x128xf32>
    %538 = math.exp %537 : vector<8x128xf32>
    %cst_138 = arith.constant 1.000000e+00 : f32
    %539 = vector.broadcast %cst_138 : f32 to vector<8x128xf32>
    %540 = arith.addf %539, %538 : vector<8x128xf32>
    %541 = arith.divf %539, %540 : vector<8x128xf32>
    %542 = vector.extract_strided_slice %535 {offsets = [0, 128], sizes = [8, 128], strides = [1, 1]} : vector<8x512xf32> to vector<8x128xf32>
    %543 = arith.negf %542 : vector<8x128xf32>
    %544 = math.exp %543 : vector<8x128xf32>
    %cst_139 = arith.constant 1.000000e+00 : f32
    %545 = vector.broadcast %cst_139 : f32 to vector<8x128xf32>
    %546 = arith.addf %545, %544 : vector<8x128xf32>
    %547 = arith.divf %545, %546 : vector<8x128xf32>
    %548 = vector.extract_strided_slice %535 {offsets = [0, 256], sizes = [8, 128], strides = [1, 1]} : vector<8x512xf32> to vector<8x128xf32>
    %549 = math.tanh %548 : vector<8x128xf32>
    %550 = vector.extract_strided_slice %535 {offsets = [0, 384], sizes = [8, 128], strides = [1, 1]} : vector<8x512xf32> to vector<8x128xf32>
    %551 = arith.negf %550 : vector<8x128xf32>
    %552 = math.exp %551 : vector<8x128xf32>
    %cst_140 = arith.constant 1.000000e+00 : f32
    %553 = vector.broadcast %cst_140 : f32 to vector<8x128xf32>
    %554 = arith.addf %553, %552 : vector<8x128xf32>
    %555 = arith.divf %553, %554 : vector<8x128xf32>
    %556 = arith.mulf %547, %524 : vector<8x128xf32>
    %557 = arith.mulf %541, %549 : vector<8x128xf32>
    %558 = arith.addf %556, %557 : vector<8x128xf32>
    %559 = math.tanh %558 : vector<8x128xf32>
    %560 = arith.mulf %555, %559 : vector<8x128xf32>
    %561 = arith.index_cast %530 : i32 to index
    %c0_141 = arith.constant 0 : index
    %562 = vector.load %arg14[%561, %c0_141] : memref<64x128xf32, #tpu.memory_space<vmem>>, vector<8x128xf32>
    tpu.vector_store %arg14[%561, %c0_141], %560 {strides = array<i32>} : memref<64x128xf32, #tpu.memory_space<vmem>>, vector<8x128xf32>,
    %c8_i32_142 = arith.constant 8 : i32
    %c0_143 = arith.constant 0 : index
    %c0_144 = arith.constant 0 : index
    %563 = vector.load %arg14[%c0_143, %c0_144] : memref<64x128xf32, #tpu.memory_space<vmem>>, vector<64x128xf32>
    %564 = arith.truncf %563 : vector<64x128xf32> to vector<64x128xbf16>
    %c0_145 = arith.constant 0 : index
    %c0_146 = arith.constant 0 : index
    %565 = vector.load %arg8[%c0_145, %c0_146] : memref<128x256xbf16, #tpu.memory_space<vmem>>, vector<128x256xbf16>
    %cst_147 = arith.constant dense<0.000000e+00> : vector<64x256xf32>
    %566 = tpu.matmul %564, %565, %cst_147 {dimension_numbers = #tpu.dot_dimension_numbers<[1], [0], [0], [1], [0, 0, 1, 1], [], []>} : vector<64x128xbf16>, vector<128x256xbf16>, vector<64x256xf32> -> vector<64x256xf32>
    %c0_148 = arith.constant 0 : index
    %c0_149 = arith.constant 0 : index
    %567 = vector.load %arg9[%c0_148, %c0_149] : memref<1x256xf32, #tpu.memory_space<vmem>>, vector<1x256xf32>
    %568 = vector.broadcast %567 : vector<1x256xf32> to vector<64x256xf32>
    %569 = arith.addf %566, %568 : vector<64x256xf32>
    %570 = vector.extract_strided_slice %569 {offsets = [0, 0], sizes = [64, 128], strides = [1, 1]} : vector<64x256xf32> to vector<64x128xf32>
    %cst_150 = arith.constant 2.000000e+01 : f32
    %571 = vector.broadcast %cst_150 : f32 to vector<64x128xf32>
    %572 = arith.cmpf ogt, %570, %571 : vector<64x128xf32>
    %cst_151 = arith.constant 2.000000e+01 : f32
    %573 = vector.broadcast %cst_151 : f32 to vector<64x128xf32>
    %574 = arith.minimumf %570, %573 : vector<64x128xf32>
    %575 = math.exp %574 : vector<64x128xf32>
    %576 = math.log1p %575 : vector<64x128xf32>
    %577 = arith.select %572, %570, %576 : vector<64x128xi1>, vector<64x128xf32>
    %578 = vector.extract_strided_slice %569 {offsets = [0, 128], sizes = [64, 128], strides = [1, 1]} : vector<64x256xf32> to vector<64x128xf32>
    %579 = math.sqrt %577 : vector<64x128xf32>
    %c0_152 = arith.constant 0 : index
    %c0_153 = arith.constant 0 : index
    %580 = vector.load %arg10[%c0_152, %c0_153] : memref<64x128xf32, #tpu.memory_space<vmem>>, vector<64x128xf32>
    %581 = arith.mulf %579, %580 : vector<64x128xf32>
    %582 = arith.addf %578, %581 : vector<64x128xf32>
    %c0_154 = arith.constant 0 : index
    %c0_155 = arith.constant 0 : index
    %583 = vector.load %arg11[%c0_154, %c0_155] : memref<64x128xf32, #tpu.memory_space<vmem>>, vector<64x128xf32>
    tpu.vector_store %arg11[%c0_154, %c0_155], %582 {strides = array<i32>} : memref<64x128xf32, #tpu.memory_space<vmem>>, vector<64x128xf32>,
    %c0_156 = arith.constant 0 : index
    %c0_157 = arith.constant 0 : index
    %584 = vector.load %arg12[%c0_156, %c0_157] : memref<64x128xf32, #tpu.memory_space<vmem>>, vector<64x128xf32>
    tpu.vector_store %arg12[%c0_156, %c0_157], %578 {strides = array<i32>} : memref<64x128xf32, #tpu.memory_space<vmem>>, vector<64x128xf32>,
    %c0_158 = arith.constant 0 : index
    %c0_159 = arith.constant 0 : index
    %585 = vector.load %arg13[%c0_158, %c0_159] : memref<64x128xf32, #tpu.memory_space<vmem>>, vector<64x128xf32>
    tpu.vector_store %arg13[%c0_158, %c0_159], %577 {strides = array<i32>} : memref<64x128xf32, #tpu.memory_space<vmem>>, vector<64x128xf32>,
    return
  }
  func.func @transform_0(%arg0: i32) -> (i32, i32) {
    %c0_i32 = arith.constant 0 : i32
    %c0_i32_0 = arith.constant 0 : i32
    %c0_i32_1 = arith.constant 0 : i32
    return %c0_i32, %c0_i32_0 : i32, i32
  }
  func.func @transform_1(%arg0: i32) -> (i32, i32) {
    %c0_i32 = arith.constant 0 : i32
    %c0_i32_0 = arith.constant 0 : i32
    %c0_i32_1 = arith.constant 0 : i32
    return %c0_i32, %c0_i32_0 : i32, i32
  }
  func.func @transform_2(%arg0: i32) -> (i32, i32) {
    %c0_i32 = arith.constant 0 : i32
    %c0_i32_0 = arith.constant 0 : i32
    %c0_i32_1 = arith.constant 0 : i32
    return %c0_i32, %c0_i32_0 : i32, i32
  }
  func.func @transform_3(%arg0: i32) -> (i32, i32) {
    %c0_i32 = arith.constant 0 : i32
    %c0_i32_0 = arith.constant 0 : i32
    %c0_i32_1 = arith.constant 0 : i32
    return %c0_i32, %c0_i32_0 : i32, i32
  }
  func.func @transform_4(%arg0: i32) -> (i32, i32) {
    %c0_i32 = arith.constant 0 : i32
    %c0_i32_0 = arith.constant 0 : i32
    %c0_i32_1 = arith.constant 0 : i32
    return %c0_i32, %c0_i32_0 : i32, i32
  }
  func.func @transform_5(%arg0: i32) -> (i32, i32) {
    %c0_i32 = arith.constant 0 : i32
    %c0_i32_0 = arith.constant 0 : i32
    %c0_i32_1 = arith.constant 0 : i32
    return %c0_i32, %c0_i32_0 : i32, i32
  }
  func.func @transform_6(%arg0: i32) -> (i32, i32) {
    %c0_i32 = arith.constant 0 : i32
    %c0_i32_0 = arith.constant 0 : i32
    %c0_i32_1 = arith.constant 0 : i32
    return %c0_i32, %c0_i32_0 : i32, i32
  }
  func.func @transform_7(%arg0: i32) -> (i32, i32) {
    %c0_i32 = arith.constant 0 : i32
    %c0_i32_0 = arith.constant 0 : i32
    %c0_i32_1 = arith.constant 0 : i32
    return %c0_i32, %c0_i32_0 : i32, i32
  }
  func.func @transform_8(%arg0: i32) -> (i32, i32) {
    %c0_i32 = arith.constant 0 : i32
    %c0_i32_0 = arith.constant 0 : i32
    %c0_i32_1 = arith.constant 0 : i32
    return %c0_i32, %c0_i32_0 : i32, i32
  }
  func.func @transform_9(%arg0: i32) -> (i32, i32) {
    %c0_i32 = arith.constant 0 : i32
    %c0_i32_0 = arith.constant 0 : i32
    %c0_i32_1 = arith.constant 0 : i32
    return %c0_i32, %c0_i32_0 : i32, i32
  }
  func.func @transform_10(%arg0: i32) -> (i32, i32) {
    %c0_i32 = arith.constant 0 : i32
    %c0_i32_0 = arith.constant 0 : i32
    %c0_i32_1 = arith.constant 0 : i32
    return %c0_i32, %c0_i32_0 : i32, i32
  }
  func.func @transform_11(%arg0: i32) -> (i32, i32) {
    %c0_i32 = arith.constant 0 : i32
    %c0_i32_0 = arith.constant 0 : i32
    %c0_i32_1 = arith.constant 0 : i32
    return %c0_i32, %c0_i32_0 : i32, i32
  }
  func.func @transform_12(%arg0: i32) -> (i32, i32) {
    %c0_i32 = arith.constant 0 : i32
    %c0_i32_0 = arith.constant 0 : i32
    %c0_i32_1 = arith.constant 0 : i32
    return %c0_i32, %c0_i32_0 : i32, i32
  }
}

</mosaic_0001>

<llo_original>
// kernel: tpu_custom_call.1
$region0: #{tpu_custom_call.1}
  #allocation0 [shape = 'u32[]', space=smem, size = 0x4, offset = 0x4, fixed_abs, tag = 'smem constant byte address 0x4 - core index']
  #allocation1 [shape = 'u32[144,128]{1,0:T(1,128)}', space=vmem, size = 0x12000, scoped, tag = 'internal scratch']
  #allocation2 [shape = 'f32[64,128]{1,0:T(8,128)}', space=vmem, size = 0x8000, scoped, tag = 'scratch operand']
  #allocation3 [shape = 'f32[64,512]{1,0:T(8,128)}', space=vmem, size = 0x20000, scoped, tag = 'scratch operand']
  %s0 = inlined_call_operand.hbm [shape: bf16[64,128], index: 0, kind: input, shape index: {}]
  %s1 = inlined_call_operand.hbm [shape: bf16[128,512], index: 1, kind: input, shape index: {}]
  %s2 = inlined_call_operand.hbm [shape: bf16[128,512], index: 2, kind: input, shape index: {}]
  %s3 = inlined_call_operand.vmem [shape: f32[1,512], index: 3, kind: input, shape index: {}]
  %s4 = inlined_call_operand.hbm [shape: bf16[128,512], index: 4, kind: input, shape index: {}]
  %s5 = inlined_call_operand.hbm [shape: bf16[128,512], index: 5, kind: input, shape index: {}]
  %s6 = inlined_call_operand.vmem [shape: f32[1,512], index: 6, kind: input, shape index: {}]
  %s7 = inlined_call_operand.hbm [shape: bf16[128,256], index: 7, kind: input, shape index: {}]
  %s8 = inlined_call_operand.vmem [shape: f32[1,256], index: 8, kind: input, shape index: {}]
  %s9 = inlined_call_operand.hbm [shape: f32[64,128], index: 9, kind: input, shape index: {}]
  %s10 = inlined_call_operand.hbm [shape: f32[64,128], index: 10, kind: output, shape index: {0}]
  %s11 = inlined_call_operand.hbm [shape: f32[64,128], index: 11, kind: output, shape index: {1}]
  %s12 = inlined_call_operand.hbm [shape: f32[64,128], index: 12, kind: output, shape index: {2}]
  %13 = xla_tuple %s10, %s11, %s12
  %s14 = sld [smem:[#allocation0]]
  $region94: #{tpu_custom_call.1} parent=0
    _
  %s16 = ssub.s32 1, %s14
  %s17 = scalar_select 0, %s16, %s14
  $region1: #{tpu_custom_call.1} parent=0
    #allocation4 [shape = 'u8[16384]{0}', space=vmem, size = 0x4000, scoped, tag = 'input window, operand 0, single buffered']
    #allocation5 [shape = 's32[1]{0}', space=sflag, size = 0x4, scoped, tag = 'scoped memory for tpu_custom_call.1']
    #allocation6 [shape = 's32[1]{0}', space=sflag, size = 0x4, scoped, tag = 'scoped memory for tpu_custom_call.1']
    #allocation7 [shape = 'u8[131072]{0}', space=vmem, size = 0x20000, scoped, tag = 'input window, operand 1, single buffered']
    #allocation8 [shape = 's32[1]{0}', space=sflag, size = 0x4, scoped, tag = 'scoped memory for tpu_custom_call.1']
    #allocation9 [shape = 'u8[131072]{0}', space=vmem, size = 0x20000, scoped, tag = 'input window, operand 2, single buffered']
    #allocation10 [shape = 'u8[131072]{0}', space=vmem, size = 0x20000, scoped, tag = 'input window, operand 4, single buffered']
    #allocation11 [shape = 's32[1]{0}', space=sflag, size = 0x4, scoped, tag = 'scoped memory for tpu_custom_call.1']
    #allocation12 [shape = 'u8[131072]{0}', space=vmem, size = 0x20000, scoped, tag = 'input window, operand 5, single buffered']
    #allocation13 [shape = 'u8[65536]{0}', space=vmem, size = 0x10000, scoped, tag = 'input window, operand 7, single buffered']
    #allocation14 [shape = 's32[1]{0}', space=sflag, size = 0x4, scoped, tag = 'scoped memory for tpu_custom_call.1']
    #allocation15 [shape = 'u8[32768]{0}', space=vmem, size = 0x8000, scoped, tag = 'input window, operand 9, single buffered']
    #allocation16 [shape = 'u8[32768]{0}', space=vmem, size = 0x8000, scoped, tag = 'output window, operand 0, single buffered']
    #allocation17 [shape = 'u8[32768]{0}', space=vmem, size = 0x8000, scoped, tag = 'output window, operand 1, single buffered']
    #allocation18 [shape = 's32[1]{0}', space=sflag, size = 0x4, scoped, tag = 'scoped memory for tpu_custom_call.1']
    #allocation19 [shape = 'u8[32768]{0}', space=vmem, size = 0x8000, scoped, tag = 'output window, operand 2, single buffered']
    %18 = vsyncpa [#allocation5], 0
    %19 = vsyncpa [#allocation8], 0
    %20 = vsyncpa [#allocation11], 0
    %21 = vsyncpa [#allocation14], 0
    %22 = vsyncpa [#allocation6], 0
    %23 = vsyncpa [#allocation18], 0
    // Predicated region
    $region2: #{tpu_custom_call.1} parent=1 // pred_check
      _
    $region3: #{tpu_custom_call.1} parent=1 // pred_check_branch
      %25 = sbr.rel (0) target = $region5
    $region4: #{tpu_custom_call.1} parent=1 // pred_region
      %s27 = ssub.s32 512, 512
      %28 = vsyncadd [#allocation5], %s27
      %s29 = sshll.u32 [#allocation4], 4
      %s30 = int_to_ptr.vmem [resolvable:$true] %s29
      %35 = dma.hbm_to_vmem [thread:$0]  %s0, 512, %s30, [#allocation5], 64, 64, 4
    $region5: #{tpu_custom_call.1} parent=1 // pred_fallthru
      _
    // Predicated region
    $region6: #{tpu_custom_call.1} parent=1 // pred_check
      _
    $region7: #{tpu_custom_call.1} parent=1 // pred_check_branch
      %37 = sbr.rel (0) target = $region9
    $region8: #{tpu_custom_call.1} parent=1 // pred_region
      %s39 = ssub.s32 4096, 4096
      %40 = vsyncadd [#allocation8], %s39
      %s41 = sshll.u32 [#allocation7], 4
      %s42 = int_to_ptr.vmem [resolvable:$true] %s41
      %47 = dma.hbm_to_vmem [thread:$0]  %s1, 4096, %s42, [#allocation8], 256, 256, 16
    $region9: #{tpu_custom_call.1} parent=1 // pred_fallthru
      _
    // Predicated region
    $region10: #{tpu_custom_call.1} parent=1 // pred_check
      _
    $region11: #{tpu_custom_call.1} parent=1 // pred_check_branch
      %49 = sbr.rel (0) target = $region13
    $region12: #{tpu_custom_call.1} parent=1 // pred_region
      %s51 = ssub.s32 4096, 4096
      %52 = vsyncadd [#allocation8], %s51
      %s53 = sshll.u32 [#allocation9], 4
      %s54 = int_to_ptr.vmem [resolvable:$true] %s53
      %59 = dma.hbm_to_vmem [thread:$0]  %s2, 4096, %s54, [#allocation8], 256, 256, 16
    $region13: #{tpu_custom_call.1} parent=1 // pred_fallthru
      _
    // Predicated region
    $region14: #{tpu_custom_call.1} parent=1 // pred_check
      _
    $region15: #{tpu_custom_call.1} parent=1 // pred_check_branch
      %61 = sbr.rel (0) target = $region17
    $region16: #{tpu_custom_call.1} parent=1 // pred_region
      _
    $region17: #{tpu_custom_call.1} parent=1 // pred_fallthru
      _
    // Predicated region
    $region18: #{tpu_custom_call.1} parent=1 // pred_check
      _
    $region19: #{tpu_custom_call.1} parent=1 // pred_check_branch
      %63 = sbr.rel (0) target = $region21
    $region20: #{tpu_custom_call.1} parent=1 // pred_region
      %s65 = ssub.s32 4096, 4096
      %66 = vsyncadd [#allocation11], %s65
      %s67 = sshll.u32 [#allocation10], 4
      %s68 = int_to_ptr.vmem [resolvable:$true] %s67
      %73 = dma.hbm_to_vmem [thread:$0]  %s4, 4096, %s68, [#allocation11], 256, 256, 16
    $region21: #{tpu_custom_call.1} parent=1 // pred_fallthru
      _
    // Predicated region
    $region22: #{tpu_custom_call.1} parent=1 // pred_check
      _
    $region23: #{tpu_custom_call.1} parent=1 // pred_check_branch
      %75 = sbr.rel (0) target = $region25
    $region24: #{tpu_custom_call.1} parent=1 // pred_region
      %s77 = ssub.s32 4096, 4096
      %78 = vsyncadd [#allocation11], %s77
      %s79 = sshll.u32 [#allocation12], 4
      %s80 = int_to_ptr.vmem [resolvable:$true] %s79
      %85 = dma.hbm_to_vmem [thread:$0]  %s5, 4096, %s80, [#allocation11], 256, 256, 16
    $region25: #{tpu_custom_call.1} parent=1 // pred_fallthru
      _
    // Predicated region
    $region26: #{tpu_custom_call.1} parent=1 // pred_check
      _
    $region27: #{tpu_custom_call.1} parent=1 // pred_check_branch
      %87 = sbr.rel (0) target = $region29
    $region28: #{tpu_custom_call.1} parent=1 // pred_region
      _
    $region29: #{tpu_custom_call.1} parent=1 // pred_fallthru
      _
    // Predicated region
    $region30: #{tpu_custom_call.1} parent=1 // pred_check
      _
    $region31: #{tpu_custom_call.1} parent=1 // pred_check_branch
      %89 = sbr.rel (0) target = $region33
    $region32: #{tpu_custom_call.1} parent=1 // pred_region
      %s91 = ssub.s32 2048, 2048
      %92 = vsyncadd [#allocation14], %s91
      %s93 = sshll.u32 [#allocation13], 4
      %s94 = int_to_ptr.vmem [resolvable:$true] %s93
      %99 = dma.hbm_to_vmem [thread:$0]  %s7, 2048, %s94, [#allocation14], 128, 128, 8
    $region33: #{tpu_custom_call.1} parent=1 // pred_fallthru
      _
    // Predicated region
    $region34: #{tpu_custom_call.1} parent=1 // pred_check
      _
    $region35: #{tpu_custom_call.1} parent=1 // pred_check_branch
      %101 = sbr.rel (0) target = $region37
    $region36: #{tpu_custom_call.1} parent=1 // pred_region
      _
    $region37: #{tpu_custom_call.1} parent=1 // pred_fallthru
      _
    // Predicated region
    $region38: #{tpu_custom_call.1} parent=1 // pred_check
      _
    $region39: #{tpu_custom_call.1} parent=1 // pred_check_branch
      %103 = sbr.rel (0) target = $region41
    $region40: #{tpu_custom_call.1} parent=1 // pred_region
      %s105 = ssub.s32 1024, 1024
      %106 = vsyncadd [#allocation14], %s105
      %s107 = sshll.u32 [#allocation15], 4
      %s108 = int_to_ptr.vmem [resolvable:$true] %s107
      %113 = dma.hbm_to_vmem [thread:$0]  %s9, 1024, %s108, [#allocation14], 128, 128, 8
    $region41: #{tpu_custom_call.1} parent=1 // pred_fallthru
      _
    // Predicated region
    $region42: #{tpu_custom_call.1} parent=1 // pred_check
      _
    $region43: #{tpu_custom_call.1} parent=1 // pred_check_branch
      %115 = sbr.rel (0) target = $region45
    $region44: #{tpu_custom_call.1} parent=1 // pred_region
      %116 = dma.done [#allocation5], 512
    $region45: #{tpu_custom_call.1} parent=1 // pred_fallthru
      _
    // Predicated region
    $region46: #{tpu_custom_call.1} parent=1 // pred_check
      _
    $region47: #{tpu_custom_call.1} parent=1 // pred_check_branch
      %118 = sbr.rel (0) target = $region49
    $region48: #{tpu_custom_call.1} parent=1 // pred_region
      %119 = dma.done [#allocation8], 4096
    $region49: #{tpu_custom_call.1} parent=1 // pred_fallthru
      _
    // Predicated region
    $region50: #{tpu_custom_call.1} parent=1 // pred_check
      _
    $region51: #{tpu_custom_call.1} parent=1 // pred_check_branch
      %121 = sbr.rel (0) target = $region53
    $region52: #{tpu_custom_call.1} parent=1 // pred_region
      %122 = dma.done [#allocation8], 4096
    $region53: #{tpu_custom_call.1} parent=1 // pred_fallthru
      _
    // Predicated region
    $region54: #{tpu_custom_call.1} parent=1 // pred_check
      _
    $region55: #{tpu_custom_call.1} parent=1 // pred_check_branch
      %124 = sbr.rel (0) target = $region57
    $region56: #{tpu_custom_call.1} parent=1 // pred_region
      %125 = dma.done [#allocation11], 4096
    $region57: #{tpu_custom_call.1} parent=1 // pred_fallthru
      _
    // Predicated region
    $region58: #{tpu_custom_call.1} parent=1 // pred_check
      _
    $region59: #{tpu_custom_call.1} parent=1 // pred_check_branch
      %127 = sbr.rel (0) target = $region61
    $region60: #{tpu_custom_call.1} parent=1 // pred_region
      %128 = dma.done [#allocation11], 4096
    $region61: #{tpu_custom_call.1} parent=1 // pred_fallthru
      _
    // Predicated region
    $region62: #{tpu_custom_call.1} parent=1 // pred_check
      _
    $region63: #{tpu_custom_call.1} parent=1 // pred_check_branch
      %130 = sbr.rel (0) target = $region65
    $region64: #{tpu_custom_call.1} parent=1 // pred_region
      %131 = dma.done [#allocation14], 2048
    $region65: #{tpu_custom_call.1} parent=1 // pred_fallthru
      _
    // Predicated region
    $region66: #{tpu_custom_call.1} parent=1 // pred_check
      _
    $region67: #{tpu_custom_call.1} parent=1 // pred_check_branch
      %133 = sbr.rel (0) target = $region69
    $region68: #{tpu_custom_call.1} parent=1 // pred_region
      %134 = dma.done [#allocation14], 1024
    $region69: #{tpu_custom_call.1} parent=1 // pred_fallthru
      _
    %v136 = vld [vmem:[#allocation4] sm:$0xf]
    %v137 = vld [vmem:[#allocation4 + $0x4] sm:$0xf]
    %v138 = vld [vmem:[#allocation4 + $0x8] sm:$0xf]
    %v139 = vld [vmem:[#allocation4 + $0xc] sm:$0xf]
    %v140 = vld [vmem:[#allocation4 + $0x10] sm:$0xf]
    %v141 = vld [vmem:[#allocation4 + $0x14] sm:$0xf]
    %v142 = vld [vmem:[#allocation4 + $0x18] sm:$0xf]
    %v143 = vld [vmem:[#allocation4 + $0x1c] sm:$0xf]
    %v144 = vld [vmem:[#allocation7] sm:$0xff]
    %v145 = vld [vmem:[#allocation7 + $0x8] sm:$0xff]
    %v146 = vld [vmem:[#allocation7 + $0x10] sm:$0xff]
    %v147 = vld [vmem:[#allocation7 + $0x18] sm:$0xff]
    %v148 = vld [vmem:[#allocation7 + $0x20] sm:$0xff]
    %v149 = vld [vmem:[#allocation7 + $0x28] sm:$0xff]
    %v150 = vld [vmem:[#allocation7 + $0x30] sm:$0xff]
    %v151 = vld [vmem:[#allocation7 + $0x38] sm:$0xff]
    %v152 = vld [vmem:[#allocation7 + $0x40] sm:$0xff]
    %v153 = vld [vmem:[#allocation7 + $0x48] sm:$0xff]
    %v154 = vld [vmem:[#allocation7 + $0x50] sm:$0xff]
    %v155 = vld [vmem:[#allocation7 + $0x58] sm:$0xff]
    %v156 = vld [vmem:[#allocation7 + $0x60] sm:$0xff]
    %v157 = vld [vmem:[#allocation7 + $0x68] sm:$0xff]
    %v158 = vld [vmem:[#allocation7 + $0x70] sm:$0xff]
    %v159 = vld [vmem:[#allocation7 + $0x78] sm:$0xff]
    %v160 = vld [vmem:[#allocation7 + $0x80] sm:$0xff]
    %v161 = vld [vmem:[#allocation7 + $0x88] sm:$0xff]
    %v162 = vld [vmem:[#allocation7 + $0x90] sm:$0xff]
    %v163 = vld [vmem:[#allocation7 + $0x98] sm:$0xff]
    %v164 = vld [vmem:[#allocation7 + $0xa0] sm:$0xff]
    %v165 = vld [vmem:[#allocation7 + $0xa8] sm:$0xff]
    %v166 = vld [vmem:[#allocation7 + $0xb0] sm:$0xff]
    %v167 = vld [vmem:[#allocation7 + $0xb8] sm:$0xff]
    %v168 = vld [vmem:[#allocation7 + $0xc0] sm:$0xff]
    %v169 = vld [vmem:[#allocation7 + $0xc8] sm:$0xff]
    %v170 = vld [vmem:[#allocation7 + $0xd0] sm:$0xff]
    %v171 = vld [vmem:[#allocation7 + $0xd8] sm:$0xff]
    %v172 = vld [vmem:[#allocation7 + $0xe0] sm:$0xff]
    %v173 = vld [vmem:[#allocation7 + $0xe8] sm:$0xff]
    %v174 = vld [vmem:[#allocation7 + $0xf0] sm:$0xff]
    %v175 = vld [vmem:[#allocation7 + $0xf8] sm:$0xff]
    %v176 = vld [vmem:[%s3] sm:$0xf]
    %v178 = vlaneseq
    %v179 = vshrl.u32 %v178, 7
    %v180 = vsub.s32 0, %v179
    %v181 = vrot.slane %v176, %v180
    %v182 = vlaneseq
    %v183 = vshrl.u32 %v182, 7
    %v184 = vsub.s32 1, %v183
    %v185 = vrot.slane %v176, %v184
    %v186 = vlaneseq
    %v187 = vshrl.u32 %v186, 7
    %v188 = vsub.s32 2, %v187
    %v189 = vrot.slane %v176, %v188
    %v190 = vlaneseq
    %v191 = vshrl.u32 %v190, 7
    %v192 = vsub.s32 3, %v191
    %v193 = vrot.slane %v176, %v192
    %v206 = vunpack.c.l.b16 %v136
    %v207 = vunpack.c.l.b16 %v137
    %v208 = vunpack.c.l.b16 %v138
    %v209 = vunpack.c.l.b16 %v139
    %v210 = vunpack.c.l.b16 %v140
    %v211 = vunpack.c.l.b16 %v141
    %v212 = vunpack.c.l.b16 %v142
    %v213 = vunpack.c.l.b16 %v143
    %v214 = vpack.c.b16 %v207, %v206
    %v215 = vpack.c.b16 %v209, %v208
    %v216 = vpack.c.b16 %v211, %v210
    %v217 = vpack.c.b16 %v213, %v212
    %v254 = vunpack.c.l.b16 %v144
    %v255 = vunpack.c.h.b16 %v144
    %v256 = vunpack.c.l.b16 %v145
    %v257 = vunpack.c.h.b16 %v145
    %v258 = vunpack.c.l.b16 %v146
    %v259 = vunpack.c.h.b16 %v146
    %v260 = vunpack.c.l.b16 %v147
    %v261 = vunpack.c.h.b16 %v147
    %v262 = vunpack.c.l.b16 %v148
    %v263 = vunpack.c.h.b16 %v148
    %v264 = vunpack.c.l.b16 %v149
    %v265 = vunpack.c.h.b16 %v149
    %v266 = vunpack.c.l.b16 %v150
    %v267 = vunpack.c.h.b16 %v150
    %v268 = vunpack.c.l.b16 %v151
    %v269 = vunpack.c.h.b16 %v151
    %v270 = vunpack.c.l.b16 %v152
    %v271 = vunpack.c.h.b16 %v152
    %v272 = vunpack.c.l.b16 %v153
    %v273 = vunpack.c.h.b16 %v153
    %v274 = vunpack.c.l.b16 %v154
    %v275 = vunpack.c.h.b16 %v154
    %v276 = vunpack.c.l.b16 %v155
    %v277 = vunpack.c.h.b16 %v155
    %v278 = vunpack.c.l.b16 %v156
    %v279 = vunpack.c.h.b16 %v156
    %v280 = vunpack.c.l.b16 %v157
    %v281 = vunpack.c.h.b16 %v157
    %v282 = vunpack.c.l.b16 %v158
    %v283 = vunpack.c.h.b16 %v158
    %v284 = vunpack.c.l.b16 %v159
    %v285 = vunpack.c.h.b16 %v159
    %v286 = vunpack.c.l.b16 %v160
    %v287 = vunpack.c.h.b16 %v160
    %v288 = vunpack.c.l.b16 %v161
    %v289 = vunpack.c.h.b16 %v161
    %v290 = vunpack.c.l.b16 %v162
    %v291 = vunpack.c.h.b16 %v162
    %v292 = vunpack.c.l.b16 %v163
    %v293 = vunpack.c.h.b16 %v163
    %v294 = vunpack.c.l.b16 %v164
    %v295 = vunpack.c.h.b16 %v164
    %v296 = vunpack.c.l.b16 %v165
    %v297 = vunpack.c.h.b16 %v165
    %v298 = vunpack.c.l.b16 %v166
    %v299 = vunpack.c.h.b16 %v166
    %v300 = vunpack.c.l.b16 %v167
    %v301 = vunpack.c.h.b16 %v167
    %v302 = vunpack.c.l.b16 %v168
    %v303 = vunpack.c.h.b16 %v168
    %v304 = vunpack.c.l.b16 %v169
    %v305 = vunpack.c.h.b16 %v169
    %v306 = vunpack.c.l.b16 %v170
    %v307 = vunpack.c.h.b16 %v170
    %v308 = vunpack.c.l.b16 %v171
    %v309 = vunpack.c.h.b16 %v171
    %v310 = vunpack.c.l.b16 %v172
    %v311 = vunpack.c.h.b16 %v172
    %v312 = vunpack.c.l.b16 %v173
    %v313 = vunpack.c.h.b16 %v173
    %v314 = vunpack.c.l.b16 %v174
    %v315 = vunpack.c.h.b16 %v174
    %v316 = vunpack.c.l.b16 %v175
    %v317 = vunpack.c.h.b16 %v175
    %v318 = vpack.c.b16 %v258, %v254
    %v319 = vpack.c.b16 %v259, %v255
    %v320 = vpack.c.b16 %v260, %v256
    %v321 = vpack.c.b16 %v261, %v257
    %v322 = vpack.c.b16 %v266, %v262
    %v323 = vpack.c.b16 %v267, %v263
    %v324 = vpack.c.b16 %v268, %v264
    %v325 = vpack.c.b16 %v269, %v265
    %v326 = vpack.c.b16 %v274, %v270
    %v327 = vpack.c.b16 %v275, %v271
    %v328 = vpack.c.b16 %v276, %v272
    %v329 = vpack.c.b16 %v277, %v273
    %v330 = vpack.c.b16 %v282, %v278
    %v331 = vpack.c.b16 %v283, %v279
    %v332 = vpack.c.b16 %v284, %v280
    %v333 = vpack.c.b16 %v285, %v281
    %v334 = vpack.c.b16 %v290, %v286
    %v335 = vpack.c.b16 %v291, %v287
    %v336 = vpack.c.b16 %v292, %v288
    %v337 = vpack.c.b16 %v293, %v289
    %v338 = vpack.c.b16 %v298, %v294
    %v339 = vpack.c.b16 %v299, %v295
    %v340 = vpack.c.b16 %v300, %v296
    %v341 = vpack.c.b16 %v301, %v297
    %v342 = vpack.c.b16 %v306, %v302
    %v343 = vpack.c.b16 %v307, %v303
    %v344 = vpack.c.b16 %v308, %v304
    %v345 = vpack.c.b16 %v309, %v305
    %v346 = vpack.c.b16 %v314, %v310
    %v347 = vpack.c.b16 %v315, %v311
    %v348 = vpack.c.b16 %v316, %v312
    %v349 = vpack.c.b16 %v317, %v313
    %382 = vmatprep.subr.bf16.mxu0 %v319
    %383 = vmatpush1.bf16.msra.mxu0 %v318
    %384 = vmatprep.subr.bf16.mxu0 %v323
    %385 = vmatpush1.bf16.msra.mxu0 %v322
    %386 = vmatprep.subr.bf16.mxu0 %v327
    %387 = vmatpush1.bf16.msra.mxu0 %v326
    %388 = vmatprep.subr.bf16.mxu0 %v331
    %389 = vmatpush1.bf16.msra.mxu0 %v330
    %390 = vmatprep.subr.bf16.mxu0 %v335
    %391 = vmatpush1.bf16.msra.mxu0 %v334
    %392 = vmatprep.subr.bf16.mxu0 %v339
    %393 = vmatpush1.bf16.msra.mxu0 %v338
    %394 = vmatprep.subr.bf16.mxu0 %v343
    %395 = vmatpush1.bf16.msra.mxu0 %v342
    %396 = vmatprep.subr.bf16.mxu0 %v347
    %397 = vmatpush1.bf16.msra.mxu0 %v346
    %398 = vmatprep.subr.bf16.mxu0 0
    %399 = vmatpush1.bf16.msra.mxu0 0
    %400 = vmatprep.subr.bf16.mxu0 0
    %401 = vmatpush1.bf16.msra.mxu0 0
    %402 = vmatprep.subr.bf16.mxu0 0
    %403 = vmatpush1.bf16.msra.mxu0 0
    %404 = vmatprep.subr.bf16.mxu0 0
    %405 = vmatpush1.bf16.msra.mxu0 0
    %406 = vmatprep.subr.bf16.mxu0 0
    %407 = vmatpush1.bf16.msra.mxu0 0
    %408 = vmatprep.subr.bf16.mxu0 0
    %409 = vmatpush1.bf16.msra.mxu0 0
    %410 = vmatprep.subr.bf16.mxu0 0
    %411 = vmatpush1.bf16.msra.mxu0 0
    %412 = vmatprep.subr.bf16.mxu0 0
    %413 = vmatpush1.bf16.msra.mxu0 0
    %414 = vmatprep.mubr.bf16.mxu0 0
    %415 = vmatmul.mubr.bf16.gmra.mrb[0].mxu0 %v214
    %v416 = vpop.f32.mrb[0].mxu0
    %v417 = vadd.f32 %v181, %v416
    %v418 = vpop.f32.mrb[0].mxu0
    %v419 = vadd.f32 %v185, %v418
    %v420 = vpop.f32.mrb[0].mxu0
    %v421 = vadd.f32 %v181, %v420
    %v422 = vpop.f32.mrb[0].mxu0
    %v423 = vadd.f32 %v185, %v422
    %424 = vmatprep.mubr.bf16.mxu0 0
    %425 = vmatmul.mubr.bf16.gmra.mrb[0].mxu0 %v215
    %v426 = vpop.f32.mrb[0].mxu0
    %v427 = vadd.f32 %v181, %v426
    %v428 = vpop.f32.mrb[0].mxu0
    %v429 = vadd.f32 %v185, %v428
    %v430 = vpop.f32.mrb[0].mxu0
    %v431 = vadd.f32 %v181, %v430
    %v432 = vpop.f32.mrb[0].mxu0
    %v433 = vadd.f32 %v185, %v432
    %434 = vmatprep.mubr.bf16.mxu0 0
    %435 = vmatmul.mubr.bf16.gmra.mrb[0].mxu0 %v216
    %v436 = vpop.f32.mrb[0].mxu0
    %v437 = vadd.f32 %v181, %v436
    %v438 = vpop.f32.mrb[0].mxu0
    %v439 = vadd.f32 %v185, %v438
    %v440 = vpop.f32.mrb[0].mxu0
    %v441 = vadd.f32 %v181, %v440
    %v442 = vpop.f32.mrb[0].mxu0
    %v443 = vadd.f32 %v185, %v442
    %444 = vmatprep.mubr.bf16.mxu0 0
    %445 = vmatmul.mubr.bf16.gmra.mrb[0].mxu0 %v217
    %v446 = vpop.f32.mrb[0].mxu0
    %v447 = vadd.f32 %v181, %v446
    %v448 = vpop.f32.mrb[0].mxu0
    %v449 = vadd.f32 %v185, %v448
    %v450 = vpop.f32.mrb[0].mxu0
    %v451 = vadd.f32 %v181, %v450
    %v452 = vpop.f32.mrb[0].mxu0
    %v453 = vadd.f32 %v185, %v452
    %454 = vdwg.mxu0
    %455 = vmatprep.subr.bf16.mxu0 %v321
    %456 = vmatpush1.bf16.msra.mxu0 %v320
    %457 = vmatprep.subr.bf16.mxu0 %v325
    %458 = vmatpush1.bf16.msra.mxu0 %v324
    %459 = vmatprep.subr.bf16.mxu0 %v329
    %460 = vmatpush1.bf16.msra.mxu0 %v328
    %461 = vmatprep.subr.bf16.mxu0 %v333
    %462 = vmatpush1.bf16.msra.mxu0 %v332
    %463 = vmatprep.subr.bf16.mxu0 %v337
    %464 = vmatpush1.bf16.msra.mxu0 %v336
    %465 = vmatprep.subr.bf16.mxu0 %v341
    %466 = vmatpush1.bf16.msra.mxu0 %v340
    %467 = vmatprep.subr.bf16.mxu0 %v345
    %468 = vmatpush1.bf16.msra.mxu0 %v344
    %469 = vmatprep.subr.bf16.mxu0 %v349
    %470 = vmatpush1.bf16.msra.mxu0 %v348
    %471 = vmatprep.subr.bf16.mxu0 0
    %472 = vmatpush1.bf16.msra.mxu0 0
    %473 = vmatprep.subr.bf16.mxu0 0
    %474 = vmatpush1.bf16.msra.mxu0 0
    %475 = vmatprep.subr.bf16.mxu0 0
    %476 = vmatpush1.bf16.msra.mxu0 0
    %477 = vmatprep.subr.bf16.mxu0 0
    %478 = vmatpush1.bf16.msra.mxu0 0
    %479 = vmatprep.subr.bf16.mxu0 0
    %480 = vmatpush1.bf16.msra.mxu0 0
    %481 = vmatprep.subr.bf16.mxu0 0
    %482 = vmatpush1.bf16.msra.mxu0 0
    %483 = vmatprep.subr.bf16.mxu0 0
    %484 = vmatpush1.bf16.msra.mxu0 0
    %485 = vmatprep.subr.bf16.mxu0 0
    %486 = vmatpush1.bf16.msra.mxu0 0
    %487 = vmatprep.mubr.bf16.mxu0 0
    %488 = vmatmul.mubr.bf16.gmra.mrb[0].mxu0 %v214
    %v489 = vpop.f32.mrb[0].mxu0
    %v490 = vadd.f32 %v189, %v489
    %v491 = vpop.f32.mrb[0].mxu0
    %v492 = vadd.f32 %v193, %v491
    %v493 = vpop.f32.mrb[0].mxu0
    %v494 = vadd.f32 %v189, %v493
    %v495 = vpop.f32.mrb[0].mxu0
    %v496 = vadd.f32 %v193, %v495
    %497 = vmatprep.mubr.bf16.mxu0 0
    %498 = vmatmul.mubr.bf16.gmra.mrb[0].mxu0 %v215
    %v499 = vpop.f32.mrb[0].mxu0
    %v500 = vadd.f32 %v189, %v499
    %v501 = vpop.f32.mrb[0].mxu0
    %v502 = vadd.f32 %v193, %v501
    %v503 = vpop.f32.mrb[0].mxu0
    %v504 = vadd.f32 %v189, %v503
    %v505 = vpop.f32.mrb[0].mxu0
    %v506 = vadd.f32 %v193, %v505
    %507 = vmatprep.mubr.bf16.mxu0 0
    %508 = vmatmul.mubr.bf16.gmra.mrb[0].mxu0 %v216
    %v509 = vpop.f32.mrb[0].mxu0
    %v510 = vadd.f32 %v189, %v509
    %v511 = vpop.f32.mrb[0].mxu0
    %v512 = vadd.f32 %v193, %v511
    %v513 = vpop.f32.mrb[0].mxu0
    %v514 = vadd.f32 %v189, %v513
    %v515 = vpop.f32.mrb[0].mxu0
    %v516 = vadd.f32 %v193, %v515
    %517 = vmatprep.mubr.bf16.mxu0 0
    %518 = vmatmul.mubr.bf16.gmra.mrb[0].mxu0 %v217
    %v519 = vpop.f32.mrb[0].mxu0
    %v520 = vadd.f32 %v189, %v519
    %v521 = vpop.f32.mrb[0].mxu0
    %v522 = vadd.f32 %v193, %v521
    %v523 = vpop.f32.mrb[0].mxu0
    %v524 = vadd.f32 %v189, %v523
    %v525 = vpop.f32.mrb[0].mxu0
    %v526 = vadd.f32 %v193, %v525
    %527 = vdwg.mxu0
    %528 = vst [vmem:[#allocation3] sm:$0xff] %v417
    %529 = vst [vmem:[#allocation3 + $0x8] sm:$0xff] %v419
    %530 = vst [vmem:[#allocation3 + $0x10] sm:$0xff] %v490
    %531 = vst [vmem:[#allocation3 + $0x18] sm:$0xff] %v492
    %532 = vst [vmem:[#allocation3 + $0x20] sm:$0xff] %v421
    %533 = vst [vmem:[#allocation3 + $0x28] sm:$0xff] %v423
    %534 = vst [vmem:[#allocation3 + $0x30] sm:$0xff] %v494
    %535 = vst [vmem:[#allocation3 + $0x38] sm:$0xff] %v496
    %536 = vst [vmem:[#allocation3 + $0x40] sm:$0xff] %v427
    %537 = vst [vmem:[#allocation3 + $0x48] sm:$0xff] %v429
    %538 = vst [vmem:[#allocation3 + $0x50] sm:$0xff] %v500
    %539 = vst [vmem:[#allocation3 + $0x58] sm:$0xff] %v502
    %540 = vst [vmem:[#allocation3 + $0x60] sm:$0xff] %v431
    %541 = vst [vmem:[#allocation3 + $0x68] sm:$0xff] %v433
    %542 = vst [vmem:[#allocation3 + $0x70] sm:$0xff] %v504
    %543 = vst [vmem:[#allocation3 + $0x78] sm:$0xff] %v506
    %544 = vst [vmem:[#allocation3 + $0x80] sm:$0xff] %v437
    %545 = vst [vmem:[#allocation3 + $0x88] sm:$0xff] %v439
    %546 = vst [vmem:[#allocation3 + $0x90] sm:$0xff] %v510
    %547 = vst [vmem:[#allocation3 + $0x98] sm:$0xff] %v512
    %548 = vst [vmem:[#allocation3 + $0xa0] sm:$0xff] %v441
    %549 = vst [vmem:[#allocation3 + $0xa8] sm:$0xff] %v443
    %550 = vst [vmem:[#allocation3 + $0xb0] sm:$0xff] %v514
    %551 = vst [vmem:[#allocation3 + $0xb8] sm:$0xff] %v516
    %552 = vst [vmem:[#allocation3 + $0xc0] sm:$0xff] %v447
    %553 = vst [vmem:[#allocation3 + $0xc8] sm:$0xff] %v449
    %554 = vst [vmem:[#allocation3 + $0xd0] sm:$0xff] %v520
    %555 = vst [vmem:[#allocation3 + $0xd8] sm:$0xff] %v522
    %556 = vst [vmem:[#allocation3 + $0xe0] sm:$0xff] %v451
    %557 = vst [vmem:[#allocation3 + $0xe8] sm:$0xff] %v453
    %558 = vst [vmem:[#allocation3 + $0xf0] sm:$0xff] %v524
    %559 = vst [vmem:[#allocation3 + $0xf8] sm:$0xff] %v526
    %v560 = vld [vmem:[#allocation9] sm:$0xff]
    %v561 = vld [vmem:[#allocation9 + $0x8] sm:$0xff]
    %v562 = vld [vmem:[#allocation9 + $0x10] sm:$0xff]
    %v563 = vld [vmem:[#allocation9 + $0x18] sm:$0xff]
    %v564 = vld [vmem:[#allocation9 + $0x20] sm:$0xff]
    %v565 = vld [vmem:[#allocation9 + $0x28] sm:$0xff]
    %v566 = vld [vmem:[#allocation9 + $0x30] sm:$0xff]
    %v567 = vld [vmem:[#allocation9 + $0x38] sm:$0xff]
    %v568 = vld [vmem:[#allocation9 + $0x40] sm:$0xff]
    %v569 = vld [vmem:[#allocation9 + $0x48] sm:$0xff]
    %v570 = vld [vmem:[#allocation9 + $0x50] sm:$0xff]
    %v571 = vld [vmem:[#allocation9 + $0x58] sm:$0xff]
    %v572 = vld [vmem:[#allocation9 + $0x60] sm:$0xff]
    %v573 = vld [vmem:[#allocation9 + $0x68] sm:$0xff]
    %v574 = vld [vmem:[#allocation9 + $0x70] sm:$0xff]
    %v575 = vld [vmem:[#allocation9 + $0x78] sm:$0xff]
    %v576 = vld [vmem:[#allocation9 + $0x80] sm:$0xff]
    %v577 = vld [vmem:[#allocation9 + $0x88] sm:$0xff]
    %v578 = vld [vmem:[#allocation9 + $0x90] sm:$0xff]
    %v579 = vld [vmem:[#allocation9 + $0x98] sm:$0xff]
    %v580 = vld [vmem:[#allocation9 + $0xa0] sm:$0xff]
    %v581 = vld [vmem:[#allocation9 + $0xa8] sm:$0xff]
    %v582 = vld [vmem:[#allocation9 + $0xb0] sm:$0xff]
    %v583 = vld [vmem:[#allocation9 + $0xb8] sm:$0xff]
    %v584 = vld [vmem:[#allocation9 + $0xc0] sm:$0xff]
    %v585 = vld [vmem:[#allocation9 + $0xc8] sm:$0xff]
    %v586 = vld [vmem:[#allocation9 + $0xd0] sm:$0xff]
    %v587 = vld [vmem:[#allocation9 + $0xd8] sm:$0xff]
    %v588 = vld [vmem:[#allocation9 + $0xe0] sm:$0xff]
    %v589 = vld [vmem:[#allocation9 + $0xe8] sm:$0xff]
    %v590 = vld [vmem:[#allocation9 + $0xf0] sm:$0xff]
    %v591 = vld [vmem:[#allocation9 + $0xf8] sm:$0xff]
    %s592 = smul.u32 0, 4
    %s593 = smul.addr %s592, 8
    %s594 = scalar_lea.vmem [#allocation3], %s593
    %v595 = vld [vmem:[%s594] sm:$0xff]
    %v596 = vld [vmem:[%s594 + $0x8] sm:$0xff]
    %v597 = vld [vmem:[%s594 + $0x10] sm:$0xff]
    %v598 = vld [vmem:[%s594 + $0x18] sm:$0xff]
    %v631 = vunpack.c.l.b16 %v560
    %v632 = vunpack.c.h.b16 %v560
    %v633 = vunpack.c.l.b16 %v561
    %v634 = vunpack.c.h.b16 %v561
    %v635 = vunpack.c.l.b16 %v562
    %v636 = vunpack.c.h.b16 %v562
    %v637 = vunpack.c.l.b16 %v563
    %v638 = vunpack.c.h.b16 %v563
    %v639 = vunpack.c.l.b16 %v564
    %v640 = vunpack.c.h.b16 %v564
    %v641 = vunpack.c.l.b16 %v565
    %v642 = vunpack.c.h.b16 %v565
    %v643 = vunpack.c.l.b16 %v566
    %v644 = vunpack.c.h.b16 %v566
    %v645 = vunpack.c.l.b16 %v567
    %v646 = vunpack.c.h.b16 %v567
    %v647 = vunpack.c.l.b16 %v568
    %v648 = vunpack.c.h.b16 %v568
    %v649 = vunpack.c.l.b16 %v569
    %v650 = vunpack.c.h.b16 %v569
    %v651 = vunpack.c.l.b16 %v570
    %v652 = vunpack.c.h.b16 %v570
    %v653 = vunpack.c.l.b16 %v571
    %v654 = vunpack.c.h.b16 %v571
    %v655 = vunpack.c.l.b16 %v572
    %v656 = vunpack.c.h.b16 %v572
    %v657 = vunpack.c.l.b16 %v573
    %v658 = vunpack.c.h.b16 %v573
    %v659 = vunpack.c.l.b16 %v574
    %v660 = vunpack.c.h.b16 %v574
    %v661 = vunpack.c.l.b16 %v575
    %v662 = vunpack.c.h.b16 %v575
    %v663 = vunpack.c.l.b16 %v576
    %v664 = vunpack.c.h.b16 %v576
    %v665 = vunpack.c.l.b16 %v577
    %v666 = vunpack.c.h.b16 %v577
    %v667 = vunpack.c.l.b16 %v578
    %v668 = vunpack.c.h.b16 %v578
    %v669 = vunpack.c.l.b16 %v579
    %v670 = vunpack.c.h.b16 %v579
    %v671 = vunpack.c.l.b16 %v580
    %v672 = vunpack.c.h.b16 %v580
    %v673 = vunpack.c.l.b16 %v581
    %v674 = vunpack.c.h.b16 %v581
    %v675 = vunpack.c.l.b16 %v582
    %v676 = vunpack.c.h.b16 %v582
    %v677 = vunpack.c.l.b16 %v583
    %v678 = vunpack.c.h.b16 %v583
    %v679 = vunpack.c.l.b16 %v584
    %v680 = vunpack.c.h.b16 %v584
    %v681 = vunpack.c.l.b16 %v585
    %v682 = vunpack.c.h.b16 %v585
    %v683 = vunpack.c.l.b16 %v586
    %v684 = vunpack.c.h.b16 %v586
    %v685 = vunpack.c.l.b16 %v587
    %v686 = vunpack.c.h.b16 %v587
    %v687 = vunpack.c.l.b16 %v588
    %v688 = vunpack.c.h.b16 %v588
    %v689 = vunpack.c.l.b16 %v589
    %v690 = vunpack.c.h.b16 %v589
    %v691 = vunpack.c.l.b16 %v590
    %v692 = vunpack.c.h.b16 %v590
    %v693 = vunpack.c.l.b16 %v591
    %v694 = vunpack.c.h.b16 %v591
    %v695 = vpack.c.b16 %v635, %v631
    %v696 = vpack.c.b16 %v636, %v632
    %v697 = vpack.c.b16 %v637, %v633
    %v698 = vpack.c.b16 %v638, %v634
    %v699 = vpack.c.b16 %v643, %v639
    %v700 = vpack.c.b16 %v644, %v640
    %v701 = vpack.c.b16 %v645, %v641
    %v702 = vpack.c.b16 %v646, %v642
    %v703 = vpack.c.b16 %v651, %v647
    %v704 = vpack.c.b16 %v652, %v648
    %v705 = vpack.c.b16 %v653, %v649
    %v706 = vpack.c.b16 %v654, %v650
    %v707 = vpack.c.b16 %v659, %v655
    %v708 = vpack.c.b16 %v660, %v656
    %v709 = vpack.c.b16 %v661, %v657
    %v710 = vpack.c.b16 %v662, %v658
    %v711 = vpack.c.b16 %v667, %v663
    %v712 = vpack.c.b16 %v668, %v664
    %v713 = vpack.c.b16 %v669, %v665
    %v714 = vpack.c.b16 %v670, %v666
    %v715 = vpack.c.b16 %v675, %v671
    %v716 = vpack.c.b16 %v676, %v672
    %v717 = vpack.c.b16 %v677, %v673
    %v718 = vpack.c.b16 %v678, %v674
    %v719 = vpack.c.b16 %v683, %v679
    %v720 = vpack.c.b16 %v684, %v680
    %v721 = vpack.c.b16 %v685, %v681
    %v722 = vpack.c.b16 %v686, %v682
    %v723 = vpack.c.b16 %v691, %v687
    %v724 = vpack.c.b16 %v692, %v688
    %v725 = vpack.c.b16 %v693, %v689
    %v726 = vpack.c.b16 %v694, %v690
    %759 = vmatprep.subr.bf16.mxu0 %v696
    %760 = vmatpush1.bf16.msra.mxu0 %v695
    %761 = vmatprep.subr.bf16.mxu0 %v700
    %762 = vmatpush1.bf16.msra.mxu0 %v699
    %763 = vmatprep.subr.bf16.mxu0 %v704
    %764 = vmatpush1.bf16.msra.mxu0 %v703
    %765 = vmatprep.subr.bf16.mxu0 %v708
    %766 = vmatpush1.bf16.msra.mxu0 %v707
    %767 = vmatprep.subr.bf16.mxu0 %v712
    %768 = vmatpush1.bf16.msra.mxu0 %v711
    %769 = vmatprep.subr.bf16.mxu0 %v716
    %770 = vmatpush1.bf16.msra.mxu0 %v715
    %771 = vmatprep.subr.bf16.mxu0 %v720
    %772 = vmatpush1.bf16.msra.mxu0 %v719
    %773 = vmatprep.subr.bf16.mxu0 %v724
    %774 = vmatpush1.bf16.msra.mxu0 %v723
    %775 = vmatprep.subr.bf16.mxu0 0
    %776 = vmatpush1.bf16.msra.mxu0 0
    %777 = vmatprep.subr.bf16.mxu0 0
    %778 = vmatpush1.bf16.msra.mxu0 0
    %779 = vmatprep.subr.bf16.mxu0 0
    %780 = vmatpush1.bf16.msra.mxu0 0
    %781 = vmatprep.subr.bf16.mxu0 0
    %782 = vmatpush1.bf16.msra.mxu0 0
    %783 = vmatprep.subr.bf16.mxu0 0
    %784 = vmatpush1.bf16.msra.mxu0 0
    %785 = vmatprep.subr.bf16.mxu0 0
    %786 = vmatpush1.bf16.msra.mxu0 0
    %787 = vmatprep.subr.bf16.mxu0 0
    %788 = vmatpush1.bf16.msra.mxu0 0
    %789 = vmatprep.subr.bf16.mxu0 0
    %790 = vmatpush1.bf16.msra.mxu0 0
    %791 = vmatprep.mubr.bf16.mxu0 0
    %792 = vmatmul.mubr.bf16.gmra.mrb[0].mxu0 0
    %v793 = vpop.f32.mrb[0].mxu0
    %v794 = vadd.f32 0.0, %v793
    %v795 = vpop.f32.mrb[0].mxu0
    %v796 = vadd.f32 0.0, %v795
    %v797 = vpop.f32.mrb[0].mxu0
    %v798 = vpop.f32.mrb[0].mxu0
    %799 = vdwg.mxu0
    %800 = vmatprep.subr.bf16.mxu0 %v698
    %801 = vmatpush1.bf16.msra.mxu0 %v697
    %802 = vmatprep.subr.bf16.mxu0 %v702
    %803 = vmatpush1.bf16.msra.mxu0 %v701
    %804 = vmatprep.subr.bf16.mxu0 %v706
    %805 = vmatpush1.bf16.msra.mxu0 %v705
    %806 = vmatprep.subr.bf16.mxu0 %v710
    %807 = vmatpush1.bf16.msra.mxu0 %v709
    %808 = vmatprep.subr.bf16.mxu0 %v714
    %809 = vmatpush1.bf16.msra.mxu0 %v713
    %810 = vmatprep.subr.bf16.mxu0 %v718
    %811 = vmatpush1.bf16.msra.mxu0 %v717
    %812 = vmatprep.subr.bf16.mxu0 %v722
    %813 = vmatpush1.bf16.msra.mxu0 %v721
    %814 = vmatprep.subr.bf16.mxu0 %v726
    %815 = vmatpush1.bf16.msra.mxu0 %v725
    %816 = vmatprep.subr.bf16.mxu0 0
    %817 = vmatpush1.bf16.msra.mxu0 0
    %818 = vmatprep.subr.bf16.mxu0 0
    %819 = vmatpush1.bf16.msra.mxu0 0
    %820 = vmatprep.subr.bf16.mxu0 0
    %821 = vmatpush1.bf16.msra.mxu0 0
    %822 = vmatprep.subr.bf16.mxu0 0
    %823 = vmatpush1.bf16.msra.mxu0 0
    %824 = vmatprep.subr.bf16.mxu0 0
    %825 = vmatpush1.bf16.msra.mxu0 0
    %826 = vmatprep.subr.bf16.mxu0 0
    %827 = vmatpush1.bf16.msra.mxu0 0
    %828 = vmatprep.subr.bf16.mxu0 0
    %829 = vmatpush1.bf16.msra.mxu0 0
    %830 = vmatprep.subr.bf16.mxu0 0
    %831 = vmatpush1.bf16.msra.mxu0 0
    %832 = vmatprep.mubr.bf16.mxu0 0
    %833 = vmatmul.mubr.bf16.gmra.mrb[0].mxu0 0
    %v834 = vpop.f32.mrb[0].mxu0
    %v835 = vadd.f32 0.0, %v834
    %v836 = vpop.f32.mrb[0].mxu0
    %v837 = vadd.f32 0.0, %v836
    %v838 = vpop.f32.mrb[0].mxu0
    %v839 = vpop.f32.mrb[0].mxu0
    %840 = vdwg.mxu0
    %v841 = vadd.f32 %v595, %v794
    %v842 = vadd.f32 %v596, %v796
    %v843 = vadd.f32 %v597, %v835
    %v844 = vadd.f32 %v598, %v837
    %v845 = vxor.u32 %v841, 2147483648
    %v846 = vmul.f32 %v845, 1.442695
    %v847 = vpow.pop %v846
    %v848 = vadd.f32 %v847, 1.0
    %v849 = vrcp.pop %v848
    %v850 = vmul.f32 1.0, %v849
    %v851 = vxor.u32 %v842, 2147483648
    %v852 = vmul.f32 %v851, 1.442695
    %v853 = vpow.pop %v852
    %v854 = vadd.f32 %v853, 1.0
    %v855 = vrcp.pop %v854
    %v856 = vmul.f32 1.0, %v855
    %v857 = vtanh.pop %v843
    %v858 = vxor.u32 %v844, 2147483648
    %v859 = vmul.f32 %v858, 1.442695
    %v860 = vpow.pop %v859
    %v861 = vadd.f32 %v860, 1.0
    %v862 = vrcp.pop %v861
    %v863 = vmul.f32 1.0, %v862
    %v864 = vmul.f32 %v856, 0.0
    %v865 = vmul.f32 %v850, %v857
    %v866 = vadd.f32 %v864, %v865
    %v867 = vtanh.pop %v866
    %v868 = vmul.f32 %v863, %v867
    %869 = vst [vmem:[#allocation2] sm:$0xff] %v868
    %s870 = smul.u32 1, 4
    %s871 = smul.addr %s870, 8
    %s872 = scalar_lea.vmem [#allocation3], %s871
    %v873 = vld [vmem:[%s872] sm:$0xff]
    %v874 = vld [vmem:[%s872 + $0x8] sm:$0xff]
    %v875 = vld [vmem:[%s872 + $0x10] sm:$0xff]
    %v876 = vld [vmem:[%s872 + $0x18] sm:$0xff]
    %v877 = vpack.c.bf16 %v868, %v868
    %878 = vmatprep.subr.bf16.mxu0 %v696
    %879 = vmatpush1.bf16.msra.mxu0 %v695
    %880 = vmatprep.subr.bf16.mxu0 %v700
    %881 = vmatpush1.bf16.msra.mxu0 %v699
    %882 = vmatprep.subr.bf16.mxu0 %v704
    %883 = vmatpush1.bf16.msra.mxu0 %v703
    %884 = vmatprep.subr.bf16.mxu0 %v708
    %885 = vmatpush1.bf16.msra.mxu0 %v707
    %886 = vmatprep.subr.bf16.mxu0 %v712
    %887 = vmatpush1.bf16.msra.mxu0 %v711
    %888 = vmatprep.subr.bf16.mxu0 %v716
    %889 = vmatpush1.bf16.msra.mxu0 %v715
    %890 = vmatprep.subr.bf16.mxu0 %v720
    %891 = vmatpush1.bf16.msra.mxu0 %v719
    %892 = vmatprep.subr.bf16.mxu0 %v724
    %893 = vmatpush1.bf16.msra.mxu0 %v723
    %894 = vmatprep.subr.bf16.mxu0 0
    %895 = vmatpush1.bf16.msra.mxu0 0
    %896 = vmatprep.subr.bf16.mxu0 0
    %897 = vmatpush1.bf16.msra.mxu0 0
    %898 = vmatprep.subr.bf16.mxu0 0
    %899 = vmatpush1.bf16.msra.mxu0 0
    %900 = vmatprep.subr.bf16.mxu0 0
    %901 = vmatpush1.bf16.msra.mxu0 0
    %902 = vmatprep.subr.bf16.mxu0 0
    %903 = vmatpush1.bf16.msra.mxu0 0
    %904 = vmatprep.subr.bf16.mxu0 0
    %905 = vmatpush1.bf16.msra.mxu0 0
    %906 = vmatprep.subr.bf16.mxu0 0
    %907 = vmatpush1.bf16.msra.mxu0 0
    %908 = vmatprep.subr.bf16.mxu0 0
    %909 = vmatpush1.bf16.msra.mxu0 0
    %910 = vmatprep.mubr.bf16.mxu0 0
    %911 = vmatmul.mubr.bf16.gmra.mrb[0].mxu0 %v877
    %v912 = vpop.f32.mrb[0].mxu0
    %v913 = vadd.f32 0.0, %v912
    %v914 = vpop.f32.mrb[0].mxu0
    %v915 = vadd.f32 0.0, %v914
    %v916 = vpop.f32.mrb[0].mxu0
    %v917 = vpop.f32.mrb[0].mxu0
    %918 = vdwg.mxu0
    %919 = vmatprep.subr.bf16.mxu0 %v698
    %920 = vmatpush1.bf16.msra.mxu0 %v697
    %921 = vmatprep.subr.bf16.mxu0 %v702
    %922 = vmatpush1.bf16.msra.mxu0 %v701
    %923 = vmatprep.subr.bf16.mxu0 %v706
    %924 = vmatpush1.bf16.msra.mxu0 %v705
    %925 = vmatprep.subr.bf16.mxu0 %v710
    %926 = vmatpush1.bf16.msra.mxu0 %v709
    %927 = vmatprep.subr.bf16.mxu0 %v714
    %928 = vmatpush1.bf16.msra.mxu0 %v713
    %929 = vmatprep.subr.bf16.mxu0 %v718
    %930 = vmatpush1.bf16.msra.mxu0 %v717
    %931 = vmatprep.subr.bf16.mxu0 %v722
    %932 = vmatpush1.bf16.msra.mxu0 %v721
    %933 = vmatprep.subr.bf16.mxu0 %v726
    %934 = vmatpush1.bf16.msra.mxu0 %v725
    %935 = vmatprep.subr.bf16.mxu0 0
    %936 = vmatpush1.bf16.msra.mxu0 0
    %937 = vmatprep.subr.bf16.mxu0 0
    %938 = vmatpush1.bf16.msra.mxu0 0
    %939 = vmatprep.subr.bf16.mxu0 0
    %940 = vmatpush1.bf16.msra.mxu0 0
    %941 = vmatprep.subr.bf16.mxu0 0
    %942 = vmatpush1.bf16.msra.mxu0 0
    %943 = vmatprep.subr.bf16.mxu0 0
    %944 = vmatpush1.bf16.msra.mxu0 0
    %945 = vmatprep.subr.bf16.mxu0 0
    %946 = vmatpush1.bf16.msra.mxu0 0
    %947 = vmatprep.subr.bf16.mxu0 0
    %948 = vmatpush1.bf16.msra.mxu0 0
    %949 = vmatprep.subr.bf16.mxu0 0
    %950 = vmatpush1.bf16.msra.mxu0 0
    %951 = vmatprep.mubr.bf16.mxu0 0
    %952 = vmatmul.mubr.bf16.gmra.mrb[0].mxu0 %v877
    %v953 = vpop.f32.mrb[0].mxu0
    %v954 = vadd.f32 0.0, %v953
    %v955 = vpop.f32.mrb[0].mxu0
    %v956 = vadd.f32 0.0, %v955
    %v957 = vpop.f32.mrb[0].mxu0
    %v958 = vpop.f32.mrb[0].mxu0
    %959 = vdwg.mxu0
    %v960 = vadd.f32 %v873, %v913
    %v961 = vadd.f32 %v874, %v915
    %v962 = vadd.f32 %v875, %v954
    %v963 = vadd.f32 %v876, %v956
    %v964 = vxor.u32 %v960, 2147483648
    %v965 = vmul.f32 %v964, 1.442695
    %v966 = vpow.pop %v965
    %v967 = vadd.f32 %v966, 1.0
    %v968 = vrcp.pop %v967
    %v969 = vmul.f32 1.0, %v968
    %v970 = vxor.u32 %v961, 2147483648
    %v971 = vmul.f32 %v970, 1.442695
    %v972 = vpow.pop %v971
    %v973 = vadd.f32 %v972, 1.0
    %v974 = vrcp.pop %v973
    %v975 = vmul.f32 1.0, %v974
    %v976 = vtanh.pop %v962
    %v977 = vxor.u32 %v963, 2147483648
    %v978 = vmul.f32 %v977, 1.442695
    %v979 = vpow.pop %v978
    %v980 = vadd.f32 %v979, 1.0
    %v981 = vrcp.pop %v980
    %v982 = vmul.f32 1.0, %v981
    %v983 = vmul.f32 %v975, %v866
    %v984 = vmul.f32 %v969, %v976
    %v985 = vadd.f32 %v983, %v984
    %v986 = vtanh.pop %v985
    %v987 = vmul.f32 %v982, %v986
    %s988 = scalar_lea.vmem [#allocation2], 8
    %989 = vst [vmem:[%s988] sm:$0xff] %v987
    %s990 = smul.u32 2, 4
    %s991 = smul.addr %s990, 8
    %s992 = scalar_lea.vmem [#allocation3], %s991
    %v993 = vld [vmem:[%s992] sm:$0xff]
    %v994 = vld [vmem:[%s992 + $0x8] sm:$0xff]
    %v995 = vld [vmem:[%s992 + $0x10] sm:$0xff]
    %v996 = vld [vmem:[%s992 + $0x18] sm:$0xff]
    %v997 = vpack.c.bf16 %v987, %v987
    %998 = vmatprep.subr.bf16.mxu0 %v696
    %999 = vmatpush1.bf16.msra.mxu0 %v695
    %1000 = vmatprep.subr.bf16.mxu0 %v700
    %1001 = vmatpush1.bf16.msra.mxu0 %v699
    %1002 = vmatprep.subr.bf16.mxu0 %v704
    %1003 = vmatpush1.bf16.msra.mxu0 %v703
    %1004 = vmatprep.subr.bf16.mxu0 %v708
    %1005 = vmatpush1.bf16.msra.mxu0 %v707
    %1006 = vmatprep.subr.bf16.mxu0 %v712
    %1007 = vmatpush1.bf16.msra.mxu0 %v711
    %1008 = vmatprep.subr.bf16.mxu0 %v716
    %1009 = vmatpush1.bf16.msra.mxu0 %v715
    %1010 = vmatprep.subr.bf16.mxu0 %v720
    %1011 = vmatpush1.bf16.msra.mxu0 %v719
    %1012 = vmatprep.subr.bf16.mxu0 %v724
    %1013 = vmatpush1.bf16.msra.mxu0 %v723
    %1014 = vmatprep.subr.bf16.mxu0 0
    %1015 = vmatpush1.bf16.msra.mxu0 0
    %1016 = vmatprep.subr.bf16.mxu0 0
    %1017 = vmatpush1.bf16.msra.mxu0 0
    %1018 = vmatprep.subr.bf16.mxu0 0
    %1019 = vmatpush1.bf16.msra.mxu0 0
    %1020 = vmatprep.subr.bf16.mxu0 0
    %1021 = vmatpush1.bf16.msra.mxu0 0
    %1022 = vmatprep.subr.bf16.mxu0 0
    %1023 = vmatpush1.bf16.msra.mxu0 0
    %1024 = vmatprep.subr.bf16.mxu0 0
    %1025 = vmatpush1.bf16.msra.mxu0 0
    %1026 = vmatprep.subr.bf16.mxu0 0
    %1027 = vmatpush1.bf16.msra.mxu0 0
    %1028 = vmatprep.subr.bf16.mxu0 0
    %1029 = vmatpush1.bf16.msra.mxu0 0
    %1030 = vmatprep.mubr.bf16.mxu0 0
    %1031 = vmatmul.mubr.bf16.gmra.mrb[0].mxu0 %v997
    %v1032 = vpop.f32.mrb[0].mxu0
    %v1033 = vadd.f32 0.0, %v1032
    %v1034 = vpop.f32.mrb[0].mxu0
    %v1035 = vadd.f32 0.0, %v1034
    %v1036 = vpop.f32.mrb[0].mxu0
    %v1037 = vpop.f32.mrb[0].mxu0
    %1038 = vdwg.mxu0
    %1039 = vmatprep.subr.bf16.mxu0 %v698
    %1040 = vmatpush1.bf16.msra.mxu0 %v697
    %1041 = vmatprep.subr.bf16.mxu0 %v702
    %1042 = vmatpush1.bf16.msra.mxu0 %v701
    %1043 = vmatprep.subr.bf16.mxu0 %v706
    %1044 = vmatpush1.bf16.msra.mxu0 %v705
    %1045 = vmatprep.subr.bf16.mxu0 %v710
    %1046 = vmatpush1.bf16.msra.mxu0 %v709
    %1047 = vmatprep.subr.bf16.mxu0 %v714
    %1048 = vmatpush1.bf16.msra.mxu0 %v713
    %1049 = vmatprep.subr.bf16.mxu0 %v718
    %1050 = vmatpush1.bf16.msra.mxu0 %v717
    %1051 = vmatprep.subr.bf16.mxu0 %v722
    %1052 = vmatpush1.bf16.msra.mxu0 %v721
    %1053 = vmatprep.subr.bf16.mxu0 %v726
    %1054 = vmatpush1.bf16.msra.mxu0 %v725
    %1055 = vmatprep.subr.bf16.mxu0 0
    %1056 = vmatpush1.bf16.msra.mxu0 0
    %1057 = vmatprep.subr.bf16.mxu0 0
    %1058 = vmatpush1.bf16.msra.mxu0 0
    %1059 = vmatprep.subr.bf16.mxu0 0
    %1060 = vmatpush1.bf16.msra.mxu0 0
    %1061 = vmatprep.subr.bf16.mxu0 0
    %1062 = vmatpush1.bf16.msra.mxu0 0
    %1063 = vmatprep.subr.bf16.mxu0 0
    %1064 = vmatpush1.bf16.msra.mxu0 0
    %1065 = vmatprep.subr.bf16.mxu0 0
    %1066 = vmatpush1.bf16.msra.mxu0 0
    %1067 = vmatprep.subr.bf16.mxu0 0
    %1068 = vmatpush1.bf16.msra.mxu0 0
    %1069 = vmatprep.subr.bf16.mxu0 0
    %1070 = vmatpush1.bf16.msra.mxu0 0
    %1071 = vmatprep.mubr.bf16.mxu0 0
    %1072 = vmatmul.mubr.bf16.gmra.mrb[0].mxu0 %v997
    %v1073 = vpop.f32.mrb[0].mxu0
    %v1074 = vadd.f32 0.0, %v1073
    %v1075 = vpop.f32.mrb[0].mxu0
    %v1076 = vadd.f32 0.0, %v1075
    %v1077 = vpop.f32.mrb[0].mxu0
    %v1078 = vpop.f32.mrb[0].mxu0
    %1079 = vdwg.mxu0
    %v1080 = vadd.f32 %v993, %v1033
    %v1081 = vadd.f32 %v994, %v1035
    %v1082 = vadd.f32 %v995, %v1074
    %v1083 = vadd.f32 %v996, %v1076
    %v1084 = vxor.u32 %v1080, 2147483648
    %v1085 = vmul.f32 %v1084, 1.442695
    %v1086 = vpow.pop %v1085
    %v1087 = vadd.f32 %v1086, 1.0
    %v1088 = vrcp.pop %v1087
    %v1089 = vmul.f32 1.0, %v1088
    %v1090 = vxor.u32 %v1081, 2147483648
    %v1091 = vmul.f32 %v1090, 1.442695
    %v1092 = vpow.pop %v1091
    %v1093 = vadd.f32 %v1092, 1.0
    %v1094 = vrcp.pop %v1093
    %v1095 = vmul.f32 1.0, %v1094
    %v1096 = vtanh.pop %v1082
    %v1097 = vxor.u32 %v1083, 2147483648
    %v1098 = vmul.f32 %v1097, 1.442695
    %v1099 = vpow.pop %v1098
    %v1100 = vadd.f32 %v1099, 1.0
    %v1101 = vrcp.pop %v1100
    %v1102 = vmul.f32 1.0, %v1101
    %v1103 = vmul.f32 %v1095, %v985
    %v1104 = vmul.f32 %v1089, %v1096
    %v1105 = vadd.f32 %v1103, %v1104
    %v1106 = vtanh.pop %v1105
    %v1107 = vmul.f32 %v1102, %v1106
    %s1108 = scalar_lea.vmem [#allocation2], 16
    %1109 = vst [vmem:[%s1108] sm:$0xff] %v1107
    %s1110 = smul.u32 3, 4
    %s1111 = smul.addr %s1110, 8
    %s1112 = scalar_lea.vmem [#allocation3], %s1111
    %v1113 = vld [vmem:[%s1112] sm:$0xff]
    %v1114 = vld [vmem:[%s1112 + $0x8] sm:$0xff]
    %v1115 = vld [vmem:[%s1112 + $0x10] sm:$0xff]
    %v1116 = vld [vmem:[%s1112 + $0x18] sm:$0xff]
    %v1117 = vpack.c.bf16 %v1107, %v1107
    %1118 = vmatprep.subr.bf16.mxu0 %v696
    %1119 = vmatpush1.bf16.msra.mxu0 %v695
    %1120 = vmatprep.subr.bf16.mxu0 %v700
    %1121 = vmatpush1.bf16.msra.mxu0 %v699
    %1122 = vmatprep.subr.bf16.mxu0 %v704
    %1123 = vmatpush1.bf16.msra.mxu0 %v703
    %1124 = vmatprep.subr.bf16.mxu0 %v708
    %1125 = vmatpush1.bf16.msra.mxu0 %v707
    %1126 = vmatprep.subr.bf16.mxu0 %v712
    %1127 = vmatpush1.bf16.msra.mxu0 %v711
    %1128 = vmatprep.subr.bf16.mxu0 %v716
    %1129 = vmatpush1.bf16.msra.mxu0 %v715
    %1130 = vmatprep.subr.bf16.mxu0 %v720
    %1131 = vmatpush1.bf16.msra.mxu0 %v719
    %1132 = vmatprep.subr.bf16.mxu0 %v724
    %1133 = vmatpush1.bf16.msra.mxu0 %v723
    %1134 = vmatprep.subr.bf16.mxu0 0
    %1135 = vmatpush1.bf16.msra.mxu0 0
    %1136 = vmatprep.subr.bf16.mxu0 0
    %1137 = vmatpush1.bf16.msra.mxu0 0
    %1138 = vmatprep.subr.bf16.mxu0 0
    %1139 = vmatpush1.bf16.msra.mxu0 0
    %1140 = vmatprep.subr.bf16.mxu0 0
    %1141 = vmatpush1.bf16.msra.mxu0 0
    %1142 = vmatprep.subr.bf16.mxu0 0
    %1143 = vmatpush1.bf16.msra.mxu0 0
    %1144 = vmatprep.subr.bf16.mxu0 0
    %1145 = vmatpush1.bf16.msra.mxu0 0
    %1146 = vmatprep.subr.bf16.mxu0 0
    %1147 = vmatpush1.bf16.msra.mxu0 0
    %1148 = vmatprep.subr.bf16.mxu0 0
    %1149 = vmatpush1.bf16.msra.mxu0 0
    %1150 = vmatprep.mubr.bf16.mxu0 0
    %1151 = vmatmul.mubr.bf16.gmra.mrb[0].mxu0 %v1117
    %v1152 = vpop.f32.mrb[0].mxu0
    %v1153 = vadd.f32 0.0, %v1152
    %v1154 = vpop.f32.mrb[0].mxu0
    %v1155 = vadd.f32 0.0, %v1154
    %v1156 = vpop.f32.mrb[0].mxu0
    %v1157 = vpop.f32.mrb[0].mxu0
    %1158 = vdwg.mxu0
    %1159 = vmatprep.subr.bf16.mxu0 %v698
    %1160 = vmatpush1.bf16.msra.mxu0 %v697
    %1161 = vmatprep.subr.bf16.mxu0 %v702
    %1162 = vmatpush1.bf16.msra.mxu0 %v701
    %1163 = vmatprep.subr.bf16.mxu0 %v706
    %1164 = vmatpush1.bf16.msra.mxu0 %v705
    %1165 = vmatprep.subr.bf16.mxu0 %v710
    %1166 = vmatpush1.bf16.msra.mxu0 %v709
    %1167 = vmatprep.subr.bf16.mxu0 %v714
    %1168 = vmatpush1.bf16.msra.mxu0 %v713
    %1169 = vmatprep.subr.bf16.mxu0 %v718
    %1170 = vmatpush1.bf16.msra.mxu0 %v717
    %1171 = vmatprep.subr.bf16.mxu0 %v722
    %1172 = vmatpush1.bf16.msra.mxu0 %v721
    %1173 = vmatprep.subr.bf16.mxu0 %v726
    %1174 = vmatpush1.bf16.msra.mxu0 %v725
    %1175 = vmatprep.subr.bf16.mxu0 0
    %1176 = vmatpush1.bf16.msra.mxu0 0
    %1177 = vmatprep.subr.bf16.mxu0 0
    %1178 = vmatpush1.bf16.msra.mxu0 0
    %1179 = vmatprep.subr.bf16.mxu0 0
    %1180 = vmatpush1.bf16.msra.mxu0 0
    %1181 = vmatprep.subr.bf16.mxu0 0
    %1182 = vmatpush1.bf16.msra.mxu0 0
    %1183 = vmatprep.subr.bf16.mxu0 0
    %1184 = vmatpush1.bf16.msra.mxu0 0
    %1185 = vmatprep.subr.bf16.mxu0 0
    %1186 = vmatpush1.bf16.msra.mxu0 0
    %1187 = vmatprep.subr.bf16.mxu0 0
    %1188 = vmatpush1.bf16.msra.mxu0 0
    %1189 = vmatprep.subr.bf16.mxu0 0
    %1190 = vmatpush1.bf16.msra.mxu0 0
    %1191 = vmatprep.mubr.bf16.mxu0 0
    %1192 = vmatmul.mubr.bf16.gmra.mrb[0].mxu0 %v1117
    %v1193 = vpop.f32.mrb[0].mxu0
    %v1194 = vadd.f32 0.0, %v1193
    %v1195 = vpop.f32.mrb[0].mxu0
    %v1196 = vadd.f32 0.0, %v1195
    %v1197 = vpop.f32.mrb[0].mxu0
    %v1198 = vpop.f32.mrb[0].mxu0
    %1199 = vdwg.mxu0
    %v1200 = vadd.f32 %v1113, %v1153
    %v1201 = vadd.f32 %v1114, %v1155
    %v1202 = vadd.f32 %v1115, %v1194
    %v1203 = vadd.f32 %v1116, %v1196
    %v1204 = vxor.u32 %v1200, 2147483648
    %v1205 = vmul.f32 %v1204, 1.442695
    %v1206 = vpow.pop %v1205
    %v1207 = vadd.f32 %v1206, 1.0
    %v1208 = vrcp.pop %v1207
    %v1209 = vmul.f32 1.0, %v1208
    %v1210 = vxor.u32 %v1201, 2147483648
    %v1211 = vmul.f32 %v1210, 1.442695
    %v1212 = vpow.pop %v1211
    %v1213 = vadd.f32 %v1212, 1.0
    %v1214 = vrcp.pop %v1213
    %v1215 = vmul.f32 1.0, %v1214
    %v1216 = vtanh.pop %v1202
    %v1217 = vxor.u32 %v1203, 2147483648
    %v1218 = vmul.f32 %v1217, 1.442695
    %v1219 = vpow.pop %v1218
    %v1220 = vadd.f32 %v1219, 1.0
    %v1221 = vrcp.pop %v1220
    %v1222 = vmul.f32 1.0, %v1221
    %v1223 = vmul.f32 %v1215, %v1105
    %v1224 = vmul.f32 %v1209, %v1216
    %v1225 = vadd.f32 %v1223, %v1224
    %v1226 = vtanh.pop %v1225
    %v1227 = vmul.f32 %v1222, %v1226
    %s1228 = scalar_lea.vmem [#allocation2], 24
    %1229 = vst [vmem:[%s1228] sm:$0xff] %v1227
    %s1230 = smul.u32 4, 4
    %s1231 = smul.addr %s1230, 8
    %s1232 = scalar_lea.vmem [#allocation3], %s1231
    %v1233 = vld [vmem:[%s1232] sm:$0xff]
    %v1234 = vld [vmem:[%s1232 + $0x8] sm:$0xff]
    %v1235 = vld [vmem:[%s1232 + $0x10] sm:$0xff]
    %v1236 = vld [vmem:[%s1232 + $0x18] sm:$0xff]
    %v1237 = vpack.c.bf16 %v1227, %v1227
    %1238 = vmatprep.subr.bf16.mxu0 %v696
    %1239 = vmatpush1.bf16.msra.mxu0 %v695
    %1240 = vmatprep.subr.bf16.mxu0 %v700
    %1241 = vmatpush1.bf16.msra.mxu0 %v699
    %1242 = vmatprep.subr.bf16.mxu0 %v704
    %1243 = vmatpush1.bf16.msra.mxu0 %v703
    %1244 = vmatprep.subr.bf16.mxu0 %v708
    %1245 = vmatpush1.bf16.msra.mxu0 %v707
    %1246 = vmatprep.subr.bf16.mxu0 %v712
    %1247 = vmatpush1.bf16.msra.mxu0 %v711
    %1248 = vmatprep.subr.bf16.mxu0 %v716
    %1249 = vmatpush1.bf16.msra.mxu0 %v715
    %1250 = vmatprep.subr.bf16.mxu0 %v720
    %1251 = vmatpush1.bf16.msra.mxu0 %v719
    %1252 = vmatprep.subr.bf16.mxu0 %v724
    %1253 = vmatpush1.bf16.msra.mxu0 %v723
    %1254 = vmatprep.subr.bf16.mxu0 0
    %1255 = vmatpush1.bf16.msra.mxu0 0
    %1256 = vmatprep.subr.bf16.mxu0 0
    %1257 = vmatpush1.bf16.msra.mxu0 0
    %1258 = vmatprep.subr.bf16.mxu0 0
    %1259 = vmatpush1.bf16.msra.mxu0 0
    %1260 = vmatprep.subr.bf16.mxu0 0
    %1261 = vmatpush1.bf16.msra.mxu0 0
    %1262 = vmatprep.subr.bf16.mxu0 0
    %1263 = vmatpush1.bf16.msra.mxu0 0
    %1264 = vmatprep.subr.bf16.mxu0 0
    %1265 = vmatpush1.bf16.msra.mxu0 0
    %1266 = vmatprep.subr.bf16.mxu0 0
    %1267 = vmatpush1.bf16.msra.mxu0 0
    %1268 = vmatprep.subr.bf16.mxu0 0
    %1269 = vmatpush1.bf16.msra.mxu0 0
    %1270 = vmatprep.mubr.bf16.mxu0 0
    %1271 = vmatmul.mubr.bf16.gmra.mrb[0].mxu0 %v1237
    %v1272 = vpop.f32.mrb[0].mxu0
    %v1273 = vadd.f32 0.0, %v1272
    %v1274 = vpop.f32.mrb[0].mxu0
    %v1275 = vadd.f32 0.0, %v1274
    %v1276 = vpop.f32.mrb[0].mxu0
    %v1277 = vpop.f32.mrb[0].mxu0
    %1278 = vdwg.mxu0
    %1279 = vmatprep.subr.bf16.mxu0 %v698
    %1280 = vmatpush1.bf16.msra.mxu0 %v697
    %1281 = vmatprep.subr.bf16.mxu0 %v702
    %1282 = vmatpush1.bf16.msra.mxu0 %v701
    %1283 = vmatprep.subr.bf16.mxu0 %v706
    %1284 = vmatpush1.bf16.msra.mxu0 %v705
    %1285 = vmatprep.subr.bf16.mxu0 %v710
    %1286 = vmatpush1.bf16.msra.mxu0 %v709
    %1287 = vmatprep.subr.bf16.mxu0 %v714
    %1288 = vmatpush1.bf16.msra.mxu0 %v713
    %1289 = vmatprep.subr.bf16.mxu0 %v718
    %1290 = vmatpush1.bf16.msra.mxu0 %v717
    %1291 = vmatprep.subr.bf16.mxu0 %v722
    %1292 = vmatpush1.bf16.msra.mxu0 %v721
    %1293 = vmatprep.subr.bf16.mxu0 %v726
    %1294 = vmatpush1.bf16.msra.mxu0 %v725
    %1295 = vmatprep.subr.bf16.mxu0 0
    %1296 = vmatpush1.bf16.msra.mxu0 0
    %1297 = vmatprep.subr.bf16.mxu0 0
    %1298 = vmatpush1.bf16.msra.mxu0 0
    %1299 = vmatprep.subr.bf16.mxu0 0
    %1300 = vmatpush1.bf16.msra.mxu0 0
    %1301 = vmatprep.subr.bf16.mxu0 0
    %1302 = vmatpush1.bf16.msra.mxu0 0
    %1303 = vmatprep.subr.bf16.mxu0 0
    %1304 = vmatpush1.bf16.msra.mxu0 0
    %1305 = vmatprep.subr.bf16.mxu0 0
    %1306 = vmatpush1.bf16.msra.mxu0 0
    %1307 = vmatprep.subr.bf16.mxu0 0
    %1308 = vmatpush1.bf16.msra.mxu0 0
    %1309 = vmatprep.subr.bf16.mxu0 0
    %1310 = vmatpush1.bf16.msra.mxu0 0
    %1311 = vmatprep.mubr.bf16.mxu0 0
    %1312 = vmatmul.mubr.bf16.gmra.mrb[0].mxu0 %v1237
    %v1313 = vpop.f32.mrb[0].mxu0
    %v1314 = vadd.f32 0.0, %v1313
    %v1315 = vpop.f32.mrb[0].mxu0
    %v1316 = vadd.f32 0.0, %v1315
    %v1317 = vpop.f32.mrb[0].mxu0
    %v1318 = vpop.f32.mrb[0].mxu0
    %1319 = vdwg.mxu0
    %v1320 = vadd.f32 %v1233, %v1273
    %v1321 = vadd.f32 %v1234, %v1275
    %v1322 = vadd.f32 %v1235, %v1314
    %v1323 = vadd.f32 %v1236, %v1316
    %v1324 = vxor.u32 %v1320, 2147483648
    %v1325 = vmul.f32 %v1324, 1.442695
    %v1326 = vpow.pop %v1325
    %v1327 = vadd.f32 %v1326, 1.0
    %v1328 = vrcp.pop %v1327
    %v1329 = vmul.f32 1.0, %v1328
    %v1330 = vxor.u32 %v1321, 2147483648
    %v1331 = vmul.f32 %v1330, 1.442695
    %v1332 = vpow.pop %v1331
    %v1333 = vadd.f32 %v1332, 1.0
    %v1334 = vrcp.pop %v1333
    %v1335 = vmul.f32 1.0, %v1334
    %v1336 = vtanh.pop %v1322
    %v1337 = vxor.u32 %v1323, 2147483648
    %v1338 = vmul.f32 %v1337, 1.442695
    %v1339 = vpow.pop %v1338
    %v1340 = vadd.f32 %v1339, 1.0
    %v1341 = vrcp.pop %v1340
    %v1342 = vmul.f32 1.0, %v1341
    %v1343 = vmul.f32 %v1335, %v1225
    %v1344 = vmul.f32 %v1329, %v1336
    %v1345 = vadd.f32 %v1343, %v1344
    %v1346 = vtanh.pop %v1345
    %v1347 = vmul.f32 %v1342, %v1346
    %s1348 = scalar_lea.vmem [#allocation2], 32
    %1349 = vst [vmem:[%s1348] sm:$0xff] %v1347
    %s1350 = smul.u32 5, 4
    %s1351 = smul.addr %s1350, 8
    %s1352 = scalar_lea.vmem [#allocation3], %s1351
    %v1353 = vld [vmem:[%s1352] sm:$0xff]
    %v1354 = vld [vmem:[%s1352 + $0x8] sm:$0xff]
    %v1355 = vld [vmem:[%s1352 + $0x10] sm:$0xff]
    %v1356 = vld [vmem:[%s1352 + $0x18] sm:$0xff]
    %v1357 = vpack.c.bf16 %v1347, %v1347
    %1358 = vmatprep.subr.bf16.mxu0 %v696
    %1359 = vmatpush1.bf16.msra.mxu0 %v695
    %1360 = vmatprep.subr.bf16.mxu0 %v700
    %1361 = vmatpush1.bf16.msra.mxu0 %v699
    %1362 = vmatprep.subr.bf16.mxu0 %v704
    %1363 = vmatpush1.bf16.msra.mxu0 %v703
    %1364 = vmatprep.subr.bf16.mxu0 %v708
    %1365 = vmatpush1.bf16.msra.mxu0 %v707
    %1366 = vmatprep.subr.bf16.mxu0 %v712
    %1367 = vmatpush1.bf16.msra.mxu0 %v711
    %1368 = vmatprep.subr.bf16.mxu0 %v716
    %1369 = vmatpush1.bf16.msra.mxu0 %v715
    %1370 = vmatprep.subr.bf16.mxu0 %v720
    %1371 = vmatpush1.bf16.msra.mxu0 %v719
    %1372 = vmatprep.subr.bf16.mxu0 %v724
    %1373 = vmatpush1.bf16.msra.mxu0 %v723
    %1374 = vmatprep.subr.bf16.mxu0 0
    %1375 = vmatpush1.bf16.msra.mxu0 0
    %1376 = vmatprep.subr.bf16.mxu0 0
    %1377 = vmatpush1.bf16.msra.mxu0 0
    %1378 = vmatprep.subr.bf16.mxu0 0
    %1379 = vmatpush1.bf16.msra.mxu0 0
    %1380 = vmatprep.subr.bf16.mxu0 0
    %1381 = vmatpush1.bf16.msra.mxu0 0
    %1382 = vmatprep.subr.bf16.mxu0 0
    %1383 = vmatpush1.bf16.msra.mxu0 0
    %1384 = vmatprep.subr.bf16.mxu0 0
    %1385 = vmatpush1.bf16.msra.mxu0 0
    %1386 = vmatprep.subr.bf16.mxu0 0
    %1387 = vmatpush1.bf16.msra.mxu0 0
    %1388 = vmatprep.subr.bf16.mxu0 0
    %1389 = vmatpush1.bf16.msra.mxu0 0
    %1390 = vmatprep.mubr.bf16.mxu0 0
    %1391 = vmatmul.mubr.bf16.gmra.mrb[0].mxu0 %v1357
    %v1392 = vpop.f32.mrb[0].mxu0
    %v1393 = vadd.f32 0.0, %v1392
    %v1394 = vpop.f32.mrb[0].mxu0
    %v1395 = vadd.f32 0.0, %v1394
    %v1396 = vpop.f32.mrb[0].mxu0
    %v1397 = vpop.f32.mrb[0].mxu0
    %1398 = vdwg.mxu0
    %1399 = vmatprep.subr.bf16.mxu0 %v698
    %1400 = vmatpush1.bf16.msra.mxu0 %v697
    %1401 = vmatprep.subr.bf16.mxu0 %v702
    %1402 = vmatpush1.bf16.msra.mxu0 %v701
    %1403 = vmatprep.subr.bf16.mxu0 %v706
    %1404 = vmatpush1.bf16.msra.mxu0 %v705
    %1405 = vmatprep.subr.bf16.mxu0 %v710
    %1406 = vmatpush1.bf16.msra.mxu0 %v709
    %1407 = vmatprep.subr.bf16.mxu0 %v714
    %1408 = vmatpush1.bf16.msra.mxu0 %v713
    %1409 = vmatprep.subr.bf16.mxu0 %v718
    %1410 = vmatpush1.bf16.msra.mxu0 %v717
    %1411 = vmatprep.subr.bf16.mxu0 %v722
    %1412 = vmatpush1.bf16.msra.mxu0 %v721
    %1413 = vmatprep.subr.bf16.mxu0 %v726
    %1414 = vmatpush1.bf16.msra.mxu0 %v725
    %1415 = vmatprep.subr.bf16.mxu0 0
    %1416 = vmatpush1.bf16.msra.mxu0 0
    %1417 = vmatprep.subr.bf16.mxu0 0
    %1418 = vmatpush1.bf16.msra.mxu0 0
    %1419 = vmatprep.subr.bf16.mxu0 0
    %1420 = vmatpush1.bf16.msra.mxu0 0
    %1421 = vmatprep.subr.bf16.mxu0 0
    %1422 = vmatpush1.bf16.msra.mxu0 0
    %1423 = vmatprep.subr.bf16.mxu0 0
    %1424 = vmatpush1.bf16.msra.mxu0 0
    %1425 = vmatprep.subr.bf16.mxu0 0
    %1426 = vmatpush1.bf16.msra.mxu0 0
    %1427 = vmatprep.subr.bf16.mxu0 0
    %1428 = vmatpush1.bf16.msra.mxu0 0
    %1429 = vmatprep.subr.bf16.mxu0 0
    %1430 = vmatpush1.bf16.msra.mxu0 0
    %1431 = vmatprep.mubr.bf16.mxu0 0
    %1432 = vmatmul.mubr.bf16.gmra.mrb[0].mxu0 %v1357
    %v1433 = vpop.f32.mrb[0].mxu0
    %v1434 = vadd.f32 0.0, %v1433
    %v1435 = vpop.f32.mrb[0].mxu0
    %v1436 = vadd.f32 0.0, %v1435
    %v1437 = vpop.f32.mrb[0].mxu0
    %v1438 = vpop.f32.mrb[0].mxu0
    %1439 = vdwg.mxu0
    %v1440 = vadd.f32 %v1353, %v1393
    %v1441 = vadd.f32 %v1354, %v1395
    %v1442 = vadd.f32 %v1355, %v1434
    %v1443 = vadd.f32 %v1356, %v1436
    %v1444 = vxor.u32 %v1440, 2147483648
    %v1445 = vmul.f32 %v1444, 1.442695
    %v1446 = vpow.pop %v1445
    %v1447 = vadd.f32 %v1446, 1.0
    %v1448 = vrcp.pop %v1447
    %v1449 = vmul.f32 1.0, %v1448
    %v1450 = vxor.u32 %v1441, 2147483648
    %v1451 = vmul.f32 %v1450, 1.442695
    %v1452 = vpow.pop %v1451
    %v1453 = vadd.f32 %v1452, 1.0
    %v1454 = vrcp.pop %v1453
    %v1455 = vmul.f32 1.0, %v1454
    %v1456 = vtanh.pop %v1442
    %v1457 = vxor.u32 %v1443, 2147483648
    %v1458 = vmul.f32 %v1457, 1.442695
    %v1459 = vpow.pop %v1458
    %v1460 = vadd.f32 %v1459, 1.0
    %v1461 = vrcp.pop %v1460
    %v1462 = vmul.f32 1.0, %v1461
    %v1463 = vmul.f32 %v1455, %v1345
    %v1464 = vmul.f32 %v1449, %v1456
    %v1465 = vadd.f32 %v1463, %v1464
    %v1466 = vtanh.pop %v1465
    %v1467 = vmul.f32 %v1462, %v1466
    %s1468 = scalar_lea.vmem [#allocation2], 40
    %1469 = vst [vmem:[%s1468] sm:$0xff] %v1467
    %s1470 = smul.u32 6, 4
    %s1471 = smul.addr %s1470, 8
    %s1472 = scalar_lea.vmem [#allocation3], %s1471
    %v1473 = vld [vmem:[%s1472] sm:$0xff]
    %v1474 = vld [vmem:[%s1472 + $0x8] sm:$0xff]
    %v1475 = vld [vmem:[%s1472 + $0x10] sm:$0xff]
    %v1476 = vld [vmem:[%s1472 + $0x18] sm:$0xff]
    %v1477 = vpack.c.bf16 %v1467, %v1467
    %1478 = vmatprep.subr.bf16.mxu0 %v696
    %1479 = vmatpush1.bf16.msra.mxu0 %v695
    %1480 = vmatprep.subr.bf16.mxu0 %v700
    %1481 = vmatpush1.bf16.msra.mxu0 %v699
    %1482 = vmatprep.subr.bf16.mxu0 %v704
    %1483 = vmatpush1.bf16.msra.mxu0 %v703
    %1484 = vmatprep.subr.bf16.mxu0 %v708
    %1485 = vmatpush1.bf16.msra.mxu0 %v707
    %1486 = vmatprep.subr.bf16.mxu0 %v712
    %1487 = vmatpush1.bf16.msra.mxu0 %v711
    %1488 = vmatprep.subr.bf16.mxu0 %v716
    %1489 = vmatpush1.bf16.msra.mxu0 %v715
    %1490 = vmatprep.subr.bf16.mxu0 %v720
    %1491 = vmatpush1.bf16.msra.mxu0 %v719
    %1492 = vmatprep.subr.bf16.mxu0 %v724
    %1493 = vmatpush1.bf16.msra.mxu0 %v723
    %1494 = vmatprep.subr.bf16.mxu0 0
    %1495 = vmatpush1.bf16.msra.mxu0 0
    %1496 = vmatprep.subr.bf16.mxu0 0
    %1497 = vmatpush1.bf16.msra.mxu0 0
    %1498 = vmatprep.subr.bf16.mxu0 0
    %1499 = vmatpush1.bf16.msra.mxu0 0
    %1500 = vmatprep.subr.bf16.mxu0 0
    %1501 = vmatpush1.bf16.msra.mxu0 0
    %1502 = vmatprep.subr.bf16.mxu0 0
    %1503 = vmatpush1.bf16.msra.mxu0 0
    %1504 = vmatprep.subr.bf16.mxu0 0
    %1505 = vmatpush1.bf16.msra.mxu0 0
    %1506 = vmatprep.subr.bf16.mxu0 0
    %1507 = vmatpush1.bf16.msra.mxu0 0
    %1508 = vmatprep.subr.bf16.mxu0 0
    %1509 = vmatpush1.bf16.msra.mxu0 0
    %1510 = vmatprep.mubr.bf16.mxu0 0
    %1511 = vmatmul.mubr.bf16.gmra.mrb[0].mxu0 %v1477
    %v1512 = vpop.f32.mrb[0].mxu0
    %v1513 = vadd.f32 0.0, %v1512
    %v1514 = vpop.f32.mrb[0].mxu0
    %v1515 = vadd.f32 0.0, %v1514
    %v1516 = vpop.f32.mrb[0].mxu0
    %v1517 = vpop.f32.mrb[0].mxu0
    %1518 = vdwg.mxu0
    %1519 = vmatprep.subr.bf16.mxu0 %v698
    %1520 = vmatpush1.bf16.msra.mxu0 %v697
    %1521 = vmatprep.subr.bf16.mxu0 %v702
    %1522 = vmatpush1.bf16.msra.mxu0 %v701
    %1523 = vmatprep.subr.bf16.mxu0 %v706
    %1524 = vmatpush1.bf16.msra.mxu0 %v705
    %1525 = vmatprep.subr.bf16.mxu0 %v710
    %1526 = vmatpush1.bf16.msra.mxu0 %v709
    %1527 = vmatprep.subr.bf16.mxu0 %v714
    %1528 = vmatpush1.bf16.msra.mxu0 %v713
    %1529 = vmatprep.subr.bf16.mxu0 %v718
    %1530 = vmatpush1.bf16.msra.mxu0 %v717
    %1531 = vmatprep.subr.bf16.mxu0 %v722
    %1532 = vmatpush1.bf16.msra.mxu0 %v721
    %1533 = vmatprep.subr.bf16.mxu0 %v726
    %1534 = vmatpush1.bf16.msra.mxu0 %v725
    %1535 = vmatprep.subr.bf16.mxu0 0
    %1536 = vmatpush1.bf16.msra.mxu0 0
    %1537 = vmatprep.subr.bf16.mxu0 0
    %1538 = vmatpush1.bf16.msra.mxu0 0
    %1539 = vmatprep.subr.bf16.mxu0 0
    %1540 = vmatpush1.bf16.msra.mxu0 0
    %1541 = vmatprep.subr.bf16.mxu0 0
    %1542 = vmatpush1.bf16.msra.mxu0 0
    %1543 = vmatprep.subr.bf16.mxu0 0
    %1544 = vmatpush1.bf16.msra.mxu0 0
    %1545 = vmatprep.subr.bf16.mxu0 0
    %1546 = vmatpush1.bf16.msra.mxu0 0
    %1547 = vmatprep.subr.bf16.mxu0 0
    %1548 = vmatpush1.bf16.msra.mxu0 0
    %1549 = vmatprep.subr.bf16.mxu0 0
    %1550 = vmatpush1.bf16.msra.mxu0 0
    %1551 = vmatprep.mubr.bf16.mxu0 0
    %1552 = vmatmul.mubr.bf16.gmra.mrb[0].mxu0 %v1477
    %v1553 = vpop.f32.mrb[0].mxu0
    %v1554 = vadd.f32 0.0, %v1553
    %v1555 = vpop.f32.mrb[0].mxu0
    %v1556 = vadd.f32 0.0, %v1555
    %v1557 = vpop.f32.mrb[0].mxu0
    %v1558 = vpop.f32.mrb[0].mxu0
    %1559 = vdwg.mxu0
    %v1560 = vadd.f32 %v1473, %v1513
    %v1561 = vadd.f32 %v1474, %v1515
    %v1562 = vadd.f32 %v1475, %v1554
    %v1563 = vadd.f32 %v1476, %v1556
    %v1564 = vxor.u32 %v1560, 2147483648
    %v1565 = vmul.f32 %v1564, 1.442695
    %v1566 = vpow.pop %v1565
    %v1567 = vadd.f32 %v1566, 1.0
    %v1568 = vrcp.pop %v1567
    %v1569 = vmul.f32 1.0, %v1568
    %v1570 = vxor.u32 %v1561, 2147483648
    %v1571 = vmul.f32 %v1570, 1.442695
    %v1572 = vpow.pop %v1571
    %v1573 = vadd.f32 %v1572, 1.0
    %v1574 = vrcp.pop %v1573
    %v1575 = vmul.f32 1.0, %v1574
    %v1576 = vtanh.pop %v1562
    %v1577 = vxor.u32 %v1563, 2147483648
    %v1578 = vmul.f32 %v1577, 1.442695
    %v1579 = vpow.pop %v1578
    %v1580 = vadd.f32 %v1579, 1.0
    %v1581 = vrcp.pop %v1580
    %v1582 = vmul.f32 1.0, %v1581
    %v1583 = vmul.f32 %v1575, %v1465
    %v1584 = vmul.f32 %v1569, %v1576
    %v1585 = vadd.f32 %v1583, %v1584
    %v1586 = vtanh.pop %v1585
    %v1587 = vmul.f32 %v1582, %v1586
    %s1588 = scalar_lea.vmem [#allocation2], 48
    %1589 = vst [vmem:[%s1588] sm:$0xff] %v1587
    %s1590 = smul.u32 7, 4
    %s1591 = smul.addr %s1590, 8
    %s1592 = scalar_lea.vmem [#allocation3], %s1591
    %v1593 = vld [vmem:[%s1592] sm:$0xff]
    %v1594 = vld [vmem:[%s1592 + $0x8] sm:$0xff]
    %v1595 = vld [vmem:[%s1592 + $0x10] sm:$0xff]
    %v1596 = vld [vmem:[%s1592 + $0x18] sm:$0xff]
    %v1597 = vpack.c.bf16 %v1587, %v1587
    %1598 = vmatprep.subr.bf16.mxu0 %v696
    %1599 = vmatpush1.bf16.msra.mxu0 %v695
    %1600 = vmatprep.subr.bf16.mxu0 %v700
    %1601 = vmatpush1.bf16.msra.mxu0 %v699
    %1602 = vmatprep.subr.bf16.mxu0 %v704
    %1603 = vmatpush1.bf16.msra.mxu0 %v703
    %1604 = vmatprep.subr.bf16.mxu0 %v708
    %1605 = vmatpush1.bf16.msra.mxu0 %v707
    %1606 = vmatprep.subr.bf16.mxu0 %v712
    %1607 = vmatpush1.bf16.msra.mxu0 %v711
    %1608 = vmatprep.subr.bf16.mxu0 %v716
    %1609 = vmatpush1.bf16.msra.mxu0 %v715
    %1610 = vmatprep.subr.bf16.mxu0 %v720
    %1611 = vmatpush1.bf16.msra.mxu0 %v719
    %1612 = vmatprep.subr.bf16.mxu0 %v724
    %1613 = vmatpush1.bf16.msra.mxu0 %v723
    %1614 = vmatprep.subr.bf16.mxu0 0
    %1615 = vmatpush1.bf16.msra.mxu0 0
    %1616 = vmatprep.subr.bf16.mxu0 0
    %1617 = vmatpush1.bf16.msra.mxu0 0
    %1618 = vmatprep.subr.bf16.mxu0 0
    %1619 = vmatpush1.bf16.msra.mxu0 0
    %1620 = vmatprep.subr.bf16.mxu0 0
    %1621 = vmatpush1.bf16.msra.mxu0 0
    %1622 = vmatprep.subr.bf16.mxu0 0
    %1623 = vmatpush1.bf16.msra.mxu0 0
    %1624 = vmatprep.subr.bf16.mxu0 0
    %1625 = vmatpush1.bf16.msra.mxu0 0
    %1626 = vmatprep.subr.bf16.mxu0 0
    %1627 = vmatpush1.bf16.msra.mxu0 0
    %1628 = vmatprep.subr.bf16.mxu0 0
    %1629 = vmatpush1.bf16.msra.mxu0 0
    %1630 = vmatprep.mubr.bf16.mxu0 0
    %1631 = vmatmul.mubr.bf16.gmra.mrb[0].mxu0 %v1597
    %v1632 = vpop.f32.mrb[0].mxu0
    %v1633 = vadd.f32 0.0, %v1632
    %v1634 = vpop.f32.mrb[0].mxu0
    %v1635 = vadd.f32 0.0, %v1634
    %v1636 = vpop.f32.mrb[0].mxu0
    %v1637 = vpop.f32.mrb[0].mxu0
    %1638 = vdwg.mxu0
    %1639 = vmatprep.subr.bf16.mxu0 %v698
    %1640 = vmatpush1.bf16.msra.mxu0 %v697
    %1641 = vmatprep.subr.bf16.mxu0 %v702
    %1642 = vmatpush1.bf16.msra.mxu0 %v701
    %1643 = vmatprep.subr.bf16.mxu0 %v706
    %1644 = vmatpush1.bf16.msra.mxu0 %v705
    %1645 = vmatprep.subr.bf16.mxu0 %v710
    %1646 = vmatpush1.bf16.msra.mxu0 %v709
    %1647 = vmatprep.subr.bf16.mxu0 %v714
    %1648 = vmatpush1.bf16.msra.mxu0 %v713
    %1649 = vmatprep.subr.bf16.mxu0 %v718
    %1650 = vmatpush1.bf16.msra.mxu0 %v717
    %1651 = vmatprep.subr.bf16.mxu0 %v722
    %1652 = vmatpush1.bf16.msra.mxu0 %v721
    %1653 = vmatprep.subr.bf16.mxu0 %v726
    %1654 = vmatpush1.bf16.msra.mxu0 %v725
    %1655 = vmatprep.subr.bf16.mxu0 0
    %1656 = vmatpush1.bf16.msra.mxu0 0
    %1657 = vmatprep.subr.bf16.mxu0 0
    %1658 = vmatpush1.bf16.msra.mxu0 0
    %1659 = vmatprep.subr.bf16.mxu0 0
    %1660 = vmatpush1.bf16.msra.mxu0 0
    %1661 = vmatprep.subr.bf16.mxu0 0
    %1662 = vmatpush1.bf16.msra.mxu0 0
    %1663 = vmatprep.subr.bf16.mxu0 0
    %1664 = vmatpush1.bf16.msra.mxu0 0
    %1665 = vmatprep.subr.bf16.mxu0 0
    %1666 = vmatpush1.bf16.msra.mxu0 0
    %1667 = vmatprep.subr.bf16.mxu0 0
    %1668 = vmatpush1.bf16.msra.mxu0 0
    %1669 = vmatprep.subr.bf16.mxu0 0
    %1670 = vmatpush1.bf16.msra.mxu0 0
    %1671 = vmatprep.mubr.bf16.mxu0 0
    %1672 = vmatmul.mubr.bf16.gmra.mrb[0].mxu0 %v1597
    %v1673 = vpop.f32.mrb[0].mxu0
    %v1674 = vadd.f32 0.0, %v1673
    %v1675 = vpop.f32.mrb[0].mxu0
    %v1676 = vadd.f32 0.0, %v1675
    %v1677 = vpop.f32.mrb[0].mxu0
    %v1678 = vpop.f32.mrb[0].mxu0
    %1679 = vdwg.mxu0
    %v1680 = vadd.f32 %v1593, %v1633
    %v1681 = vadd.f32 %v1594, %v1635
    %v1682 = vadd.f32 %v1595, %v1674
    %v1683 = vadd.f32 %v1596, %v1676
    %v1684 = vxor.u32 %v1680, 2147483648
    %v1685 = vmul.f32 %v1684, 1.442695
    %v1686 = vpow.pop %v1685
    %v1687 = vadd.f32 %v1686, 1.0
    %v1688 = vrcp.pop %v1687
    %v1689 = vmul.f32 1.0, %v1688
    %v1690 = vxor.u32 %v1681, 2147483648
    %v1691 = vmul.f32 %v1690, 1.442695
    %v1692 = vpow.pop %v1691
    %v1693 = vadd.f32 %v1692, 1.0
    %v1694 = vrcp.pop %v1693
    %v1695 = vmul.f32 1.0, %v1694
    %v1696 = vtanh.pop %v1682
    %v1697 = vxor.u32 %v1683, 2147483648
    %v1698 = vmul.f32 %v1697, 1.442695
    %v1699 = vpow.pop %v1698
    %v1700 = vadd.f32 %v1699, 1.0
    %v1701 = vrcp.pop %v1700
    %v1702 = vmul.f32 1.0, %v1701
    %v1703 = vmul.f32 %v1695, %v1585
    %v1704 = vmul.f32 %v1689, %v1696
    %v1705 = vadd.f32 %v1703, %v1704
    %v1706 = vtanh.pop %v1705
    %v1707 = vmul.f32 %v1702, %v1706
    %s1708 = scalar_lea.vmem [#allocation2], 56
    %1709 = vst [vmem:[%s1708] sm:$0xff] %v1707
    %v1710 = vld [vmem:[#allocation2] sm:$0xff]
    %v1711 = vld [vmem:[#allocation2 + $0x8] sm:$0xff]
    %v1712 = vld [vmem:[#allocation2 + $0x10] sm:$0xff]
    %v1713 = vld [vmem:[#allocation2 + $0x18] sm:$0xff]
    %v1714 = vld [vmem:[#allocation2 + $0x20] sm:$0xff]
    %v1715 = vld [vmem:[#allocation2 + $0x28] sm:$0xff]
    %v1716 = vld [vmem:[#allocation2 + $0x30] sm:$0xff]
    %v1717 = vld [vmem:[#allocation2 + $0x38] sm:$0xff]
    %v1718 = vpack.c.bf16 %v1711, %v1710
    %v1719 = vpack.c.bf16 %v1713, %v1712
    %v1720 = vpack.c.bf16 %v1715, %v1714
    %v1721 = vpack.c.bf16 %v1717, %v1716
    %v1722 = vld [vmem:[#allocation10] sm:$0xff]
    %v1723 = vld [vmem:[#allocation10 + $0x8] sm:$0xff]
    %v1724 = vld [vmem:[#allocation10 + $0x10] sm:$0xff]
    %v1725 = vld [vmem:[#allocation10 + $0x18] sm:$0xff]
    %v1726 = vld [vmem:[#allocation10 + $0x20] sm:$0xff]
    %v1727 = vld [vmem:[#allocation10 + $0x28] sm:$0xff]
    %v1728 = vld [vmem:[#allocation10 + $0x30] sm:$0xff]
    %v1729 = vld [vmem:[#allocation10 + $0x38] sm:$0xff]
    %v1730 = vld [vmem:[#allocation10 + $0x40] sm:$0xff]
    %v1731 = vld [vmem:[#allocation10 + $0x48] sm:$0xff]
    %v1732 = vld [vmem:[#allocation10 + $0x50] sm:$0xff]
    %v1733 = vld [vmem:[#allocation10 + $0x58] sm:$0xff]
    %v1734 = vld [vmem:[#allocation10 + $0x60] sm:$0xff]
    %v1735 = vld [vmem:[#allocation10 + $0x68] sm:$0xff]
    %v1736 = vld [vmem:[#allocation10 + $0x70] sm:$0xff]
    %v1737 = vld [vmem:[#allocation10 + $0x78] sm:$0xff]
    %v1738 = vld [vmem:[#allocation10 + $0x80] sm:$0xff]
    %v1739 = vld [vmem:[#allocation10 + $0x88] sm:$0xff]
    %v1740 = vld [vmem:[#allocation10 + $0x90] sm:$0xff]
    %v1741 = vld [vmem:[#allocation10 + $0x98] sm:$0xff]
    %v1742 = vld [vmem:[#allocation10 + $0xa0] sm:$0xff]
    %v1743 = vld [vmem:[#allocation10 + $0xa8] sm:$0xff]
    %v1744 = vld [vmem:[#allocation10 + $0xb0] sm:$0xff]
    %v1745 = vld [vmem:[#allocation10 + $0xb8] sm:$0xff]
    %v1746 = vld [vmem:[#allocation10 + $0xc0] sm:$0xff]
    %v1747 = vld [vmem:[#allocation10 + $0xc8] sm:$0xff]
    %v1748 = vld [vmem:[#allocation10 + $0xd0] sm:$0xff]
    %v1749 = vld [vmem:[#allocation10 + $0xd8] sm:$0xff]
    %v1750 = vld [vmem:[#allocation10 + $0xe0] sm:$0xff]
    %v1751 = vld [vmem:[#allocation10 + $0xe8] sm:$0xff]
    %v1752 = vld [vmem:[#allocation10 + $0xf0] sm:$0xff]
    %v1753 = vld [vmem:[#allocation10 + $0xf8] sm:$0xff]
    %v1754 = vld [vmem:[%s6] sm:$0xf]
    %v1756 = vlaneseq
    %v1757 = vshrl.u32 %v1756, 7
    %v1758 = vsub.s32 0, %v1757
    %v1759 = vrot.slane %v1754, %v1758
    %v1760 = vlaneseq
    %v1761 = vshrl.u32 %v1760, 7
    %v1762 = vsub.s32 1, %v1761
    %v1763 = vrot.slane %v1754, %v1762
    %v1764 = vlaneseq
    %v1765 = vshrl.u32 %v1764, 7
    %v1766 = vsub.s32 2, %v1765
    %v1767 = vrot.slane %v1754, %v1766
    %v1768 = vlaneseq
    %v1769 = vshrl.u32 %v1768, 7
    %v1770 = vsub.s32 3, %v1769
    %v1771 = vrot.slane %v1754, %v1770
    %v1808 = vunpack.c.l.b16 %v1722
    %v1809 = vunpack.c.h.b16 %v1722
    %v1810 = vunpack.c.l.b16 %v1723
    %v1811 = vunpack.c.h.b16 %v1723
    %v1812 = vunpack.c.l.b16 %v1724
    %v1813 = vunpack.c.h.b16 %v1724
    %v1814 = vunpack.c.l.b16 %v1725
    %v1815 = vunpack.c.h.b16 %v1725
    %v1816 = vunpack.c.l.b16 %v1726
    %v1817 = vunpack.c.h.b16 %v1726
    %v1818 = vunpack.c.l.b16 %v1727
    %v1819 = vunpack.c.h.b16 %v1727
    %v1820 = vunpack.c.l.b16 %v1728
    %v1821 = vunpack.c.h.b16 %v1728
    %v1822 = vunpack.c.l.b16 %v1729
    %v1823 = vunpack.c.h.b16 %v1729
    %v1824 = vunpack.c.l.b16 %v1730
    %v1825 = vunpack.c.h.b16 %v1730
    %v1826 = vunpack.c.l.b16 %v1731
    %v1827 = vunpack.c.h.b16 %v1731
    %v1828 = vunpack.c.l.b16 %v1732
    %v1829 = vunpack.c.h.b16 %v1732
    %v1830 = vunpack.c.l.b16 %v1733
    %v1831 = vunpack.c.h.b16 %v1733
    %v1832 = vunpack.c.l.b16 %v1734
    %v1833 = vunpack.c.h.b16 %v1734
    %v1834 = vunpack.c.l.b16 %v1735
    %v1835 = vunpack.c.h.b16 %v1735
    %v1836 = vunpack.c.l.b16 %v1736
    %v1837 = vunpack.c.h.b16 %v1736
    %v1838 = vunpack.c.l.b16 %v1737
    %v1839 = vunpack.c.h.b16 %v1737
    %v1840 = vunpack.c.l.b16 %v1738
    %v1841 = vunpack.c.h.b16 %v1738
    %v1842 = vunpack.c.l.b16 %v1739
    %v1843 = vunpack.c.h.b16 %v1739
    %v1844 = vunpack.c.l.b16 %v1740
    %v1845 = vunpack.c.h.b16 %v1740
    %v1846 = vunpack.c.l.b16 %v1741
    %v1847 = vunpack.c.h.b16 %v1741
    %v1848 = vunpack.c.l.b16 %v1742
    %v1849 = vunpack.c.h.b16 %v1742
    %v1850 = vunpack.c.l.b16 %v1743
    %v1851 = vunpack.c.h.b16 %v1743
    %v1852 = vunpack.c.l.b16 %v1744
    %v1853 = vunpack.c.h.b16 %v1744
    %v1854 = vunpack.c.l.b16 %v1745
    %v1855 = vunpack.c.h.b16 %v1745
    %v1856 = vunpack.c.l.b16 %v1746
    %v1857 = vunpack.c.h.b16 %v1746
    %v1858 = vunpack.c.l.b16 %v1747
    %v1859 = vunpack.c.h.b16 %v1747
    %v1860 = vunpack.c.l.b16 %v1748
    %v1861 = vunpack.c.h.b16 %v1748
    %v1862 = vunpack.c.l.b16 %v1749
    %v1863 = vunpack.c.h.b16 %v1749
    %v1864 = vunpack.c.l.b16 %v1750
    %v1865 = vunpack.c.h.b16 %v1750
    %v1866 = vunpack.c.l.b16 %v1751
    %v1867 = vunpack.c.h.b16 %v1751
    %v1868 = vunpack.c.l.b16 %v1752
    %v1869 = vunpack.c.h.b16 %v1752
    %v1870 = vunpack.c.l.b16 %v1753
    %v1871 = vunpack.c.h.b16 %v1753
    %v1872 = vpack.c.b16 %v1812, %v1808
    %v1873 = vpack.c.b16 %v1813, %v1809
    %v1874 = vpack.c.b16 %v1814, %v1810
    %v1875 = vpack.c.b16 %v1815, %v1811
    %v1876 = vpack.c.b16 %v1820, %v1816
    %v1877 = vpack.c.b16 %v1821, %v1817
    %v1878 = vpack.c.b16 %v1822, %v1818
    %v1879 = vpack.c.b16 %v1823, %v1819
    %v1880 = vpack.c.b16 %v1828, %v1824
    %v1881 = vpack.c.b16 %v1829, %v1825
    %v1882 = vpack.c.b16 %v1830, %v1826
    %v1883 = vpack.c.b16 %v1831, %v1827
    %v1884 = vpack.c.b16 %v1836, %v1832
    %v1885 = vpack.c.b16 %v1837, %v1833
    %v1886 = vpack.c.b16 %v1838, %v1834
    %v1887 = vpack.c.b16 %v1839, %v1835
    %v1888 = vpack.c.b16 %v1844, %v1840
    %v1889 = vpack.c.b16 %v1845, %v1841
    %v1890 = vpack.c.b16 %v1846, %v1842
    %v1891 = vpack.c.b16 %v1847, %v1843
    %v1892 = vpack.c.b16 %v1852, %v1848
    %v1893 = vpack.c.b16 %v1853, %v1849
    %v1894 = vpack.c.b16 %v1854, %v1850
    %v1895 = vpack.c.b16 %v1855, %v1851
    %v1896 = vpack.c.b16 %v1860, %v1856
    %v1897 = vpack.c.b16 %v1861, %v1857
    %v1898 = vpack.c.b16 %v1862, %v1858
    %v1899 = vpack.c.b16 %v1863, %v1859
    %v1900 = vpack.c.b16 %v1868, %v1864
    %v1901 = vpack.c.b16 %v1869, %v1865
    %v1902 = vpack.c.b16 %v1870, %v1866
    %v1903 = vpack.c.b16 %v1871, %v1867
    %1936 = vmatprep.subr.bf16.mxu0 %v1873
    %1937 = vmatpush1.bf16.msra.mxu0 %v1872
    %1938 = vmatprep.subr.bf16.mxu0 %v1877
    %1939 = vmatpush1.bf16.msra.mxu0 %v1876
    %1940 = vmatprep.subr.bf16.mxu0 %v1881
    %1941 = vmatpush1.bf16.msra.mxu0 %v1880
    %1942 = vmatprep.subr.bf16.mxu0 %v1885
    %1943 = vmatpush1.bf16.msra.mxu0 %v1884
    %1944 = vmatprep.subr.bf16.mxu0 %v1889
    %1945 = vmatpush1.bf16.msra.mxu0 %v1888
    %1946 = vmatprep.subr.bf16.mxu0 %v1893
    %1947 = vmatpush1.bf16.msra.mxu0 %v1892
    %1948 = vmatprep.subr.bf16.mxu0 %v1897
    %1949 = vmatpush1.bf16.msra.mxu0 %v1896
    %1950 = vmatprep.subr.bf16.mxu0 %v1901
    %1951 = vmatpush1.bf16.msra.mxu0 %v1900
    %1952 = vmatprep.subr.bf16.mxu0 0
    %1953 = vmatpush1.bf16.msra.mxu0 0
    %1954 = vmatprep.subr.bf16.mxu0 0
    %1955 = vmatpush1.bf16.msra.mxu0 0
    %1956 = vmatprep.subr.bf16.mxu0 0
    %1957 = vmatpush1.bf16.msra.mxu0 0
    %1958 = vmatprep.subr.bf16.mxu0 0
    %1959 = vmatpush1.bf16.msra.mxu0 0
    %1960 = vmatprep.subr.bf16.mxu0 0
    %1961 = vmatpush1.bf16.msra.mxu0 0
    %1962 = vmatprep.subr.bf16.mxu0 0
    %1963 = vmatpush1.bf16.msra.mxu0 0
    %1964 = vmatprep.subr.bf16.mxu0 0
    %1965 = vmatpush1.bf16.msra.mxu0 0
    %1966 = vmatprep.subr.bf16.mxu0 0
    %1967 = vmatpush1.bf16.msra.mxu0 0
    %1968 = vmatprep.mubr.bf16.mxu0 0
    %1969 = vmatmul.mubr.bf16.gmra.mrb[0].mxu0 %v1718
    %v1970 = vpop.f32.mrb[0].mxu0
    %v1971 = vadd.f32 %v1759, %v1970
    %v1972 = vpop.f32.mrb[0].mxu0
    %v1973 = vadd.f32 %v1763, %v1972
    %v1974 = vpop.f32.mrb[0].mxu0
    %v1975 = vadd.f32 %v1759, %v1974
    %v1976 = vpop.f32.mrb[0].mxu0
    %v1977 = vadd.f32 %v1763, %v1976
    %1978 = vmatprep.mubr.bf16.mxu0 0
    %1979 = vmatmul.mubr.bf16.gmra.mrb[0].mxu0 %v1719
    %v1980 = vpop.f32.mrb[0].mxu0
    %v1981 = vadd.f32 %v1759, %v1980
    %v1982 = vpop.f32.mrb[0].mxu0
    %v1983 = vadd.f32 %v1763, %v1982
    %v1984 = vpop.f32.mrb[0].mxu0
    %v1985 = vadd.f32 %v1759, %v1984
    %v1986 = vpop.f32.mrb[0].mxu0
    %v1987 = vadd.f32 %v1763, %v1986
    %1988 = vmatprep.mubr.bf16.mxu0 0
    %1989 = vmatmul.mubr.bf16.gmra.mrb[0].mxu0 %v1720
    %v1990 = vpop.f32.mrb[0].mxu0
    %v1991 = vadd.f32 %v1759, %v1990
    %v1992 = vpop.f32.mrb[0].mxu0
    %v1993 = vadd.f32 %v1763, %v1992
    %v1994 = vpop.f32.mrb[0].mxu0
    %v1995 = vadd.f32 %v1759, %v1994
    %v1996 = vpop.f32.mrb[0].mxu0
    %v1997 = vadd.f32 %v1763, %v1996
    %1998 = vmatprep.mubr.bf16.mxu0 0
    %1999 = vmatmul.mubr.bf16.gmra.mrb[0].mxu0 %v1721
    %v2000 = vpop.f32.mrb[0].mxu0
    %v2001 = vadd.f32 %v1759, %v2000
    %v2002 = vpop.f32.mrb[0].mxu0
    %v2003 = vadd.f32 %v1763, %v2002
    %v2004 = vpop.f32.mrb[0].mxu0
    %v2005 = vadd.f32 %v1759, %v2004
    %v2006 = vpop.f32.mrb[0].mxu0
    %v2007 = vadd.f32 %v1763, %v2006
    %2008 = vdwg.mxu0
    %2009 = vmatprep.subr.bf16.mxu0 %v1875
    %2010 = vmatpush1.bf16.msra.mxu0 %v1874
    %2011 = vmatprep.subr.bf16.mxu0 %v1879
    %2012 = vmatpush1.bf16.msra.mxu0 %v1878
    %2013 = vmatprep.subr.bf16.mxu0 %v1883
    %2014 = vmatpush1.bf16.msra.mxu0 %v1882
    %2015 = vmatprep.subr.bf16.mxu0 %v1887
    %2016 = vmatpush1.bf16.msra.mxu0 %v1886
    %2017 = vmatprep.subr.bf16.mxu0 %v1891
    %2018 = vmatpush1.bf16.msra.mxu0 %v1890
    %2019 = vmatprep.subr.bf16.mxu0 %v1895
    %2020 = vmatpush1.bf16.msra.mxu0 %v1894
    %2021 = vmatprep.subr.bf16.mxu0 %v1899
    %2022 = vmatpush1.bf16.msra.mxu0 %v1898
    %2023 = vmatprep.subr.bf16.mxu0 %v1903
    %2024 = vmatpush1.bf16.msra.mxu0 %v1902
    %2025 = vmatprep.subr.bf16.mxu0 0
    %2026 = vmatpush1.bf16.msra.mxu0 0
    %2027 = vmatprep.subr.bf16.mxu0 0
    %2028 = vmatpush1.bf16.msra.mxu0 0
    %2029 = vmatprep.subr.bf16.mxu0 0
    %2030 = vmatpush1.bf16.msra.mxu0 0
    %2031 = vmatprep.subr.bf16.mxu0 0
    %2032 = vmatpush1.bf16.msra.mxu0 0
    %2033 = vmatprep.subr.bf16.mxu0 0
    %2034 = vmatpush1.bf16.msra.mxu0 0
    %2035 = vmatprep.subr.bf16.mxu0 0
    %2036 = vmatpush1.bf16.msra.mxu0 0
    %2037 = vmatprep.subr.bf16.mxu0 0
    %2038 = vmatpush1.bf16.msra.mxu0 0
    %2039 = vmatprep.subr.bf16.mxu0 0
    %2040 = vmatpush1.bf16.msra.mxu0 0
    %2041 = vmatprep.mubr.bf16.mxu0 0
    %2042 = vmatmul.mubr.bf16.gmra.mrb[0].mxu0 %v1718
    %v2043 = vpop.f32.mrb[0].mxu0
    %v2044 = vadd.f32 %v1767, %v2043
    %v2045 = vpop.f32.mrb[0].mxu0
    %v2046 = vadd.f32 %v1771, %v2045
    %v2047 = vpop.f32.mrb[0].mxu0
    %v2048 = vadd.f32 %v1767, %v2047
    %v2049 = vpop.f32.mrb[0].mxu0
    %v2050 = vadd.f32 %v1771, %v2049
    %2051 = vmatprep.mubr.bf16.mxu0 0
    %2052 = vmatmul.mubr.bf16.gmra.mrb[0].mxu0 %v1719
    %v2053 = vpop.f32.mrb[0].mxu0
    %v2054 = vadd.f32 %v1767, %v2053
    %v2055 = vpop.f32.mrb[0].mxu0
    %v2056 = vadd.f32 %v1771, %v2055
    %v2057 = vpop.f32.mrb[0].mxu0
    %v2058 = vadd.f32 %v1767, %v2057
    %v2059 = vpop.f32.mrb[0].mxu0
    %v2060 = vadd.f32 %v1771, %v2059
    %2061 = vmatprep.mubr.bf16.mxu0 0
    %2062 = vmatmul.mubr.bf16.gmra.mrb[0].mxu0 %v1720
    %v2063 = vpop.f32.mrb[0].mxu0
    %v2064 = vadd.f32 %v1767, %v2063
    %v2065 = vpop.f32.mrb[0].mxu0
    %v2066 = vadd.f32 %v1771, %v2065
    %v2067 = vpop.f32.mrb[0].mxu0
    %v2068 = vadd.f32 %v1767, %v2067
    %v2069 = vpop.f32.mrb[0].mxu0
    %v2070 = vadd.f32 %v1771, %v2069
    %2071 = vmatprep.mubr.bf16.mxu0 0
    %2072 = vmatmul.mubr.bf16.gmra.mrb[0].mxu0 %v1721
    %v2073 = vpop.f32.mrb[0].mxu0
    %v2074 = vadd.f32 %v1767, %v2073
    %v2075 = vpop.f32.mrb[0].mxu0
    %v2076 = vadd.f32 %v1771, %v2075
    %v2077 = vpop.f32.mrb[0].mxu0
    %v2078 = vadd.f32 %v1767, %v2077
    %v2079 = vpop.f32.mrb[0].mxu0
    %v2080 = vadd.f32 %v1771, %v2079
    %2081 = vdwg.mxu0
    %2082 = vst [vmem:[#allocation3] sm:$0xff] %v1971
    %2083 = vst [vmem:[#allocation3 + $0x8] sm:$0xff] %v1973
    %2084 = vst [vmem:[#allocation3 + $0x10] sm:$0xff] %v2044
    %2085 = vst [vmem:[#allocation3 + $0x18] sm:$0xff] %v2046
    %2086 = vst [vmem:[#allocation3 + $0x20] sm:$0xff] %v1975
    %2087 = vst [vmem:[#allocation3 + $0x28] sm:$0xff] %v1977
    %2088 = vst [vmem:[#allocation3 + $0x30] sm:$0xff] %v2048
    %2089 = vst [vmem:[#allocation3 + $0x38] sm:$0xff] %v2050
    %2090 = vst [vmem:[#allocation3 + $0x40] sm:$0xff] %v1981
    %2091 = vst [vmem:[#allocation3 + $0x48] sm:$0xff] %v1983
    %2092 = vst [vmem:[#allocation3 + $0x50] sm:$0xff] %v2054
    %2093 = vst [vmem:[#allocation3 + $0x58] sm:$0xff] %v2056
    %2094 = vst [vmem:[#allocation3 + $0x60] sm:$0xff] %v1985
    %2095 = vst [vmem:[#allocation3 + $0x68] sm:$0xff] %v1987
    %2096 = vst [vmem:[#allocation3 + $0x70] sm:$0xff] %v2058
    %2097 = vst [vmem:[#allocation3 + $0x78] sm:$0xff] %v2060
    %2098 = vst [vmem:[#allocation3 + $0x80] sm:$0xff] %v1991
    %2099 = vst [vmem:[#allocation3 + $0x88] sm:$0xff] %v1993
    %2100 = vst [vmem:[#allocation3 + $0x90] sm:$0xff] %v2064
    %2101 = vst [vmem:[#allocation3 + $0x98] sm:$0xff] %v2066
    %2102 = vst [vmem:[#allocation3 + $0xa0] sm:$0xff] %v1995
    %2103 = vst [vmem:[#allocation3 + $0xa8] sm:$0xff] %v1997
    %2104 = vst [vmem:[#allocation3 + $0xb0] sm:$0xff] %v2068
    %2105 = vst [vmem:[#allocation3 + $0xb8] sm:$0xff] %v2070
    %2106 = vst [vmem:[#allocation3 + $0xc0] sm:$0xff] %v2001
    %2107 = vst [vmem:[#allocation3 + $0xc8] sm:$0xff] %v2003
    %2108 = vst [vmem:[#allocation3 + $0xd0] sm:$0xff] %v2074
    %2109 = vst [vmem:[#allocation3 + $0xd8] sm:$0xff] %v2076
    %2110 = vst [vmem:[#allocation3 + $0xe0] sm:$0xff] %v2005
    %2111 = vst [vmem:[#allocation3 + $0xe8] sm:$0xff] %v2007
    %2112 = vst [vmem:[#allocation3 + $0xf0] sm:$0xff] %v2078
    %2113 = vst [vmem:[#allocation3 + $0xf8] sm:$0xff] %v2080
    %v2114 = vld [vmem:[#allocation12] sm:$0xff]
    %v2115 = vld [vmem:[#allocation12 + $0x8] sm:$0xff]
    %v2116 = vld [vmem:[#allocation12 + $0x10] sm:$0xff]
    %v2117 = vld [vmem:[#allocation12 + $0x18] sm:$0xff]
    %v2118 = vld [vmem:[#allocation12 + $0x20] sm:$0xff]
    %v2119 = vld [vmem:[#allocation12 + $0x28] sm:$0xff]
    %v2120 = vld [vmem:[#allocation12 + $0x30] sm:$0xff]
    %v2121 = vld [vmem:[#allocation12 + $0x38] sm:$0xff]
    %v2122 = vld [vmem:[#allocation12 + $0x40] sm:$0xff]
    %v2123 = vld [vmem:[#allocation12 + $0x48] sm:$0xff]
    %v2124 = vld [vmem:[#allocation12 + $0x50] sm:$0xff]
    %v2125 = vld [vmem:[#allocation12 + $0x58] sm:$0xff]
    %v2126 = vld [vmem:[#allocation12 + $0x60] sm:$0xff]
    %v2127 = vld [vmem:[#allocation12 + $0x68] sm:$0xff]
    %v2128 = vld [vmem:[#allocation12 + $0x70] sm:$0xff]
    %v2129 = vld [vmem:[#allocation12 + $0x78] sm:$0xff]
    %v2130 = vld [vmem:[#allocation12 + $0x80] sm:$0xff]
    %v2131 = vld [vmem:[#allocation12 + $0x88] sm:$0xff]
    %v2132 = vld [vmem:[#allocation12 + $0x90] sm:$0xff]
    %v2133 = vld [vmem:[#allocation12 + $0x98] sm:$0xff]
    %v2134 = vld [vmem:[#allocation12 + $0xa0] sm:$0xff]
    %v2135 = vld [vmem:[#allocation12 + $0xa8] sm:$0xff]
    %v2136 = vld [vmem:[#allocation12 + $0xb0] sm:$0xff]
    %v2137 = vld [vmem:[#allocation12 + $0xb8] sm:$0xff]
    %v2138 = vld [vmem:[#allocation12 + $0xc0] sm:$0xff]
    %v2139 = vld [vmem:[#allocation12 + $0xc8] sm:$0xff]
    %v2140 = vld [vmem:[#allocation12 + $0xd0] sm:$0xff]
    %v2141 = vld [vmem:[#allocation12 + $0xd8] sm:$0xff]
    %v2142 = vld [vmem:[#allocation12 + $0xe0] sm:$0xff]
    %v2143 = vld [vmem:[#allocation12 + $0xe8] sm:$0xff]
    %v2144 = vld [vmem:[#allocation12 + $0xf0] sm:$0xff]
    %v2145 = vld [vmem:[#allocation12 + $0xf8] sm:$0xff]
    %v2146 = vld [vmem:[%s594] sm:$0xff]
    %v2147 = vld [vmem:[%s594 + $0x8] sm:$0xff]
    %v2148 = vld [vmem:[%s594 + $0x10] sm:$0xff]
    %v2149 = vld [vmem:[%s594 + $0x18] sm:$0xff]
    %v2182 = vunpack.c.l.b16 %v2114
    %v2183 = vunpack.c.h.b16 %v2114
    %v2184 = vunpack.c.l.b16 %v2115
    %v2185 = vunpack.c.h.b16 %v2115
    %v2186 = vunpack.c.l.b16 %v2116
    %v2187 = vunpack.c.h.b16 %v2116
    %v2188 = vunpack.c.l.b16 %v2117
    %v2189 = vunpack.c.h.b16 %v2117
    %v2190 = vunpack.c.l.b16 %v2118
    %v2191 = vunpack.c.h.b16 %v2118
    %v2192 = vunpack.c.l.b16 %v2119
    %v2193 = vunpack.c.h.b16 %v2119
    %v2194 = vunpack.c.l.b16 %v2120
    %v2195 = vunpack.c.h.b16 %v2120
    %v2196 = vunpack.c.l.b16 %v2121
    %v2197 = vunpack.c.h.b16 %v2121
    %v2198 = vunpack.c.l.b16 %v2122
    %v2199 = vunpack.c.h.b16 %v2122
    %v2200 = vunpack.c.l.b16 %v2123
    %v2201 = vunpack.c.h.b16 %v2123
    %v2202 = vunpack.c.l.b16 %v2124
    %v2203 = vunpack.c.h.b16 %v2124
    %v2204 = vunpack.c.l.b16 %v2125
    %v2205 = vunpack.c.h.b16 %v2125
    %v2206 = vunpack.c.l.b16 %v2126
    %v2207 = vunpack.c.h.b16 %v2126
    %v2208 = vunpack.c.l.b16 %v2127
    %v2209 = vunpack.c.h.b16 %v2127
    %v2210 = vunpack.c.l.b16 %v2128
    %v2211 = vunpack.c.h.b16 %v2128
    %v2212 = vunpack.c.l.b16 %v2129
    %v2213 = vunpack.c.h.b16 %v2129
    %v2214 = vunpack.c.l.b16 %v2130
    %v2215 = vunpack.c.h.b16 %v2130
    %v2216 = vunpack.c.l.b16 %v2131
    %v2217 = vunpack.c.h.b16 %v2131
    %v2218 = vunpack.c.l.b16 %v2132
    %v2219 = vunpack.c.h.b16 %v2132
    %v2220 = vunpack.c.l.b16 %v2133
    %v2221 = vunpack.c.h.b16 %v2133
    %v2222 = vunpack.c.l.b16 %v2134
    %v2223 = vunpack.c.h.b16 %v2134
    %v2224 = vunpack.c.l.b16 %v2135
    %v2225 = vunpack.c.h.b16 %v2135
    %v2226 = vunpack.c.l.b16 %v2136
    %v2227 = vunpack.c.h.b16 %v2136
    %v2228 = vunpack.c.l.b16 %v2137
    %v2229 = vunpack.c.h.b16 %v2137
    %v2230 = vunpack.c.l.b16 %v2138
    %v2231 = vunpack.c.h.b16 %v2138
    %v2232 = vunpack.c.l.b16 %v2139
    %v2233 = vunpack.c.h.b16 %v2139
    %v2234 = vunpack.c.l.b16 %v2140
    %v2235 = vunpack.c.h.b16 %v2140
    %v2236 = vunpack.c.l.b16 %v2141
    %v2237 = vunpack.c.h.b16 %v2141
    %v2238 = vunpack.c.l.b16 %v2142
    %v2239 = vunpack.c.h.b16 %v2142
    %v2240 = vunpack.c.l.b16 %v2143
    %v2241 = vunpack.c.h.b16 %v2143
    %v2242 = vunpack.c.l.b16 %v2144
    %v2243 = vunpack.c.h.b16 %v2144
    %v2244 = vunpack.c.l.b16 %v2145
    %v2245 = vunpack.c.h.b16 %v2145
    %v2246 = vpack.c.b16 %v2186, %v2182
    %v2247 = vpack.c.b16 %v2187, %v2183
    %v2248 = vpack.c.b16 %v2188, %v2184
    %v2249 = vpack.c.b16 %v2189, %v2185
    %v2250 = vpack.c.b16 %v2194, %v2190
    %v2251 = vpack.c.b16 %v2195, %v2191
    %v2252 = vpack.c.b16 %v2196, %v2192
    %v2253 = vpack.c.b16 %v2197, %v2193
    %v2254 = vpack.c.b16 %v2202, %v2198
    %v2255 = vpack.c.b16 %v2203, %v2199
    %v2256 = vpack.c.b16 %v2204, %v2200
    %v2257 = vpack.c.b16 %v2205, %v2201
    %v2258 = vpack.c.b16 %v2210, %v2206
    %v2259 = vpack.c.b16 %v2211, %v2207
    %v2260 = vpack.c.b16 %v2212, %v2208
    %v2261 = vpack.c.b16 %v2213, %v2209
    %v2262 = vpack.c.b16 %v2218, %v2214
    %v2263 = vpack.c.b16 %v2219, %v2215
    %v2264 = vpack.c.b16 %v2220, %v2216
    %v2265 = vpack.c.b16 %v2221, %v2217
    %v2266 = vpack.c.b16 %v2226, %v2222
    %v2267 = vpack.c.b16 %v2227, %v2223
    %v2268 = vpack.c.b16 %v2228, %v2224
    %v2269 = vpack.c.b16 %v2229, %v2225
    %v2270 = vpack.c.b16 %v2234, %v2230
    %v2271 = vpack.c.b16 %v2235, %v2231
    %v2272 = vpack.c.b16 %v2236, %v2232
    %v2273 = vpack.c.b16 %v2237, %v2233
    %v2274 = vpack.c.b16 %v2242, %v2238
    %v2275 = vpack.c.b16 %v2243, %v2239
    %v2276 = vpack.c.b16 %v2244, %v2240
    %v2277 = vpack.c.b16 %v2245, %v2241
    %2310 = vmatprep.subr.bf16.mxu0 %v2247
    %2311 = vmatpush1.bf16.msra.mxu0 %v2246
    %2312 = vmatprep.subr.bf16.mxu0 %v2251
    %2313 = vmatpush1.bf16.msra.mxu0 %v2250
    %2314 = vmatprep.subr.bf16.mxu0 %v2255
    %2315 = vmatpush1.bf16.msra.mxu0 %v2254
    %2316 = vmatprep.subr.bf16.mxu0 %v2259
    %2317 = vmatpush1.bf16.msra.mxu0 %v2258
    %2318 = vmatprep.subr.bf16.mxu0 %v2263
    %2319 = vmatpush1.bf16.msra.mxu0 %v2262
    %2320 = vmatprep.subr.bf16.mxu0 %v2267
    %2321 = vmatpush1.bf16.msra.mxu0 %v2266
    %2322 = vmatprep.subr.bf16.mxu0 %v2271
    %2323 = vmatpush1.bf16.msra.mxu0 %v2270
    %2324 = vmatprep.subr.bf16.mxu0 %v2275
    %2325 = vmatpush1.bf16.msra.mxu0 %v2274
    %2326 = vmatprep.subr.bf16.mxu0 0
    %2327 = vmatpush1.bf16.msra.mxu0 0
    %2328 = vmatprep.subr.bf16.mxu0 0
    %2329 = vmatpush1.bf16.msra.mxu0 0
    %2330 = vmatprep.subr.bf16.mxu0 0
    %2331 = vmatpush1.bf16.msra.mxu0 0
    %2332 = vmatprep.subr.bf16.mxu0 0
    %2333 = vmatpush1.bf16.msra.mxu0 0
    %2334 = vmatprep.subr.bf16.mxu0 0
    %2335 = vmatpush1.bf16.msra.mxu0 0
    %2336 = vmatprep.subr.bf16.mxu0 0
    %2337 = vmatpush1.bf16.msra.mxu0 0
    %2338 = vmatprep.subr.bf16.mxu0 0
    %2339 = vmatpush1.bf16.msra.mxu0 0
    %2340 = vmatprep.subr.bf16.mxu0 0
    %2341 = vmatpush1.bf16.msra.mxu0 0
    %2342 = vmatprep.mubr.bf16.mxu0 0
    %2343 = vmatmul.mubr.bf16.gmra.mrb[0].mxu0 0
    %v2344 = vpop.f32.mrb[0].mxu0
    %v2345 = vadd.f32 0.0, %v2344
    %v2346 = vpop.f32.mrb[0].mxu0
    %v2347 = vadd.f32 0.0, %v2346
    %v2348 = vpop.f32.mrb[0].mxu0
    %v2349 = vpop.f32.mrb[0].mxu0
    %2350 = vdwg.mxu0
    %2351 = vmatprep.subr.bf16.mxu0 %v2249
    %2352 = vmatpush1.bf16.msra.mxu0 %v2248
    %2353 = vmatprep.subr.bf16.mxu0 %v2253
    %2354 = vmatpush1.bf16.msra.mxu0 %v2252
    %2355 = vmatprep.subr.bf16.mxu0 %v2257
    %2356 = vmatpush1.bf16.msra.mxu0 %v2256
    %2357 = vmatprep.subr.bf16.mxu0 %v2261
    %2358 = vmatpush1.bf16.msra.mxu0 %v2260
    %2359 = vmatprep.subr.bf16.mxu0 %v2265
    %2360 = vmatpush1.bf16.msra.mxu0 %v2264
    %2361 = vmatprep.subr.bf16.mxu0 %v2269
    %2362 = vmatpush1.bf16.msra.mxu0 %v2268
    %2363 = vmatprep.subr.bf16.mxu0 %v2273
    %2364 = vmatpush1.bf16.msra.mxu0 %v2272
    %2365 = vmatprep.subr.bf16.mxu0 %v2277
    %2366 = vmatpush1.bf16.msra.mxu0 %v2276
    %2367 = vmatprep.subr.bf16.mxu0 0
    %2368 = vmatpush1.bf16.msra.mxu0 0
    %2369 = vmatprep.subr.bf16.mxu0 0
    %2370 = vmatpush1.bf16.msra.mxu0 0
    %2371 = vmatprep.subr.bf16.mxu0 0
    %2372 = vmatpush1.bf16.msra.mxu0 0
    %2373 = vmatprep.subr.bf16.mxu0 0
    %2374 = vmatpush1.bf16.msra.mxu0 0
    %2375 = vmatprep.subr.bf16.mxu0 0
    %2376 = vmatpush1.bf16.msra.mxu0 0
    %2377 = vmatprep.subr.bf16.mxu0 0
    %2378 = vmatpush1.bf16.msra.mxu0 0
    %2379 = vmatprep.subr.bf16.mxu0 0
    %2380 = vmatpush1.bf16.msra.mxu0 0
    %2381 = vmatprep.subr.bf16.mxu0 0
    %2382 = vmatpush1.bf16.msra.mxu0 0
    %2383 = vmatprep.mubr.bf16.mxu0 0
    %2384 = vmatmul.mubr.bf16.gmra.mrb[0].mxu0 0
    %v2385 = vpop.f32.mrb[0].mxu0
    %v2386 = vadd.f32 0.0, %v2385
    %v2387 = vpop.f32.mrb[0].mxu0
    %v2388 = vadd.f32 0.0, %v2387
    %v2389 = vpop.f32.mrb[0].mxu0
    %v2390 = vpop.f32.mrb[0].mxu0
    %2391 = vdwg.mxu0
    %v2392 = vadd.f32 %v2146, %v2345
    %v2393 = vadd.f32 %v2147, %v2347
    %v2394 = vadd.f32 %v2148, %v2386
    %v2395 = vadd.f32 %v2149, %v2388
    %v2396 = vxor.u32 %v2392, 2147483648
    %v2397 = vmul.f32 %v2396, 1.442695
    %v2398 = vpow.pop %v2397
    %v2399 = vadd.f32 %v2398, 1.0
    %v2400 = vrcp.pop %v2399
    %v2401 = vmul.f32 1.0, %v2400
    %v2402 = vxor.u32 %v2393, 2147483648
    %v2403 = vmul.f32 %v2402, 1.442695
    %v2404 = vpow.pop %v2403
    %v2405 = vadd.f32 %v2404, 1.0
    %v2406 = vrcp.pop %v2405
    %v2407 = vmul.f32 1.0, %v2406
    %v2408 = vtanh.pop %v2394
    %v2409 = vxor.u32 %v2395, 2147483648
    %v2410 = vmul.f32 %v2409, 1.442695
    %v2411 = vpow.pop %v2410
    %v2412 = vadd.f32 %v2411, 1.0
    %v2413 = vrcp.pop %v2412
    %v2414 = vmul.f32 1.0, %v2413
    %v2415 = vmul.f32 %v2407, 0.0
    %v2416 = vmul.f32 %v2401, %v2408
    %v2417 = vadd.f32 %v2415, %v2416
    %v2418 = vtanh.pop %v2417
    %v2419 = vmul.f32 %v2414, %v2418
    %2420 = vst [vmem:[#allocation2] sm:$0xff] %v2419
    %v2421 = vld [vmem:[%s872] sm:$0xff]
    %v2422 = vld [vmem:[%s872 + $0x8] sm:$0xff]
    %v2423 = vld [vmem:[%s872 + $0x10] sm:$0xff]
    %v2424 = vld [vmem:[%s872 + $0x18] sm:$0xff]
    %v2425 = vpack.c.bf16 %v2419, %v2419
    %2426 = vmatprep.subr.bf16.mxu0 %v2247
    %2427 = vmatpush1.bf16.msra.mxu0 %v2246
    %2428 = vmatprep.subr.bf16.mxu0 %v2251
    %2429 = vmatpush1.bf16.msra.mxu0 %v2250
    %2430 = vmatprep.subr.bf16.mxu0 %v2255
    %2431 = vmatpush1.bf16.msra.mxu0 %v2254
    %2432 = vmatprep.subr.bf16.mxu0 %v2259
    %2433 = vmatpush1.bf16.msra.mxu0 %v2258
    %2434 = vmatprep.subr.bf16.mxu0 %v2263
    %2435 = vmatpush1.bf16.msra.mxu0 %v2262
    %2436 = vmatprep.subr.bf16.mxu0 %v2267
    %2437 = vmatpush1.bf16.msra.mxu0 %v2266
    %2438 = vmatprep.subr.bf16.mxu0 %v2271
    %2439 = vmatpush1.bf16.msra.mxu0 %v2270
    %2440 = vmatprep.subr.bf16.mxu0 %v2275
    %2441 = vmatpush1.bf16.msra.mxu0 %v2274
    %2442 = vmatprep.subr.bf16.mxu0 0
    %2443 = vmatpush1.bf16.msra.mxu0 0
    %2444 = vmatprep.subr.bf16.mxu0 0
    %2445 = vmatpush1.bf16.msra.mxu0 0
    %2446 = vmatprep.subr.bf16.mxu0 0
    %2447 = vmatpush1.bf16.msra.mxu0 0
    %2448 = vmatprep.subr.bf16.mxu0 0
    %2449 = vmatpush1.bf16.msra.mxu0 0
    %2450 = vmatprep.subr.bf16.mxu0 0
    %2451 = vmatpush1.bf16.msra.mxu0 0
    %2452 = vmatprep.subr.bf16.mxu0 0
    %2453 = vmatpush1.bf16.msra.mxu0 0
    %2454 = vmatprep.subr.bf16.mxu0 0
    %2455 = vmatpush1.bf16.msra.mxu0 0
    %2456 = vmatprep.subr.bf16.mxu0 0
    %2457 = vmatpush1.bf16.msra.mxu0 0
    %2458 = vmatprep.mubr.bf16.mxu0 0
    %2459 = vmatmul.mubr.bf16.gmra.mrb[0].mxu0 %v2425
    %v2460 = vpop.f32.mrb[0].mxu0
    %v2461 = vadd.f32 0.0, %v2460
    %v2462 = vpop.f32.mrb[0].mxu0
    %v2463 = vadd.f32 0.0, %v2462
    %v2464 = vpop.f32.mrb[0].mxu0
    %v2465 = vpop.f32.mrb[0].mxu0
    %2466 = vdwg.mxu0
    %2467 = vmatprep.subr.bf16.mxu0 %v2249
    %2468 = vmatpush1.bf16.msra.mxu0 %v2248
    %2469 = vmatprep.subr.bf16.mxu0 %v2253
    %2470 = vmatpush1.bf16.msra.mxu0 %v2252
    %2471 = vmatprep.subr.bf16.mxu0 %v2257
    %2472 = vmatpush1.bf16.msra.mxu0 %v2256
    %2473 = vmatprep.subr.bf16.mxu0 %v2261
    %2474 = vmatpush1.bf16.msra.mxu0 %v2260
    %2475 = vmatprep.subr.bf16.mxu0 %v2265
    %2476 = vmatpush1.bf16.msra.mxu0 %v2264
    %2477 = vmatprep.subr.bf16.mxu0 %v2269
    %2478 = vmatpush1.bf16.msra.mxu0 %v2268
    %2479 = vmatprep.subr.bf16.mxu0 %v2273
    %2480 = vmatpush1.bf16.msra.mxu0 %v2272
    %2481 = vmatprep.subr.bf16.mxu0 %v2277
    %2482 = vmatpush1.bf16.msra.mxu0 %v2276
    %2483 = vmatprep.subr.bf16.mxu0 0
    %2484 = vmatpush1.bf16.msra.mxu0 0
    %2485 = vmatprep.subr.bf16.mxu0 0
    %2486 = vmatpush1.bf16.msra.mxu0 0
    %2487 = vmatprep.subr.bf16.mxu0 0
    %2488 = vmatpush1.bf16.msra.mxu0 0
    %2489 = vmatprep.subr.bf16.mxu0 0
    %2490 = vmatpush1.bf16.msra.mxu0 0
    %2491 = vmatprep.subr.bf16.mxu0 0
    %2492 = vmatpush1.bf16.msra.mxu0 0
    %2493 = vmatprep.subr.bf16.mxu0 0
    %2494 = vmatpush1.bf16.msra.mxu0 0
    %2495 = vmatprep.subr.bf16.mxu0 0
    %2496 = vmatpush1.bf16.msra.mxu0 0
    %2497 = vmatprep.subr.bf16.mxu0 0
    %2498 = vmatpush1.bf16.msra.mxu0 0
    %2499 = vmatprep.mubr.bf16.mxu0 0
    %2500 = vmatmul.mubr.bf16.gmra.mrb[0].mxu0 %v2425
    %v2501 = vpop.f32.mrb[0].mxu0
    %v2502 = vadd.f32 0.0, %v2501
    %v2503 = vpop.f32.mrb[0].mxu0
    %v2504 = vadd.f32 0.0, %v2503
    %v2505 = vpop.f32.mrb[0].mxu0
    %v2506 = vpop.f32.mrb[0].mxu0
    %2507 = vdwg.mxu0
    %v2508 = vadd.f32 %v2421, %v2461
    %v2509 = vadd.f32 %v2422, %v2463
    %v2510 = vadd.f32 %v2423, %v2502
    %v2511 = vadd.f32 %v2424, %v2504
    %v2512 = vxor.u32 %v2508, 2147483648
    %v2513 = vmul.f32 %v2512, 1.442695
    %v2514 = vpow.pop %v2513
    %v2515 = vadd.f32 %v2514, 1.0
    %v2516 = vrcp.pop %v2515
    %v2517 = vmul.f32 1.0, %v2516
    %v2518 = vxor.u32 %v2509, 2147483648
    %v2519 = vmul.f32 %v2518, 1.442695
    %v2520 = vpow.pop %v2519
    %v2521 = vadd.f32 %v2520, 1.0
    %v2522 = vrcp.pop %v2521
    %v2523 = vmul.f32 1.0, %v2522
    %v2524 = vtanh.pop %v2510
    %v2525 = vxor.u32 %v2511, 2147483648
    %v2526 = vmul.f32 %v2525, 1.442695
    %v2527 = vpow.pop %v2526
    %v2528 = vadd.f32 %v2527, 1.0
    %v2529 = vrcp.pop %v2528
    %v2530 = vmul.f32 1.0, %v2529
    %v2531 = vmul.f32 %v2523, %v2417
    %v2532 = vmul.f32 %v2517, %v2524
    %v2533 = vadd.f32 %v2531, %v2532
    %v2534 = vtanh.pop %v2533
    %v2535 = vmul.f32 %v2530, %v2534
    %2536 = vst [vmem:[%s988] sm:$0xff] %v2535
    %v2537 = vld [vmem:[%s992] sm:$0xff]
    %v2538 = vld [vmem:[%s992 + $0x8] sm:$0xff]
    %v2539 = vld [vmem:[%s992 + $0x10] sm:$0xff]
    %v2540 = vld [vmem:[%s992 + $0x18] sm:$0xff]
    %v2541 = vpack.c.bf16 %v2535, %v2535
    %2542 = vmatprep.subr.bf16.mxu0 %v2247
    %2543 = vmatpush1.bf16.msra.mxu0 %v2246
    %2544 = vmatprep.subr.bf16.mxu0 %v2251
    %2545 = vmatpush1.bf16.msra.mxu0 %v2250
    %2546 = vmatprep.subr.bf16.mxu0 %v2255
    %2547 = vmatpush1.bf16.msra.mxu0 %v2254
    %2548 = vmatprep.subr.bf16.mxu0 %v2259
    %2549 = vmatpush1.bf16.msra.mxu0 %v2258
    %2550 = vmatprep.subr.bf16.mxu0 %v2263
    %2551 = vmatpush1.bf16.msra.mxu0 %v2262
    %2552 = vmatprep.subr.bf16.mxu0 %v2267
    %2553 = vmatpush1.bf16.msra.mxu0 %v2266
    %2554 = vmatprep.subr.bf16.mxu0 %v2271
    %2555 = vmatpush1.bf16.msra.mxu0 %v2270
    %2556 = vmatprep.subr.bf16.mxu0 %v2275
    %2557 = vmatpush1.bf16.msra.mxu0 %v2274
    %2558 = vmatprep.subr.bf16.mxu0 0
    %2559 = vmatpush1.bf16.msra.mxu0 0
    %2560 = vmatprep.subr.bf16.mxu0 0
    %2561 = vmatpush1.bf16.msra.mxu0 0
    %2562 = vmatprep.subr.bf16.mxu0 0
    %2563 = vmatpush1.bf16.msra.mxu0 0
    %2564 = vmatprep.subr.bf16.mxu0 0
    %2565 = vmatpush1.bf16.msra.mxu0 0
    %2566 = vmatprep.subr.bf16.mxu0 0
    %2567 = vmatpush1.bf16.msra.mxu0 0
    %2568 = vmatprep.subr.bf16.mxu0 0
    %2569 = vmatpush1.bf16.msra.mxu0 0
    %2570 = vmatprep.subr.bf16.mxu0 0
    %2571 = vmatpush1.bf16.msra.mxu0 0
    %2572 = vmatprep.subr.bf16.mxu0 0
    %2573 = vmatpush1.bf16.msra.mxu0 0
    %2574 = vmatprep.mubr.bf16.mxu0 0
    %2575 = vmatmul.mubr.bf16.gmra.mrb[0].mxu0 %v2541
    %v2576 = vpop.f32.mrb[0].mxu0
    %v2577 = vadd.f32 0.0, %v2576
    %v2578 = vpop.f32.mrb[0].mxu0
    %v2579 = vadd.f32 0.0, %v2578
    %v2580 = vpop.f32.mrb[0].mxu0
    %v2581 = vpop.f32.mrb[0].mxu0
    %2582 = vdwg.mxu0
    %2583 = vmatprep.subr.bf16.mxu0 %v2249
    %2584 = vmatpush1.bf16.msra.mxu0 %v2248
    %2585 = vmatprep.subr.bf16.mxu0 %v2253
    %2586 = vmatpush1.bf16.msra.mxu0 %v2252
    %2587 = vmatprep.subr.bf16.mxu0 %v2257
    %2588 = vmatpush1.bf16.msra.mxu0 %v2256
    %2589 = vmatprep.subr.bf16.mxu0 %v2261
    %2590 = vmatpush1.bf16.msra.mxu0 %v2260
    %2591 = vmatprep.subr.bf16.mxu0 %v2265
    %2592 = vmatpush1.bf16.msra.mxu0 %v2264
    %2593 = vmatprep.subr.bf16.mxu0 %v2269
    %2594 = vmatpush1.bf16.msra.mxu0 %v2268
    %2595 = vmatprep.subr.bf16.mxu0 %v2273
    %2596 = vmatpush1.bf16.msra.mxu0 %v2272
    %2597 = vmatprep.subr.bf16.mxu0 %v2277
    %2598 = vmatpush1.bf16.msra.mxu0 %v2276
    %2599 = vmatprep.subr.bf16.mxu0 0
    %2600 = vmatpush1.bf16.msra.mxu0 0
    %2601 = vmatprep.subr.bf16.mxu0 0
    %2602 = vmatpush1.bf16.msra.mxu0 0
    %2603 = vmatprep.subr.bf16.mxu0 0
    %2604 = vmatpush1.bf16.msra.mxu0 0
    %2605 = vmatprep.subr.bf16.mxu0 0
    %2606 = vmatpush1.bf16.msra.mxu0 0
    %2607 = vmatprep.subr.bf16.mxu0 0
    %2608 = vmatpush1.bf16.msra.mxu0 0
    %2609 = vmatprep.subr.bf16.mxu0 0
    %2610 = vmatpush1.bf16.msra.mxu0 0
    %2611 = vmatprep.subr.bf16.mxu0 0
    %2612 = vmatpush1.bf16.msra.mxu0 0
    %2613 = vmatprep.subr.bf16.mxu0 0
    %2614 = vmatpush1.bf16.msra.mxu0 0
    %2615 = vmatprep.mubr.bf16.mxu0 0
    %2616 = vmatmul.mubr.bf16.gmra.mrb[0].mxu0 %v2541
    %v2617 = vpop.f32.mrb[0].mxu0
    %v2618 = vadd.f32 0.0, %v2617
    %v2619 = vpop.f32.mrb[0].mxu0
    %v2620 = vadd.f32 0.0, %v2619
    %v2621 = vpop.f32.mrb[0].mxu0
    %v2622 = vpop.f32.mrb[0].mxu0
    %2623 = vdwg.mxu0
    %v2624 = vadd.f32 %v2537, %v2577
    %v2625 = vadd.f32 %v2538, %v2579
    %v2626 = vadd.f32 %v2539, %v2618
    %v2627 = vadd.f32 %v2540, %v2620
    %v2628 = vxor.u32 %v2624, 2147483648
    %v2629 = vmul.f32 %v2628, 1.442695
    %v2630 = vpow.pop %v2629
    %v2631 = vadd.f32 %v2630, 1.0
    %v2632 = vrcp.pop %v2631
    %v2633 = vmul.f32 1.0, %v2632
    %v2634 = vxor.u32 %v2625, 2147483648
    %v2635 = vmul.f32 %v2634, 1.442695
    %v2636 = vpow.pop %v2635
    %v2637 = vadd.f32 %v2636, 1.0
    %v2638 = vrcp.pop %v2637
    %v2639 = vmul.f32 1.0, %v2638
    %v2640 = vtanh.pop %v2626
    %v2641 = vxor.u32 %v2627, 2147483648
    %v2642 = vmul.f32 %v2641, 1.442695
    %v2643 = vpow.pop %v2642
    %v2644 = vadd.f32 %v2643, 1.0
    %v2645 = vrcp.pop %v2644
    %v2646 = vmul.f32 1.0, %v2645
    %v2647 = vmul.f32 %v2639, %v2533
    %v2648 = vmul.f32 %v2633, %v2640
    %v2649 = vadd.f32 %v2647, %v2648
    %v2650 = vtanh.pop %v2649
    %v2651 = vmul.f32 %v2646, %v2650
    %2652 = vst [vmem:[%s1108] sm:$0xff] %v2651
    %v2653 = vld [vmem:[%s1112] sm:$0xff]
    %v2654 = vld [vmem:[%s1112 + $0x8] sm:$0xff]
    %v2655 = vld [vmem:[%s1112 + $0x10] sm:$0xff]
    %v2656 = vld [vmem:[%s1112 + $0x18] sm:$0xff]
    %v2657 = vpack.c.bf16 %v2651, %v2651
    %2658 = vmatprep.subr.bf16.mxu0 %v2247
    %2659 = vmatpush1.bf16.msra.mxu0 %v2246
    %2660 = vmatprep.subr.bf16.mxu0 %v2251
    %2661 = vmatpush1.bf16.msra.mxu0 %v2250
    %2662 = vmatprep.subr.bf16.mxu0 %v2255
    %2663 = vmatpush1.bf16.msra.mxu0 %v2254
    %2664 = vmatprep.subr.bf16.mxu0 %v2259
    %2665 = vmatpush1.bf16.msra.mxu0 %v2258
    %2666 = vmatprep.subr.bf16.mxu0 %v2263
    %2667 = vmatpush1.bf16.msra.mxu0 %v2262
    %2668 = vmatprep.subr.bf16.mxu0 %v2267
    %2669 = vmatpush1.bf16.msra.mxu0 %v2266
    %2670 = vmatprep.subr.bf16.mxu0 %v2271
    %2671 = vmatpush1.bf16.msra.mxu0 %v2270
    %2672 = vmatprep.subr.bf16.mxu0 %v2275
    %2673 = vmatpush1.bf16.msra.mxu0 %v2274
    %2674 = vmatprep.subr.bf16.mxu0 0
    %2675 = vmatpush1.bf16.msra.mxu0 0
    %2676 = vmatprep.subr.bf16.mxu0 0
    %2677 = vmatpush1.bf16.msra.mxu0 0
    %2678 = vmatprep.subr.bf16.mxu0 0
    %2679 = vmatpush1.bf16.msra.mxu0 0
    %2680 = vmatprep.subr.bf16.mxu0 0
    %2681 = vmatpush1.bf16.msra.mxu0 0
    %2682 = vmatprep.subr.bf16.mxu0 0
    %2683 = vmatpush1.bf16.msra.mxu0 0
    %2684 = vmatprep.subr.bf16.mxu0 0
    %2685 = vmatpush1.bf16.msra.mxu0 0
    %2686 = vmatprep.subr.bf16.mxu0 0
    %2687 = vmatpush1.bf16.msra.mxu0 0
    %2688 = vmatprep.subr.bf16.mxu0 0
    %2689 = vmatpush1.bf16.msra.mxu0 0
    %2690 = vmatprep.mubr.bf16.mxu0 0
    %2691 = vmatmul.mubr.bf16.gmra.mrb[0].mxu0 %v2657
    %v2692 = vpop.f32.mrb[0].mxu0
    %v2693 = vadd.f32 0.0, %v2692
    %v2694 = vpop.f32.mrb[0].mxu0
    %v2695 = vadd.f32 0.0, %v2694
    %v2696 = vpop.f32.mrb[0].mxu0
    %v2697 = vpop.f32.mrb[0].mxu0
    %2698 = vdwg.mxu0
    %2699 = vmatprep.subr.bf16.mxu0 %v2249
    %2700 = vmatpush1.bf16.msra.mxu0 %v2248
    %2701 = vmatprep.subr.bf16.mxu0 %v2253
    %2702 = vmatpush1.bf16.msra.mxu0 %v2252
    %2703 = vmatprep.subr.bf16.mxu0 %v2257
    %2704 = vmatpush1.bf16.msra.mxu0 %v2256
    %2705 = vmatprep.subr.bf16.mxu0 %v2261
    %2706 = vmatpush1.bf16.msra.mxu0 %v2260
    %2707 = vmatprep.subr.bf16.mxu0 %v2265
    %2708 = vmatpush1.bf16.msra.mxu0 %v2264
    %2709 = vmatprep.subr.bf16.mxu0 %v2269
    %2710 = vmatpush1.bf16.msra.mxu0 %v2268
    %2711 = vmatprep.subr.bf16.mxu0 %v2273
    %2712 = vmatpush1.bf16.msra.mxu0 %v2272
    %2713 = vmatprep.subr.bf16.mxu0 %v2277
    %2714 = vmatpush1.bf16.msra.mxu0 %v2276
    %2715 = vmatprep.subr.bf16.mxu0 0
    %2716 = vmatpush1.bf16.msra.mxu0 0
    %2717 = vmatprep.subr.bf16.mxu0 0
    %2718 = vmatpush1.bf16.msra.mxu0 0
    %2719 = vmatprep.subr.bf16.mxu0 0
    %2720 = vmatpush1.bf16.msra.mxu0 0
    %2721 = vmatprep.subr.bf16.mxu0 0
    %2722 = vmatpush1.bf16.msra.mxu0 0
    %2723 = vmatprep.subr.bf16.mxu0 0
    %2724 = vmatpush1.bf16.msra.mxu0 0
    %2725 = vmatprep.subr.bf16.mxu0 0
    %2726 = vmatpush1.bf16.msra.mxu0 0
    %2727 = vmatprep.subr.bf16.mxu0 0
    %2728 = vmatpush1.bf16.msra.mxu0 0
    %2729 = vmatprep.subr.bf16.mxu0 0
    %2730 = vmatpush1.bf16.msra.mxu0 0
    %2731 = vmatprep.mubr.bf16.mxu0 0
    %2732 = vmatmul.mubr.bf16.gmra.mrb[0].mxu0 %v2657
    %v2733 = vpop.f32.mrb[0].mxu0
    %v2734 = vadd.f32 0.0, %v2733
    %v2735 = vpop.f32.mrb[0].mxu0
    %v2736 = vadd.f32 0.0, %v2735
    %v2737 = vpop.f32.mrb[0].mxu0
    %v2738 = vpop.f32.mrb[0].mxu0
    %2739 = vdwg.mxu0
    %v2740 = vadd.f32 %v2653, %v2693
    %v2741 = vadd.f32 %v2654, %v2695
    %v2742 = vadd.f32 %v2655, %v2734
    %v2743 = vadd.f32 %v2656, %v2736
    %v2744 = vxor.u32 %v2740, 2147483648
    %v2745 = vmul.f32 %v2744, 1.442695
    %v2746 = vpow.pop %v2745
    %v2747 = vadd.f32 %v2746, 1.0
    %v2748 = vrcp.pop %v2747
    %v2749 = vmul.f32 1.0, %v2748
    %v2750 = vxor.u32 %v2741, 2147483648
    %v2751 = vmul.f32 %v2750, 1.442695
    %v2752 = vpow.pop %v2751
    %v2753 = vadd.f32 %v2752, 1.0
    %v2754 = vrcp.pop %v2753
    %v2755 = vmul.f32 1.0, %v2754
    %v2756 = vtanh.pop %v2742
    %v2757 = vxor.u32 %v2743, 2147483648
    %v2758 = vmul.f32 %v2757, 1.442695
    %v2759 = vpow.pop %v2758
    %v2760 = vadd.f32 %v2759, 1.0
    %v2761 = vrcp.pop %v2760
    %v2762 = vmul.f32 1.0, %v2761
    %v2763 = vmul.f32 %v2755, %v2649
    %v2764 = vmul.f32 %v2749, %v2756
    %v2765 = vadd.f32 %v2763, %v2764
    %v2766 = vtanh.pop %v2765
    %v2767 = vmul.f32 %v2762, %v2766
    %2768 = vst [vmem:[%s1228] sm:$0xff] %v2767
    %v2769 = vld [vmem:[%s1232] sm:$0xff]
    %v2770 = vld [vmem:[%s1232 + $0x8] sm:$0xff]
    %v2771 = vld [vmem:[%s1232 + $0x10] sm:$0xff]
    %v2772 = vld [vmem:[%s1232 + $0x18] sm:$0xff]
    %v2773 = vpack.c.bf16 %v2767, %v2767
    %2774 = vmatprep.subr.bf16.mxu0 %v2247
    %2775 = vmatpush1.bf16.msra.mxu0 %v2246
    %2776 = vmatprep.subr.bf16.mxu0 %v2251
    %2777 = vmatpush1.bf16.msra.mxu0 %v2250
    %2778 = vmatprep.subr.bf16.mxu0 %v2255
    %2779 = vmatpush1.bf16.msra.mxu0 %v2254
    %2780 = vmatprep.subr.bf16.mxu0 %v2259
    %2781 = vmatpush1.bf16.msra.mxu0 %v2258
    %2782 = vmatprep.subr.bf16.mxu0 %v2263
    %2783 = vmatpush1.bf16.msra.mxu0 %v2262
    %2784 = vmatprep.subr.bf16.mxu0 %v2267
    %2785 = vmatpush1.bf16.msra.mxu0 %v2266
    %2786 = vmatprep.subr.bf16.mxu0 %v2271
    %2787 = vmatpush1.bf16.msra.mxu0 %v2270
    %2788 = vmatprep.subr.bf16.mxu0 %v2275
    %2789 = vmatpush1.bf16.msra.mxu0 %v2274
    %2790 = vmatprep.subr.bf16.mxu0 0
    %2791 = vmatpush1.bf16.msra.mxu0 0
    %2792 = vmatprep.subr.bf16.mxu0 0
    %2793 = vmatpush1.bf16.msra.mxu0 0
    %2794 = vmatprep.subr.bf16.mxu0 0
    %2795 = vmatpush1.bf16.msra.mxu0 0
    %2796 = vmatprep.subr.bf16.mxu0 0
    %2797 = vmatpush1.bf16.msra.mxu0 0
    %2798 = vmatprep.subr.bf16.mxu0 0
    %2799 = vmatpush1.bf16.msra.mxu0 0
    %2800 = vmatprep.subr.bf16.mxu0 0
    %2801 = vmatpush1.bf16.msra.mxu0 0
    %2802 = vmatprep.subr.bf16.mxu0 0
    %2803 = vmatpush1.bf16.msra.mxu0 0
    %2804 = vmatprep.subr.bf16.mxu0 0
    %2805 = vmatpush1.bf16.msra.mxu0 0
    %2806 = vmatprep.mubr.bf16.mxu0 0
    %2807 = vmatmul.mubr.bf16.gmra.mrb[0].mxu0 %v2773
    %v2808 = vpop.f32.mrb[0].mxu0
    %v2809 = vadd.f32 0.0, %v2808
    %v2810 = vpop.f32.mrb[0].mxu0
    %v2811 = vadd.f32 0.0, %v2810
    %v2812 = vpop.f32.mrb[0].mxu0
    %v2813 = vpop.f32.mrb[0].mxu0
    %2814 = vdwg.mxu0
    %2815 = vmatprep.subr.bf16.mxu0 %v2249
    %2816 = vmatpush1.bf16.msra.mxu0 %v2248
    %2817 = vmatprep.subr.bf16.mxu0 %v2253
    %2818 = vmatpush1.bf16.msra.mxu0 %v2252
    %2819 = vmatprep.subr.bf16.mxu0 %v2257
    %2820 = vmatpush1.bf16.msra.mxu0 %v2256
    %2821 = vmatprep.subr.bf16.mxu0 %v2261
    %2822 = vmatpush1.bf16.msra.mxu0 %v2260
    %2823 = vmatprep.subr.bf16.mxu0 %v2265
    %2824 = vmatpush1.bf16.msra.mxu0 %v2264
    %2825 = vmatprep.subr.bf16.mxu0 %v2269
    %2826 = vmatpush1.bf16.msra.mxu0 %v2268
    %2827 = vmatprep.subr.bf16.mxu0 %v2273
    %2828 = vmatpush1.bf16.msra.mxu0 %v2272
    %2829 = vmatprep.subr.bf16.mxu0 %v2277
    %2830 = vmatpush1.bf16.msra.mxu0 %v2276
    %2831 = vmatprep.subr.bf16.mxu0 0
    %2832 = vmatpush1.bf16.msra.mxu0 0
    %2833 = vmatprep.subr.bf16.mxu0 0
    %2834 = vmatpush1.bf16.msra.mxu0 0
    %2835 = vmatprep.subr.bf16.mxu0 0
    %2836 = vmatpush1.bf16.msra.mxu0 0
    %2837 = vmatprep.subr.bf16.mxu0 0
    %2838 = vmatpush1.bf16.msra.mxu0 0
    %2839 = vmatprep.subr.bf16.mxu0 0
    %2840 = vmatpush1.bf16.msra.mxu0 0
    %2841 = vmatprep.subr.bf16.mxu0 0
    %2842 = vmatpush1.bf16.msra.mxu0 0
    %2843 = vmatprep.subr.bf16.mxu0 0
    %2844 = vmatpush1.bf16.msra.mxu0 0
    %2845 = vmatprep.subr.bf16.mxu0 0
    %2846 = vmatpush1.bf16.msra.mxu0 0
    %2847 = vmatprep.mubr.bf16.mxu0 0
    %2848 = vmatmul.mubr.bf16.gmra.mrb[0].mxu0 %v2773
    %v2849 = vpop.f32.mrb[0].mxu0
    %v2850 = vadd.f32 0.0, %v2849
    %v2851 = vpop.f32.mrb[0].mxu0
    %v2852 = vadd.f32 0.0, %v2851
    %v2853 = vpop.f32.mrb[0].mxu0
    %v2854 = vpop.f32.mrb[0].mxu0
    %2855 = vdwg.mxu0
    %v2856 = vadd.f32 %v2769, %v2809
    %v2857 = vadd.f32 %v2770, %v2811
    %v2858 = vadd.f32 %v2771, %v2850
    %v2859 = vadd.f32 %v2772, %v2852
    %v2860 = vxor.u32 %v2856, 2147483648
    %v2861 = vmul.f32 %v2860, 1.442695
    %v2862 = vpow.pop %v2861
    %v2863 = vadd.f32 %v2862, 1.0
    %v2864 = vrcp.pop %v2863
    %v2865 = vmul.f32 1.0, %v2864
    %v2866 = vxor.u32 %v2857, 2147483648
    %v2867 = vmul.f32 %v2866, 1.442695
    %v2868 = vpow.pop %v2867
    %v2869 = vadd.f32 %v2868, 1.0
    %v2870 = vrcp.pop %v2869
    %v2871 = vmul.f32 1.0, %v2870
    %v2872 = vtanh.pop %v2858
    %v2873 = vxor.u32 %v2859, 2147483648
    %v2874 = vmul.f32 %v2873, 1.442695
    %v2875 = vpow.pop %v2874
    %v2876 = vadd.f32 %v2875, 1.0
    %v2877 = vrcp.pop %v2876
    %v2878 = vmul.f32 1.0, %v2877
    %v2879 = vmul.f32 %v2871, %v2765
    %v2880 = vmul.f32 %v2865, %v2872
    %v2881 = vadd.f32 %v2879, %v2880
    %v2882 = vtanh.pop %v2881
    %v2883 = vmul.f32 %v2878, %v2882
    %2884 = vst [vmem:[%s1348] sm:$0xff] %v2883
    %v2885 = vld [vmem:[%s1352] sm:$0xff]
    %v2886 = vld [vmem:[%s1352 + $0x8] sm:$0xff]
    %v2887 = vld [vmem:[%s1352 + $0x10] sm:$0xff]
    %v2888 = vld [vmem:[%s1352 + $0x18] sm:$0xff]
    %v2889 = vpack.c.bf16 %v2883, %v2883
    %2890 = vmatprep.subr.bf16.mxu0 %v2247
    %2891 = vmatpush1.bf16.msra.mxu0 %v2246
    %2892 = vmatprep.subr.bf16.mxu0 %v2251
    %2893 = vmatpush1.bf16.msra.mxu0 %v2250
    %2894 = vmatprep.subr.bf16.mxu0 %v2255
    %2895 = vmatpush1.bf16.msra.mxu0 %v2254
    %2896 = vmatprep.subr.bf16.mxu0 %v2259
    %2897 = vmatpush1.bf16.msra.mxu0 %v2258
    %2898 = vmatprep.subr.bf16.mxu0 %v2263
    %2899 = vmatpush1.bf16.msra.mxu0 %v2262
    %2900 = vmatprep.subr.bf16.mxu0 %v2267
    %2901 = vmatpush1.bf16.msra.mxu0 %v2266
    %2902 = vmatprep.subr.bf16.mxu0 %v2271
    %2903 = vmatpush1.bf16.msra.mxu0 %v2270
    %2904 = vmatprep.subr.bf16.mxu0 %v2275
    %2905 = vmatpush1.bf16.msra.mxu0 %v2274
    %2906 = vmatprep.subr.bf16.mxu0 0
    %2907 = vmatpush1.bf16.msra.mxu0 0
    %2908 = vmatprep.subr.bf16.mxu0 0
    %2909 = vmatpush1.bf16.msra.mxu0 0
    %2910 = vmatprep.subr.bf16.mxu0 0
    %2911 = vmatpush1.bf16.msra.mxu0 0
    %2912 = vmatprep.subr.bf16.mxu0 0
    %2913 = vmatpush1.bf16.msra.mxu0 0
    %2914 = vmatprep.subr.bf16.mxu0 0
    %2915 = vmatpush1.bf16.msra.mxu0 0
    %2916 = vmatprep.subr.bf16.mxu0 0
    %2917 = vmatpush1.bf16.msra.mxu0 0
    %2918 = vmatprep.subr.bf16.mxu0 0
    %2919 = vmatpush1.bf16.msra.mxu0 0
    %2920 = vmatprep.subr.bf16.mxu0 0
    %2921 = vmatpush1.bf16.msra.mxu0 0
    %2922 = vmatprep.mubr.bf16.mxu0 0
    %2923 = vmatmul.mubr.bf16.gmra.mrb[0].mxu0 %v2889
    %v2924 = vpop.f32.mrb[0].mxu0
    %v2925 = vadd.f32 0.0, %v2924
    %v2926 = vpop.f32.mrb[0].mxu0
    %v2927 = vadd.f32 0.0, %v2926
    %v2928 = vpop.f32.mrb[0].mxu0
    %v2929 = vpop.f32.mrb[0].mxu0
    %2930 = vdwg.mxu0
    %2931 = vmatprep.subr.bf16.mxu0 %v2249
    %2932 = vmatpush1.bf16.msra.mxu0 %v2248
    %2933 = vmatprep.subr.bf16.mxu0 %v2253
    %2934 = vmatpush1.bf16.msra.mxu0 %v2252
    %2935 = vmatprep.subr.bf16.mxu0 %v2257
    %2936 = vmatpush1.bf16.msra.mxu0 %v2256
    %2937 = vmatprep.subr.bf16.mxu0 %v2261
    %2938 = vmatpush1.bf16.msra.mxu0 %v2260
    %2939 = vmatprep.subr.bf16.mxu0 %v2265
    %2940 = vmatpush1.bf16.msra.mxu0 %v2264
    %2941 = vmatprep.subr.bf16.mxu0 %v2269
    %2942 = vmatpush1.bf16.msra.mxu0 %v2268
    %2943 = vmatprep.subr.bf16.mxu0 %v2273
    %2944 = vmatpush1.bf16.msra.mxu0 %v2272
    %2945 = vmatprep.subr.bf16.mxu0 %v2277
    %2946 = vmatpush1.bf16.msra.mxu0 %v2276
    %2947 = vmatprep.subr.bf16.mxu0 0
    %2948 = vmatpush1.bf16.msra.mxu0 0
    %2949 = vmatprep.subr.bf16.mxu0 0
    %2950 = vmatpush1.bf16.msra.mxu0 0
    %2951 = vmatprep.subr.bf16.mxu0 0
    %2952 = vmatpush1.bf16.msra.mxu0 0
    %2953 = vmatprep.subr.bf16.mxu0 0
    %2954 = vmatpush1.bf16.msra.mxu0 0
    %2955 = vmatprep.subr.bf16.mxu0 0
    %2956 = vmatpush1.bf16.msra.mxu0 0
    %2957 = vmatprep.subr.bf16.mxu0 0
    %2958 = vmatpush1.bf16.msra.mxu0 0
    %2959 = vmatprep.subr.bf16.mxu0 0
    %2960 = vmatpush1.bf16.msra.mxu0 0
    %2961 = vmatprep.subr.bf16.mxu0 0
    %2962 = vmatpush1.bf16.msra.mxu0 0
    %2963 = vmatprep.mubr.bf16.mxu0 0
    %2964 = vmatmul.mubr.bf16.gmra.mrb[0].mxu0 %v2889
    %v2965 = vpop.f32.mrb[0].mxu0
    %v2966 = vadd.f32 0.0, %v2965
    %v2967 = vpop.f32.mrb[0].mxu0
    %v2968 = vadd.f32 0.0, %v2967
    %v2969 = vpop.f32.mrb[0].mxu0
    %v2970 = vpop.f32.mrb[0].mxu0
    %2971 = vdwg.mxu0
    %v2972 = vadd.f32 %v2885, %v2925
    %v2973 = vadd.f32 %v2886, %v2927
    %v2974 = vadd.f32 %v2887, %v2966
    %v2975 = vadd.f32 %v2888, %v2968
    %v2976 = vxor.u32 %v2972, 2147483648
    %v2977 = vmul.f32 %v2976, 1.442695
    %v2978 = vpow.pop %v2977
    %v2979 = vadd.f32 %v2978, 1.0
    %v2980 = vrcp.pop %v2979
    %v2981 = vmul.f32 1.0, %v2980
    %v2982 = vxor.u32 %v2973, 2147483648
    %v2983 = vmul.f32 %v2982, 1.442695
    %v2984 = vpow.pop %v2983
    %v2985 = vadd.f32 %v2984, 1.0
    %v2986 = vrcp.pop %v2985
    %v2987 = vmul.f32 1.0, %v2986
    %v2988 = vtanh.pop %v2974
    %v2989 = vxor.u32 %v2975, 2147483648
    %v2990 = vmul.f32 %v2989, 1.442695
    %v2991 = vpow.pop %v2990
    %v2992 = vadd.f32 %v2991, 1.0
    %v2993 = vrcp.pop %v2992
    %v2994 = vmul.f32 1.0, %v2993
    %v2995 = vmul.f32 %v2987, %v2881
    %v2996 = vmul.f32 %v2981, %v2988
    %v2997 = vadd.f32 %v2995, %v2996
    %v2998 = vtanh.pop %v2997
    %v2999 = vmul.f32 %v2994, %v2998
    %3000 = vst [vmem:[%s1468] sm:$0xff] %v2999
    %v3001 = vld [vmem:[%s1472] sm:$0xff]
    %v3002 = vld [vmem:[%s1472 + $0x8] sm:$0xff]
    %v3003 = vld [vmem:[%s1472 + $0x10] sm:$0xff]
    %v3004 = vld [vmem:[%s1472 + $0x18] sm:$0xff]
    %v3005 = vpack.c.bf16 %v2999, %v2999
    %3006 = vmatprep.subr.bf16.mxu0 %v2247
    %3007 = vmatpush1.bf16.msra.mxu0 %v2246
    %3008 = vmatprep.subr.bf16.mxu0 %v2251
    %3009 = vmatpush1.bf16.msra.mxu0 %v2250
    %3010 = vmatprep.subr.bf16.mxu0 %v2255
    %3011 = vmatpush1.bf16.msra.mxu0 %v2254
    %3012 = vmatprep.subr.bf16.mxu0 %v2259
    %3013 = vmatpush1.bf16.msra.mxu0 %v2258
    %3014 = vmatprep.subr.bf16.mxu0 %v2263
    %3015 = vmatpush1.bf16.msra.mxu0 %v2262
    %3016 = vmatprep.subr.bf16.mxu0 %v2267
    %3017 = vmatpush1.bf16.msra.mxu0 %v2266
    %3018 = vmatprep.subr.bf16.mxu0 %v2271
    %3019 = vmatpush1.bf16.msra.mxu0 %v2270
    %3020 = vmatprep.subr.bf16.mxu0 %v2275
    %3021 = vmatpush1.bf16.msra.mxu0 %v2274
    %3022 = vmatprep.subr.bf16.mxu0 0
    %3023 = vmatpush1.bf16.msra.mxu0 0
    %3024 = vmatprep.subr.bf16.mxu0 0
    %3025 = vmatpush1.bf16.msra.mxu0 0
    %3026 = vmatprep.subr.bf16.mxu0 0
    %3027 = vmatpush1.bf16.msra.mxu0 0
    %3028 = vmatprep.subr.bf16.mxu0 0
    %3029 = vmatpush1.bf16.msra.mxu0 0
    %3030 = vmatprep.subr.bf16.mxu0 0
    %3031 = vmatpush1.bf16.msra.mxu0 0
    %3032 = vmatprep.subr.bf16.mxu0 0
    %3033 = vmatpush1.bf16.msra.mxu0 0
    %3034 = vmatprep.subr.bf16.mxu0 0
    %3035 = vmatpush1.bf16.msra.mxu0 0
    %3036 = vmatprep.subr.bf16.mxu0 0
    %3037 = vmatpush1.bf16.msra.mxu0 0
    %3038 = vmatprep.mubr.bf16.mxu0 0
    %3039 = vmatmul.mubr.bf16.gmra.mrb[0].mxu0 %v3005
    %v3040 = vpop.f32.mrb[0].mxu0
    %v3041 = vadd.f32 0.0, %v3040
    %v3042 = vpop.f32.mrb[0].mxu0
    %v3043 = vadd.f32 0.0, %v3042
    %v3044 = vpop.f32.mrb[0].mxu0
    %v3045 = vpop.f32.mrb[0].mxu0
    %3046 = vdwg.mxu0
    %3047 = vmatprep.subr.bf16.mxu0 %v2249
    %3048 = vmatpush1.bf16.msra.mxu0 %v2248
    %3049 = vmatprep.subr.bf16.mxu0 %v2253
    %3050 = vmatpush1.bf16.msra.mxu0 %v2252
    %3051 = vmatprep.subr.bf16.mxu0 %v2257
    %3052 = vmatpush1.bf16.msra.mxu0 %v2256
    %3053 = vmatprep.subr.bf16.mxu0 %v2261
    %3054 = vmatpush1.bf16.msra.mxu0 %v2260
    %3055 = vmatprep.subr.bf16.mxu0 %v2265
    %3056 = vmatpush1.bf16.msra.mxu0 %v2264
    %3057 = vmatprep.subr.bf16.mxu0 %v2269
    %3058 = vmatpush1.bf16.msra.mxu0 %v2268
    %3059 = vmatprep.subr.bf16.mxu0 %v2273
    %3060 = vmatpush1.bf16.msra.mxu0 %v2272
    %3061 = vmatprep.subr.bf16.mxu0 %v2277
    %3062 = vmatpush1.bf16.msra.mxu0 %v2276
    %3063 = vmatprep.subr.bf16.mxu0 0
    %3064 = vmatpush1.bf16.msra.mxu0 0
    %3065 = vmatprep.subr.bf16.mxu0 0
    %3066 = vmatpush1.bf16.msra.mxu0 0
    %3067 = vmatprep.subr.bf16.mxu0 0
    %3068 = vmatpush1.bf16.msra.mxu0 0
    %3069 = vmatprep.subr.bf16.mxu0 0
    %3070 = vmatpush1.bf16.msra.mxu0 0
    %3071 = vmatprep.subr.bf16.mxu0 0
    %3072 = vmatpush1.bf16.msra.mxu0 0
    %3073 = vmatprep.subr.bf16.mxu0 0
    %3074 = vmatpush1.bf16.msra.mxu0 0
    %3075 = vmatprep.subr.bf16.mxu0 0
    %3076 = vmatpush1.bf16.msra.mxu0 0
    %3077 = vmatprep.subr.bf16.mxu0 0
    %3078 = vmatpush1.bf16.msra.mxu0 0
    %3079 = vmatprep.mubr.bf16.mxu0 0
    %3080 = vmatmul.mubr.bf16.gmra.mrb[0].mxu0 %v3005
    %v3081 = vpop.f32.mrb[0].mxu0
    %v3082 = vadd.f32 0.0, %v3081
    %v3083 = vpop.f32.mrb[0].mxu0
    %v3084 = vadd.f32 0.0, %v3083
    %v3085 = vpop.f32.mrb[0].mxu0
    %v3086 = vpop.f32.mrb[0].mxu0
    %3087 = vdwg.mxu0
    %v3088 = vadd.f32 %v3001, %v3041
    %v3089 = vadd.f32 %v3002, %v3043
    %v3090 = vadd.f32 %v3003, %v3082
    %v3091 = vadd.f32 %v3004, %v3084
    %v3092 = vxor.u32 %v3088, 2147483648
    %v3093 = vmul.f32 %v3092, 1.442695
    %v3094 = vpow.pop %v3093
    %v3095 = vadd.f32 %v3094, 1.0
    %v3096 = vrcp.pop %v3095
    %v3097 = vmul.f32 1.0, %v3096
    %v3098 = vxor.u32 %v3089, 2147483648
    %v3099 = vmul.f32 %v3098, 1.442695
    %v3100 = vpow.pop %v3099
    %v3101 = vadd.f32 %v3100, 1.0
    %v3102 = vrcp.pop %v3101
    %v3103 = vmul.f32 1.0, %v3102
    %v3104 = vtanh.pop %v3090
    %v3105 = vxor.u32 %v3091, 2147483648
    %v3106 = vmul.f32 %v3105, 1.442695
    %v3107 = vpow.pop %v3106
    %v3108 = vadd.f32 %v3107, 1.0
    %v3109 = vrcp.pop %v3108
    %v3110 = vmul.f32 1.0, %v3109
    %v3111 = vmul.f32 %v3103, %v2997
    %v3112 = vmul.f32 %v3097, %v3104
    %v3113 = vadd.f32 %v3111, %v3112
    %v3114 = vtanh.pop %v3113
    %v3115 = vmul.f32 %v3110, %v3114
    %3116 = vst [vmem:[%s1588] sm:$0xff] %v3115
    %v3117 = vld [vmem:[%s1592] sm:$0xff]
    %v3118 = vld [vmem:[%s1592 + $0x8] sm:$0xff]
    %v3119 = vld [vmem:[%s1592 + $0x10] sm:$0xff]
    %v3120 = vld [vmem:[%s1592 + $0x18] sm:$0xff]
    %v3121 = vpack.c.bf16 %v3115, %v3115
    %3122 = vmatprep.subr.bf16.mxu0 %v2247
    %3123 = vmatpush1.bf16.msra.mxu0 %v2246
    %3124 = vmatprep.subr.bf16.mxu0 %v2251
    %3125 = vmatpush1.bf16.msra.mxu0 %v2250
    %3126 = vmatprep.subr.bf16.mxu0 %v2255
    %3127 = vmatpush1.bf16.msra.mxu0 %v2254
    %3128 = vmatprep.subr.bf16.mxu0 %v2259
    %3129 = vmatpush1.bf16.msra.mxu0 %v2258
    %3130 = vmatprep.subr.bf16.mxu0 %v2263
    %3131 = vmatpush1.bf16.msra.mxu0 %v2262
    %3132 = vmatprep.subr.bf16.mxu0 %v2267
    %3133 = vmatpush1.bf16.msra.mxu0 %v2266
    %3134 = vmatprep.subr.bf16.mxu0 %v2271
    %3135 = vmatpush1.bf16.msra.mxu0 %v2270
    %3136 = vmatprep.subr.bf16.mxu0 %v2275
    %3137 = vmatpush1.bf16.msra.mxu0 %v2274
    %3138 = vmatprep.subr.bf16.mxu0 0
    %3139 = vmatpush1.bf16.msra.mxu0 0
    %3140 = vmatprep.subr.bf16.mxu0 0
    %3141 = vmatpush1.bf16.msra.mxu0 0
    %3142 = vmatprep.subr.bf16.mxu0 0
    %3143 = vmatpush1.bf16.msra.mxu0 0
    %3144 = vmatprep.subr.bf16.mxu0 0
    %3145 = vmatpush1.bf16.msra.mxu0 0
    %3146 = vmatprep.subr.bf16.mxu0 0
    %3147 = vmatpush1.bf16.msra.mxu0 0
    %3148 = vmatprep.subr.bf16.mxu0 0
    %3149 = vmatpush1.bf16.msra.mxu0 0
    %3150 = vmatprep.subr.bf16.mxu0 0
    %3151 = vmatpush1.bf16.msra.mxu0 0
    %3152 = vmatprep.subr.bf16.mxu0 0
    %3153 = vmatpush1.bf16.msra.mxu0 0
    %3154 = vmatprep.mubr.bf16.mxu0 0
    %3155 = vmatmul.mubr.bf16.gmra.mrb[0].mxu0 %v3121
    %v3156 = vpop.f32.mrb[0].mxu0
    %v3157 = vadd.f32 0.0, %v3156
    %v3158 = vpop.f32.mrb[0].mxu0
    %v3159 = vadd.f32 0.0, %v3158
    %v3160 = vpop.f32.mrb[0].mxu0
    %v3161 = vpop.f32.mrb[0].mxu0
    %3162 = vdwg.mxu0
    %3163 = vmatprep.subr.bf16.mxu0 %v2249
    %3164 = vmatpush1.bf16.msra.mxu0 %v2248
    %3165 = vmatprep.subr.bf16.mxu0 %v2253
    %3166 = vmatpush1.bf16.msra.mxu0 %v2252
    %3167 = vmatprep.subr.bf16.mxu0 %v2257
    %3168 = vmatpush1.bf16.msra.mxu0 %v2256
    %3169 = vmatprep.subr.bf16.mxu0 %v2261
    %3170 = vmatpush1.bf16.msra.mxu0 %v2260
    %3171 = vmatprep.subr.bf16.mxu0 %v2265
    %3172 = vmatpush1.bf16.msra.mxu0 %v2264
    %3173 = vmatprep.subr.bf16.mxu0 %v2269
    %3174 = vmatpush1.bf16.msra.mxu0 %v2268
    %3175 = vmatprep.subr.bf16.mxu0 %v2273
    %3176 = vmatpush1.bf16.msra.mxu0 %v2272
    %3177 = vmatprep.subr.bf16.mxu0 %v2277
    %3178 = vmatpush1.bf16.msra.mxu0 %v2276
    %3179 = vmatprep.subr.bf16.mxu0 0
    %3180 = vmatpush1.bf16.msra.mxu0 0
    %3181 = vmatprep.subr.bf16.mxu0 0
    %3182 = vmatpush1.bf16.msra.mxu0 0
    %3183 = vmatprep.subr.bf16.mxu0 0
    %3184 = vmatpush1.bf16.msra.mxu0 0
    %3185 = vmatprep.subr.bf16.mxu0 0
    %3186 = vmatpush1.bf16.msra.mxu0 0
    %3187 = vmatprep.subr.bf16.mxu0 0
    %3188 = vmatpush1.bf16.msra.mxu0 0
    %3189 = vmatprep.subr.bf16.mxu0 0
    %3190 = vmatpush1.bf16.msra.mxu0 0
    %3191 = vmatprep.subr.bf16.mxu0 0
    %3192 = vmatpush1.bf16.msra.mxu0 0
    %3193 = vmatprep.subr.bf16.mxu0 0
    %3194 = vmatpush1.bf16.msra.mxu0 0
    %3195 = vmatprep.mubr.bf16.mxu0 0
    %3196 = vmatmul.mubr.bf16.gmra.mrb[0].mxu0 %v3121
    %v3197 = vpop.f32.mrb[0].mxu0
    %v3198 = vadd.f32 0.0, %v3197
    %v3199 = vpop.f32.mrb[0].mxu0
    %v3200 = vadd.f32 0.0, %v3199
    %v3201 = vpop.f32.mrb[0].mxu0
    %v3202 = vpop.f32.mrb[0].mxu0
    %3203 = vdwg.mxu0
    %v3204 = vadd.f32 %v3117, %v3157
    %v3205 = vadd.f32 %v3118, %v3159
    %v3206 = vadd.f32 %v3119, %v3198
    %v3207 = vadd.f32 %v3120, %v3200
    %v3208 = vxor.u32 %v3204, 2147483648
    %v3209 = vmul.f32 %v3208, 1.442695
    %v3210 = vpow.pop %v3209
    %v3211 = vadd.f32 %v3210, 1.0
    %v3212 = vrcp.pop %v3211
    %v3213 = vmul.f32 1.0, %v3212
    %v3214 = vxor.u32 %v3205, 2147483648
    %v3215 = vmul.f32 %v3214, 1.442695
    %v3216 = vpow.pop %v3215
    %v3217 = vadd.f32 %v3216, 1.0
    %v3218 = vrcp.pop %v3217
    %v3219 = vmul.f32 1.0, %v3218
    %v3220 = vtanh.pop %v3206
    %v3221 = vxor.u32 %v3207, 2147483648
    %v3222 = vmul.f32 %v3221, 1.442695
    %v3223 = vpow.pop %v3222
    %v3224 = vadd.f32 %v3223, 1.0
    %v3225 = vrcp.pop %v3224
    %v3226 = vmul.f32 1.0, %v3225
    %v3227 = vmul.f32 %v3219, %v3113
    %v3228 = vmul.f32 %v3213, %v3220
    %v3229 = vadd.f32 %v3227, %v3228
    %v3230 = vtanh.pop %v3229
    %v3231 = vmul.f32 %v3226, %v3230
    %3232 = vst [vmem:[%s1708] sm:$0xff] %v3231
    %v3233 = vld [vmem:[#allocation2] sm:$0xff]
    %v3234 = vld [vmem:[#allocation2 + $0x8] sm:$0xff]
    %v3235 = vld [vmem:[#allocation2 + $0x10] sm:$0xff]
    %v3236 = vld [vmem:[#allocation2 + $0x18] sm:$0xff]
    %v3237 = vld [vmem:[#allocation2 + $0x20] sm:$0xff]
    %v3238 = vld [vmem:[#allocation2 + $0x28] sm:$0xff]
    %v3239 = vld [vmem:[#allocation2 + $0x30] sm:$0xff]
    %v3240 = vld [vmem:[#allocation2 + $0x38] sm:$0xff]
    %v3241 = vpack.c.bf16 %v3234, %v3233
    %v3242 = vpack.c.bf16 %v3236, %v3235
    %v3243 = vpack.c.bf16 %v3238, %v3237
    %v3244 = vpack.c.bf16 %v3240, %v3239
    %v3245 = vld [vmem:[#allocation13] sm:$0xff]
    %v3246 = vld [vmem:[#allocation13 + $0x8] sm:$0xff]
    %v3247 = vld [vmem:[#allocation13 + $0x10] sm:$0xff]
    %v3248 = vld [vmem:[#allocation13 + $0x18] sm:$0xff]
    %v3249 = vld [vmem:[#allocation13 + $0x20] sm:$0xff]
    %v3250 = vld [vmem:[#allocation13 + $0x28] sm:$0xff]
    %v3251 = vld [vmem:[#allocation13 + $0x30] sm:$0xff]
    %v3252 = vld [vmem:[#allocation13 + $0x38] sm:$0xff]
    %v3253 = vld [vmem:[#allocation13 + $0x40] sm:$0xff]
    %v3254 = vld [vmem:[#allocation13 + $0x48] sm:$0xff]
    %v3255 = vld [vmem:[#allocation13 + $0x50] sm:$0xff]
    %v3256 = vld [vmem:[#allocation13 + $0x58] sm:$0xff]
    %v3257 = vld [vmem:[#allocation13 + $0x60] sm:$0xff]
    %v3258 = vld [vmem:[#allocation13 + $0x68] sm:$0xff]
    %v3259 = vld [vmem:[#allocation13 + $0x70] sm:$0xff]
    %v3260 = vld [vmem:[#allocation13 + $0x78] sm:$0xff]
    %v3261 = vld [vmem:[%s8] sm:$0x3]
    %v3263 = vlaneseq
    %v3264 = vshrl.u32 %v3263, 7
    %v3265 = vsub.s32 0, %v3264
    %v3266 = vrot.slane %v3261, %v3265
    %v3267 = vlaneseq
    %v3268 = vshrl.u32 %v3267, 7
    %v3269 = vsub.s32 1, %v3268
    %v3270 = vrot.slane %v3261, %v3269
    %v3289 = vunpack.c.l.b16 %v3245
    %v3290 = vunpack.c.h.b16 %v3245
    %v3291 = vunpack.c.l.b16 %v3246
    %v3292 = vunpack.c.h.b16 %v3246
    %v3293 = vunpack.c.l.b16 %v3247
    %v3294 = vunpack.c.h.b16 %v3247
    %v3295 = vunpack.c.l.b16 %v3248
    %v3296 = vunpack.c.h.b16 %v3248
    %v3297 = vunpack.c.l.b16 %v3249
    %v3298 = vunpack.c.h.b16 %v3249
    %v3299 = vunpack.c.l.b16 %v3250
    %v3300 = vunpack.c.h.b16 %v3250
    %v3301 = vunpack.c.l.b16 %v3251
    %v3302 = vunpack.c.h.b16 %v3251
    %v3303 = vunpack.c.l.b16 %v3252
    %v3304 = vunpack.c.h.b16 %v3252
    %v3305 = vunpack.c.l.b16 %v3253
    %v3306 = vunpack.c.h.b16 %v3253
    %v3307 = vunpack.c.l.b16 %v3254
    %v3308 = vunpack.c.h.b16 %v3254
    %v3309 = vunpack.c.l.b16 %v3255
    %v3310 = vunpack.c.h.b16 %v3255
    %v3311 = vunpack.c.l.b16 %v3256
    %v3312 = vunpack.c.h.b16 %v3256
    %v3313 = vunpack.c.l.b16 %v3257
    %v3314 = vunpack.c.h.b16 %v3257
    %v3315 = vunpack.c.l.b16 %v3258
    %v3316 = vunpack.c.h.b16 %v3258
    %v3317 = vunpack.c.l.b16 %v3259
    %v3318 = vunpack.c.h.b16 %v3259
    %v3319 = vunpack.c.l.b16 %v3260
    %v3320 = vunpack.c.h.b16 %v3260
    %v3321 = vpack.c.b16 %v3291, %v3289
    %v3322 = vpack.c.b16 %v3292, %v3290
    %v3323 = vpack.c.b16 %v3295, %v3293
    %v3324 = vpack.c.b16 %v3296, %v3294
    %v3325 = vpack.c.b16 %v3299, %v3297
    %v3326 = vpack.c.b16 %v3300, %v3298
    %v3327 = vpack.c.b16 %v3303, %v3301
    %v3328 = vpack.c.b16 %v3304, %v3302
    %v3329 = vpack.c.b16 %v3307, %v3305
    %v3330 = vpack.c.b16 %v3308, %v3306
    %v3331 = vpack.c.b16 %v3311, %v3309
    %v3332 = vpack.c.b16 %v3312, %v3310
    %v3333 = vpack.c.b16 %v3315, %v3313
    %v3334 = vpack.c.b16 %v3316, %v3314
    %v3335 = vpack.c.b16 %v3319, %v3317
    %v3336 = vpack.c.b16 %v3320, %v3318
    %3353 = vmatprep.subr.bf16.mxu0 %v3322
    %3354 = vmatpush1.bf16.msra.mxu0 %v3321
    %3355 = vmatprep.subr.bf16.mxu0 %v3324
    %3356 = vmatpush1.bf16.msra.mxu0 %v3323
    %3357 = vmatprep.subr.bf16.mxu0 %v3326
    %3358 = vmatpush1.bf16.msra.mxu0 %v3325
    %3359 = vmatprep.subr.bf16.mxu0 %v3328
    %3360 = vmatpush1.bf16.msra.mxu0 %v3327
    %3361 = vmatprep.subr.bf16.mxu0 %v3330
    %3362 = vmatpush1.bf16.msra.mxu0 %v3329
    %3363 = vmatprep.subr.bf16.mxu0 %v3332
    %3364 = vmatpush1.bf16.msra.mxu0 %v3331
    %3365 = vmatprep.subr.bf16.mxu0 %v3334
    %3366 = vmatpush1.bf16.msra.mxu0 %v3333
    %3367 = vmatprep.subr.bf16.mxu0 %v3336
    %3368 = vmatpush1.bf16.msra.mxu0 %v3335
    %3369 = vmatprep.subr.bf16.mxu0 0
    %3370 = vmatpush1.bf16.msra.mxu0 0
    %3371 = vmatprep.subr.bf16.mxu0 0
    %3372 = vmatpush1.bf16.msra.mxu0 0
    %3373 = vmatprep.subr.bf16.mxu0 0
    %3374 = vmatpush1.bf16.msra.mxu0 0
    %3375 = vmatprep.subr.bf16.mxu0 0
    %3376 = vmatpush1.bf16.msra.mxu0 0
    %3377 = vmatprep.subr.bf16.mxu0 0
    %3378 = vmatpush1.bf16.msra.mxu0 0
    %3379 = vmatprep.subr.bf16.mxu0 0
    %3380 = vmatpush1.bf16.msra.mxu0 0
    %3381 = vmatprep.subr.bf16.mxu0 0
    %3382 = vmatpush1.bf16.msra.mxu0 0
    %3383 = vmatprep.subr.bf16.mxu0 0
    %3384 = vmatpush1.bf16.msra.mxu0 0
    %3385 = vmatprep.mubr.bf16.mxu0 0
    %3386 = vmatmul.mubr.bf16.gmra.mrb[0].mxu0 %v3241
    %v3387 = vpop.f32.mrb[0].mxu0
    %v3388 = vadd.f32 %v3266, %v3387
    %v3389 = vpop.f32.mrb[0].mxu0
    %v3390 = vadd.f32 %v3270, %v3389
    %v3391 = vpop.f32.mrb[0].mxu0
    %v3392 = vadd.f32 %v3266, %v3391
    %v3393 = vpop.f32.mrb[0].mxu0
    %v3394 = vadd.f32 %v3270, %v3393
    %3395 = vmatprep.mubr.bf16.mxu0 0
    %3396 = vmatmul.mubr.bf16.gmra.mrb[0].mxu0 %v3242
    %v3397 = vpop.f32.mrb[0].mxu0
    %v3398 = vadd.f32 %v3266, %v3397
    %v3399 = vpop.f32.mrb[0].mxu0
    %v3400 = vadd.f32 %v3270, %v3399
    %v3401 = vpop.f32.mrb[0].mxu0
    %v3402 = vadd.f32 %v3266, %v3401
    %v3403 = vpop.f32.mrb[0].mxu0
    %v3404 = vadd.f32 %v3270, %v3403
    %3405 = vmatprep.mubr.bf16.mxu0 0
    %3406 = vmatmul.mubr.bf16.gmra.mrb[0].mxu0 %v3243
    %v3407 = vpop.f32.mrb[0].mxu0
    %v3408 = vadd.f32 %v3266, %v3407
    %v3409 = vpop.f32.mrb[0].mxu0
    %v3410 = vadd.f32 %v3270, %v3409
    %v3411 = vpop.f32.mrb[0].mxu0
    %v3412 = vadd.f32 %v3266, %v3411
    %v3413 = vpop.f32.mrb[0].mxu0
    %v3414 = vadd.f32 %v3270, %v3413
    %3415 = vmatprep.mubr.bf16.mxu0 0
    %3416 = vmatmul.mubr.bf16.gmra.mrb[0].mxu0 %v3244
    %v3417 = vpop.f32.mrb[0].mxu0
    %v3418 = vadd.f32 %v3266, %v3417
    %v3419 = vpop.f32.mrb[0].mxu0
    %v3420 = vadd.f32 %v3270, %v3419
    %v3421 = vpop.f32.mrb[0].mxu0
    %v3422 = vadd.f32 %v3266, %v3421
    %v3423 = vpop.f32.mrb[0].mxu0
    %v3424 = vadd.f32 %v3270, %v3423
    %3425 = vdwg.mxu0
    %vm3426 = vcmp.gt.f32.partialorder %v3388, 20.0
    %vm3427 = vcmp.gt.f32.partialorder %v3392, 20.0
    %vm3428 = vcmp.gt.f32.partialorder %v3398, 20.0
    %vm3429 = vcmp.gt.f32.partialorder %v3402, 20.0
    %vm3430 = vcmp.gt.f32.partialorder %v3408, 20.0
    %vm3431 = vcmp.gt.f32.partialorder %v3412, 20.0
    %vm3432 = vcmp.gt.f32.partialorder %v3418, 20.0
    %vm3433 = vcmp.gt.f32.partialorder %v3422, 20.0
    %v3434 = vmin.f32 %v3388, 20.0
    %v3435 = vmin.f32 %v3392, 20.0
    %v3436 = vmin.f32 %v3398, 20.0
    %v3437 = vmin.f32 %v3402, 20.0
    %v3438 = vmin.f32 %v3408, 20.0
    %v3439 = vmin.f32 %v3412, 20.0
    %v3440 = vmin.f32 %v3418, 20.0
    %v3441 = vmin.f32 %v3422, 20.0
    %v3442 = vmul.f32 %v3434, 1.442695
    %v3443 = vpow.pop %v3442
    %v3444 = vmul.f32 %v3435, 1.442695
    %v3445 = vpow.pop %v3444
    %v3446 = vmul.f32 %v3436, 1.442695
    %v3447 = vpow.pop %v3446
    %v3448 = vmul.f32 %v3437, 1.442695
    %v3449 = vpow.pop %v3448
    %v3450 = vmul.f32 %v3438, 1.442695
    %v3451 = vpow.pop %v3450
    %v3452 = vmul.f32 %v3439, 1.442695
    %v3453 = vpow.pop %v3452
    %v3454 = vmul.f32 %v3440, 1.442695
    %v3455 = vpow.pop %v3454
    %v3456 = vmul.f32 %v3441, 1.442695
    %v3457 = vpow.pop %v3456
    %v3458 = vadd.f32 %v3443, 1.0
    %v3459 = vlog2.pop %v3458
    %v3460 = vmul.f32 %v3459, 0.6931472
    %v3461 = vmul.f32 -0.5, %v3443
    %v3462 = vadd.f32 %v3461, 1.0
    %v3463 = vmul.f32 %v3462, %v3443
    %v3464 = vand.u32 2147483647, %v3443
    %vm3465 = vcmp.lt.f32.partialorder %v3464, 0.0004427343
    %v3466 = vsel %vm3465, %v3463, %v3460
    %v3467 = vadd.f32 %v3445, 1.0
    %v3468 = vlog2.pop %v3467
    %v3469 = vmul.f32 %v3468, 0.6931472
    %v3470 = vmul.f32 -0.5, %v3445
    %v3471 = vadd.f32 %v3470, 1.0
    %v3472 = vmul.f32 %v3471, %v3445
    %v3473 = vand.u32 2147483647, %v3445
    %vm3474 = vcmp.lt.f32.partialorder %v3473, 0.0004427343
    %v3475 = vsel %vm3474, %v3472, %v3469
    %v3476 = vadd.f32 %v3447, 1.0
    %v3477 = vlog2.pop %v3476
    %v3478 = vmul.f32 %v3477, 0.6931472
    %v3479 = vmul.f32 -0.5, %v3447
    %v3480 = vadd.f32 %v3479, 1.0
    %v3481 = vmul.f32 %v3480, %v3447
    %v3482 = vand.u32 2147483647, %v3447
    %vm3483 = vcmp.lt.f32.partialorder %v3482, 0.0004427343
    %v3484 = vsel %vm3483, %v3481, %v3478
    %v3485 = vadd.f32 %v3449, 1.0
    %v3486 = vlog2.pop %v3485
    %v3487 = vmul.f32 %v3486, 0.6931472
    %v3488 = vmul.f32 -0.5, %v3449
    %v3489 = vadd.f32 %v3488, 1.0
    %v3490 = vmul.f32 %v3489, %v3449
    %v3491 = vand.u32 2147483647, %v3449
    %vm3492 = vcmp.lt.f32.partialorder %v3491, 0.0004427343
    %v3493 = vsel %vm3492, %v3490, %v3487
    %v3494 = vadd.f32 %v3451, 1.0
    %v3495 = vlog2.pop %v3494
    %v3496 = vmul.f32 %v3495, 0.6931472
    %v3497 = vmul.f32 -0.5, %v3451
    %v3498 = vadd.f32 %v3497, 1.0
    %v3499 = vmul.f32 %v3498, %v3451
    %v3500 = vand.u32 2147483647, %v3451
    %vm3501 = vcmp.lt.f32.partialorder %v3500, 0.0004427343
    %v3502 = vsel %vm3501, %v3499, %v3496
    %v3503 = vadd.f32 %v3453, 1.0
    %v3504 = vlog2.pop %v3503
    %v3505 = vmul.f32 %v3504, 0.6931472
    %v3506 = vmul.f32 -0.5, %v3453
    %v3507 = vadd.f32 %v3506, 1.0
    %v3508 = vmul.f32 %v3507, %v3453
    %v3509 = vand.u32 2147483647, %v3453
    %vm3510 = vcmp.lt.f32.partialorder %v3509, 0.0004427343
    %v3511 = vsel %vm3510, %v3508, %v3505
    %v3512 = vadd.f32 %v3455, 1.0
    %v3513 = vlog2.pop %v3512
    %v3514 = vmul.f32 %v3513, 0.6931472
    %v3515 = vmul.f32 -0.5, %v3455
    %v3516 = vadd.f32 %v3515, 1.0
    %v3517 = vmul.f32 %v3516, %v3455
    %v3518 = vand.u32 2147483647, %v3455
    %vm3519 = vcmp.lt.f32.partialorder %v3518, 0.0004427343
    %v3520 = vsel %vm3519, %v3517, %v3514
    %v3521 = vadd.f32 %v3457, 1.0
    %v3522 = vlog2.pop %v3521
    %v3523 = vmul.f32 %v3522, 0.6931472
    %v3524 = vmul.f32 -0.5, %v3457
    %v3525 = vadd.f32 %v3524, 1.0
    %v3526 = vmul.f32 %v3525, %v3457
    %v3527 = vand.u32 2147483647, %v3457
    %vm3528 = vcmp.lt.f32.partialorder %v3527, 0.0004427343
    %v3529 = vsel %vm3528, %v3526, %v3523
    %v3530 = vsel %vm3426, %v3388, %v3466
    %v3531 = vsel %vm3427, %v3392, %v3475
    %v3532 = vsel %vm3428, %v3398, %v3484
    %v3533 = vsel %vm3429, %v3402, %v3493
    %v3534 = vsel %vm3430, %v3408, %v3502
    %v3535 = vsel %vm3431, %v3412, %v3511
    %v3536 = vsel %vm3432, %v3418, %v3520
    %v3537 = vsel %vm3433, %v3422, %v3529
    %v3538 = vrsqrt.pop %v3530
    %v3539 = vmul.f32 %v3530, %v3538
    %vm3540 = vcmp.eq.f32.partialorder %v3530, inf
    %v3541 = vsel %vm3540, %v3530, %v3539
    %vm3542 = vcmp.eq.f32.partialorder %v3530, 0.0
    %v3543 = vand.u32 %v3530, 2147483648
    %v3544 = vsel %vm3542, %v3543, %v3541
    %v3545 = vrsqrt.pop %v3531
    %v3546 = vmul.f32 %v3531, %v3545
    %vm3547 = vcmp.eq.f32.partialorder %v3531, inf
    %v3548 = vsel %vm3547, %v3531, %v3546
    %vm3549 = vcmp.eq.f32.partialorder %v3531, 0.0
    %v3550 = vand.u32 %v3531, 2147483648
    %v3551 = vsel %vm3549, %v3550, %v3548
    %v3552 = vrsqrt.pop %v3532
    %v3553 = vmul.f32 %v3532, %v3552
    %vm3554 = vcmp.eq.f32.partialorder %v3532, inf
    %v3555 = vsel %vm3554, %v3532, %v3553
    %vm3556 = vcmp.eq.f32.partialorder %v3532, 0.0
    %v3557 = vand.u32 %v3532, 2147483648
    %v3558 = vsel %vm3556, %v3557, %v3555
    %v3559 = vrsqrt.pop %v3533
    %v3560 = vmul.f32 %v3533, %v3559
    %vm3561 = vcmp.eq.f32.partialorder %v3533, inf
    %v3562 = vsel %vm3561, %v3533, %v3560
    %vm3563 = vcmp.eq.f32.partialorder %v3533, 0.0
    %v3564 = vand.u32 %v3533, 2147483648
    %v3565 = vsel %vm3563, %v3564, %v3562
    %v3566 = vrsqrt.pop %v3534
    %v3567 = vmul.f32 %v3534, %v3566
    %vm3568 = vcmp.eq.f32.partialorder %v3534, inf
    %v3569 = vsel %vm3568, %v3534, %v3567
    %vm3570 = vcmp.eq.f32.partialorder %v3534, 0.0
    %v3571 = vand.u32 %v3534, 2147483648
    %v3572 = vsel %vm3570, %v3571, %v3569
    %v3573 = vrsqrt.pop %v3535
    %v3574 = vmul.f32 %v3535, %v3573
    %vm3575 = vcmp.eq.f32.partialorder %v3535, inf
    %v3576 = vsel %vm3575, %v3535, %v3574
    %vm3577 = vcmp.eq.f32.partialorder %v3535, 0.0
    %v3578 = vand.u32 %v3535, 2147483648
    %v3579 = vsel %vm3577, %v3578, %v3576
    %v3580 = vrsqrt.pop %v3536
    %v3581 = vmul.f32 %v3536, %v3580
    %vm3582 = vcmp.eq.f32.partialorder %v3536, inf
    %v3583 = vsel %vm3582, %v3536, %v3581
    %vm3584 = vcmp.eq.f32.partialorder %v3536, 0.0
    %v3585 = vand.u32 %v3536, 2147483648
    %v3586 = vsel %vm3584, %v3585, %v3583
    %v3587 = vrsqrt.pop %v3537
    %v3588 = vmul.f32 %v3537, %v3587
    %vm3589 = vcmp.eq.f32.partialorder %v3537, inf
    %v3590 = vsel %vm3589, %v3537, %v3588
    %vm3591 = vcmp.eq.f32.partialorder %v3537, 0.0
    %v3592 = vand.u32 %v3537, 2147483648
    %v3593 = vsel %vm3591, %v3592, %v3590
    %v3594 = vld [vmem:[#allocation15] sm:$0xff]
    %v3595 = vld [vmem:[#allocation15 + $0x8] sm:$0xff]
    %v3596 = vld [vmem:[#allocation15 + $0x10] sm:$0xff]
    %v3597 = vld [vmem:[#allocation15 + $0x18] sm:$0xff]
    %v3598 = vld [vmem:[#allocation15 + $0x20] sm:$0xff]
    %v3599 = vld [vmem:[#allocation15 + $0x28] sm:$0xff]
    %v3600 = vld [vmem:[#allocation15 + $0x30] sm:$0xff]
    %v3601 = vld [vmem:[#allocation15 + $0x38] sm:$0xff]
    %v3602 = vmul.f32 %v3544, %v3594
    %v3603 = vmul.f32 %v3551, %v3595
    %v3604 = vmul.f32 %v3558, %v3596
    %v3605 = vmul.f32 %v3565, %v3597
    %v3606 = vmul.f32 %v3572, %v3598
    %v3607 = vmul.f32 %v3579, %v3599
    %v3608 = vmul.f32 %v3586, %v3600
    %v3609 = vmul.f32 %v3593, %v3601
    %v3610 = vadd.f32 %v3390, %v3602
    %v3611 = vadd.f32 %v3394, %v3603
    %v3612 = vadd.f32 %v3400, %v3604
    %v3613 = vadd.f32 %v3404, %v3605
    %v3614 = vadd.f32 %v3410, %v3606
    %v3615 = vadd.f32 %v3414, %v3607
    %v3616 = vadd.f32 %v3420, %v3608
    %v3617 = vadd.f32 %v3424, %v3609
    %3618 = vst [vmem:[#allocation16] sm:$0xff] %v3610
    %3619 = vst [vmem:[#allocation16 + $0x8] sm:$0xff] %v3611
    %3620 = vst [vmem:[#allocation16 + $0x10] sm:$0xff] %v3612
    %3621 = vst [vmem:[#allocation16 + $0x18] sm:$0xff] %v3613
    %3622 = vst [vmem:[#allocation16 + $0x20] sm:$0xff] %v3614
    %3623 = vst [vmem:[#allocation16 + $0x28] sm:$0xff] %v3615
    %3624 = vst [vmem:[#allocation16 + $0x30] sm:$0xff] %v3616
    %3625 = vst [vmem:[#allocation16 + $0x38] sm:$0xff] %v3617
    %3626 = vst [vmem:[#allocation17] sm:$0xff] %v3390
    %3627 = vst [vmem:[#allocation17 + $0x8] sm:$0xff] %v3394
    %3628 = vst [vmem:[#allocation17 + $0x10] sm:$0xff] %v3400
    %3629 = vst [vmem:[#allocation17 + $0x18] sm:$0xff] %v3404
    %3630 = vst [vmem:[#allocation17 + $0x20] sm:$0xff] %v3410
    %3631 = vst [vmem:[#allocation17 + $0x28] sm:$0xff] %v3414
    %3632 = vst [vmem:[#allocation17 + $0x30] sm:$0xff] %v3420
    %3633 = vst [vmem:[#allocation17 + $0x38] sm:$0xff] %v3424
    %3634 = vst [vmem:[#allocation19] sm:$0xff] %v3530
    %3635 = vst [vmem:[#allocation19 + $0x8] sm:$0xff] %v3531
    %3636 = vst [vmem:[#allocation19 + $0x10] sm:$0xff] %v3532
    %3637 = vst [vmem:[#allocation19 + $0x18] sm:$0xff] %v3533
    %3638 = vst [vmem:[#allocation19 + $0x20] sm:$0xff] %v3534
    %3639 = vst [vmem:[#allocation19 + $0x28] sm:$0xff] %v3535
    %3640 = vst [vmem:[#allocation19 + $0x30] sm:$0xff] %v3536
    %3641 = vst [vmem:[#allocation19 + $0x38] sm:$0xff] %v3537
    // Predicated region
    $region70: #{tpu_custom_call.1} parent=1 // pred_check
      _
    $region71: #{tpu_custom_call.1} parent=1 // pred_check_branch
      %3643 = sbr.rel (0) target = $region73
    $region72: #{tpu_custom_call.1} parent=1 // pred_region
      %s3645 = ssub.s32 1024, 1024
      %3646 = vsyncadd [#allocation6], %s3645
      %s3647 = sshll.u32 [#allocation16], 4
      %s3648 = int_to_ptr.vmem [resolvable:$true] %s3647
      %3653 = dma.vmem_to_hbm [thread:$0]  %s3648, 1024, %s10, [#allocation6], 128, 128, 8
    $region73: #{tpu_custom_call.1} parent=1 // pred_fallthru
      _
    // Predicated region
    $region74: #{tpu_custom_call.1} parent=1 // pred_check
      _
    $region75: #{tpu_custom_call.1} parent=1 // pred_check_branch
      %3655 = sbr.rel (0) target = $region77
    $region76: #{tpu_custom_call.1} parent=1 // pred_region
      %s3657 = ssub.s32 1024, 1024
      %3658 = vsyncadd [#allocation18], %s3657
      %s3659 = sshll.u32 [#allocation17], 4
      %s3660 = int_to_ptr.vmem [resolvable:$true] %s3659
      %3665 = dma.vmem_to_hbm [thread:$0]  %s3660, 1024, %s11, [#allocation18], 128, 128, 8
    $region77: #{tpu_custom_call.1} parent=1 // pred_fallthru
      _
    // Predicated region
    $region78: #{tpu_custom_call.1} parent=1 // pred_check
      _
    $region79: #{tpu_custom_call.1} parent=1 // pred_check_branch
      %3667 = sbr.rel (0) target = $region81
    $region80: #{tpu_custom_call.1} parent=1 // pred_region
      %s3669 = ssub.s32 1024, 1024
      %3670 = vsyncadd [#allocation18], %s3669
      %s3671 = sshll.u32 [#allocation19], 4
      %s3672 = int_to_ptr.vmem [resolvable:$true] %s3671
      %3677 = dma.vmem_to_hbm [thread:$0]  %s3672, 1024, %s12, [#allocation18], 128, 128, 8
    $region81: #{tpu_custom_call.1} parent=1 // pred_fallthru
      _
    // Predicated region
    $region82: #{tpu_custom_call.1} parent=1 // pred_check
      _
    $region83: #{tpu_custom_call.1} parent=1 // pred_check_branch
      %3679 = sbr.rel (0) target = $region85
    $region84: #{tpu_custom_call.1} parent=1 // pred_region
      %3680 = dma.done [#allocation6], 1024
    $region85: #{tpu_custom_call.1} parent=1 // pred_fallthru
      _
    // Predicated region
    $region86: #{tpu_custom_call.1} parent=1 // pred_check
      _
    $region87: #{tpu_custom_call.1} parent=1 // pred_check_branch
      %3682 = sbr.rel (0) target = $region89
    $region88: #{tpu_custom_call.1} parent=1 // pred_region
      %3683 = dma.done [#allocation18], 1024
    $region89: #{tpu_custom_call.1} parent=1 // pred_fallthru
      _
    // Predicated region
    $region90: #{tpu_custom_call.1} parent=1 // pred_check
      _
    $region91: #{tpu_custom_call.1} parent=1 // pred_check_branch
      %3685 = sbr.rel (0) target = $region93
    $region92: #{tpu_custom_call.1} parent=1 // pred_region
      %3686 = dma.done [#allocation18], 1024
    $region93: #{tpu_custom_call.1} parent=1 // pred_fallthru
      _
    %3687 = vsyncpa [#allocation5], 1
    %3688 = vsyncpa [#allocation8], 1
    %3689 = vsyncpa [#allocation11], 1
    %3690 = vsyncpa [#allocation14], 1
    %3691 = vsyncpa [#allocation6], 1
    %3692 = vsyncpa [#allocation18], 1

</llo_original>
